<compile_context>
chip_gen: v7x
topology: tpu7x:2x2x1
jax: 0.10.0
libtpu: 0.0.40
codegen_flags: <defaults>
</compile_context>

<pallas_src>
import math

import numpy as np
import jax
import jax.numpy as jnp
from jax.experimental import pallas as pl
from jax.experimental.pallas import tpu as pltpu


BLOCK_B = 8  # images per grid step (tunable; 8 keeps vreg pressure low)


# ---------------------------------------------------------------------------
# Fused kernel: conv1+relu+pool1 -> conv2+relu+pool2 -> fc1-relu-fc2-relu-fc3
# ---------------------------------------------------------------------------
def _lenet_kernel(x5e_ref, x5o_ref, w1_ref, w2_ref, fc1w_ref, fc1b_ref,
                  fc2w_ref, fc2b_ref, fc3w_ref, fc3b_ref, out_ref, p1pad_ref):
    f32 = jnp.float32
    B = out_ref.shape[0]

    # ---- conv1 (bias via ones-column) -> width-pool -> height-pool -> ReLU --
    # x5e/x5o rows: h*B + n  (h = phase-separated pooled-row slot, n = image).
    w1 = w1_ref[...]                                               # (161, 256)
    c1e = jnp.dot(x5e_ref[...], w1, preferred_element_type=f32)    # (16B, 256)
    p1e = jnp.maximum(c1e[:, 0:128], c1e[:, 128:256])               # width pool
    c1o = jnp.dot(x5o_ref[...], w1, preferred_element_type=f32)
    p1o = jnp.maximum(c1o[:, 0:128], c1o[:, 128:256])
    p1 = jnp.maximum(jnp.maximum(p1e, p1o), 0.0)                    # (16B, 128)

    # Phase-separated, zero-padded pooled-conv1 scratch:
    # p1pad[phase, k, n, col] == P1pad row (2k+phase) of image n.
    p1pad_ref[:, 0:8, :, :] = p1.reshape(2, 8, B, 128)
    p1pad_ref[:, 8:10, :, :] = jnp.zeros((2, 2, B, 128), f32)       # bottom pad

    # ---- conv2: 5 taps x 2 output-row phases, accumulated MXU matmuls ------
    c2w = []
    for i2par in range(2):
        acc = None
        for di in range(5):
            r0 = i2par + di
            lhs = p1pad_ref[r0 % 2, r0 // 2:r0 // 2 + 8, :, :].reshape(8 * B, 128)
            t = jnp.dot(lhs, w2_ref[di], preferred_element_type=f32)  # (8B, 256)
            acc = t if acc is None else acc + t
        c2w.append(jnp.maximum(acc[:, 0:128], acc[:, 128:256]))       # width pool
    pooled2 = jnp.maximum(jnp.maximum(c2w[0], c2w[1]), 0.0)           # (8B, 128)
    # pooled2 rows: p2*B + n ; row block p2==7 is junk and is never read below.

    # ---- classifier (fc1 accumulated over the 7 valid feature row slots) ---
    # TODO(synk): nn.Dropout is identity at inference (eval mode); training-mode
    # dropout RNG is not implemented.
    acc = None
    for r in range(7):
        t = jnp.dot(pooled2[r * B:(r + 1) * B, :], fc1w_ref[r],
                    preferred_element_type=f32)                       # (B, 120)
        acc = t if acc is None else acc + t
    h1 = jnp.maximum(acc + fc1b_ref[...], 0.0)
    h2 = jnp.maximum(jnp.dot(h1, fc2w_ref[...], preferred_element_type=f32)
                     + fc2b_ref[...], 0.0)
    out_ref[...] = (jnp.dot(h2, fc3w_ref[...], preferred_element_type=f32)
                    + fc3b_ref[...]).astype(out_ref.dtype)


# ---------------------------------------------------------------------------
# Forward wrapper (only layout plumbing in XLA; all compute in the kernel)
# ---------------------------------------------------------------------------
def lenet_forward(x_nchw, p):
    N = x_nchw.shape[0]
    G = -(-N // BLOCK_B)
    n_pad = G * BLOCK_B

    x = x_nchw[:, 0].astype(jnp.float32)
    if n_pad != N:
        x = jnp.pad(x, ((0, n_pad - N), (0, 0), (0, 0)))
    xpad = jnp.pad(x, ((0, 0), (2, 2), (2, 2)))                       # (n_pad,32,32)

    # Row-stacked conv1 input: for output row i, concat xpad rows i..i+4,
    # plus a ones column carrying the conv1 bias / conv2 bias-marker.
    rows = jnp.concatenate([xpad[:, di:di + 28, :] for di in range(5)], axis=-1)
    rows = jnp.concatenate(
        [rows, jnp.ones((n_pad, 28, 1), jnp.float32)], axis=-1)       # (n_pad,28,161)

    # Scatter conv1 output rows i = 2p+ipar into (phase ipar, slot h(p)),
    # h(p) = (p%2)*8 + (p+2)//2  (slots 0 and 8 stay zero = conv2 top pad).
    i = jnp.arange(28)
    pr, ipar = i // 2, i % 2
    h = (pr % 2) * 8 + (pr + 2) // 2
    x5 = jnp.zeros((n_pad, 2, 16, 161), jnp.float32).at[:, ipar, h, :].set(rows)

    # Block-local layout: within each block of B images, rows = h*B + n_local.
    x5 = x5.transpose(1, 0, 2, 3)                                     # (2,n_pad,16,161)
    x5 = x5.reshape(2, G, BLOCK_B, 16, 161).transpose(0, 1, 3, 2, 4)  # (2,G,16,B,161)
    x5 = x5.reshape(2, G * 16 * BLOCK_B, 161)
    x5e, x5o = x5[0], x5[1]

    out = pl.pallas_call(
        _lenet_kernel,
        out_shape=jax.ShapeDtypeStruct((n_pad, 10), jnp.float32),
        grid=(G,),
        in_specs=[
            pl.BlockSpec((16 * BLOCK_B, 161), lambda g: (g, 0)),      # x5 even rows
            pl.BlockSpec((16 * BLOCK_B, 161), lambda g: (g, 0)),      # x5 odd rows
            pl.BlockSpec((161, 256), lambda g: (0, 0)),               # conv1 (struct)
            pl.BlockSpec((5, 128, 256), lambda g: (0, 0, 0)),         # conv2 (struct)
            pl.BlockSpec((7, 128, 120), lambda g: (0, 0, 0)),         # fc1 (folded)
            pl.BlockSpec((1, 120), lambda g: (0, 0)),
            pl.BlockSpec((120, 84), lambda g: (0, 0)),
            pl.BlockSpec((1, 84), lambda g: (0, 0)),
            pl.BlockSpec((84, 10), lambda g: (0, 0)),
            pl.BlockSpec((1, 10), lambda g: (0, 0)),
        ],
        out_specs=pl.BlockSpec((BLOCK_B, 10), lambda g: (g, 0)),
        scratch_shapes=[pltpu.VMEM((2, 16, BLOCK_B, 128), jnp.float32)],
        compiler_params=pltpu.CompilerParams(dimension_semantics=("parallel",)),
    )(x5e, x5o, p["w1big"], p["w2big"], p["fc1big"], p["fc1_b"],
      p["fc2_w"], p["fc2_b"], p["fc3_w"], p["fc3_b"])
    return out[:N]


# ---------------------------------------------------------------------------
# Parameter init (xavier_normal, relu gain, zero biases) - PyTorch layouts
# ---------------------------------------------------------------------------
def init_params(key):
    gain = math.sqrt(2.0)  # nn.init.calculate_gain('relu')

    def xavier_normal(k, shape, fan_in, fan_out):
        std = gain * math.sqrt(2.0 / (fan_in + fan_out))
        return std * jax.random.normal(k, shape, dtype=jnp.float32)

    ks = jax.random.split(key, 5)
    params = {}
    params["conv1_w"] = xavier_normal(ks[0], (6, 1, 5, 5), 1 * 25, 6 * 25)
    params["conv1_b"] = jnp.zeros((6,), jnp.float32)
    params["conv2_w"] = xavier_normal(ks[1], (16, 6, 5, 5), 6 * 25, 16 * 25)
    params["conv2_b"] = jnp.zeros((16,), jnp.float32)
    params["fc1_w"] = xavier_normal(ks[2], (784, 120), 784, 120)     # (in, out)
    params["fc1_b"] = jnp.zeros((1, 120), jnp.float32)
    params["fc2_w"] = xavier_normal(ks[3], (120, 84), 120, 84)
    params["fc2_b"] = jnp.zeros((1, 84), jnp.float32)
    params["fc3_w"] = xavier_normal(ks[4], (84, 10), 84, 10)
    params["fc3_b"] = jnp.zeros((1, 10), jnp.float32)
    return params


def preprocess_params(params):
    """One-time host-side conversion into the structured kernel layouts."""
    w1t = np.asarray(params["conv1_w"])   # (6,1,5,5)
    b1 = np.asarray(params["conv1_b"])
    w2t = np.asarray(params["conv2_w"])   # (16,6,5,5)
    b2 = np.asarray(params["conv2_b"])
    fc1 = np.asarray(params["fc1_w"])     # (784,120)

    # conv1: structured (161, 256).  Row K = di*32 + padded-column (or 160=ones).
    # Column = jpar*128 + (q+2)*6 + c  (conv1 output x = 2q+jpar); col 127 of
    # each half is a constant-1 marker that later carries conv2's bias.
    w1big = np.zeros((161, 256), np.float32)
    for jpar in range(2):
        base = jpar * 128
        for q in range(14):
            j = 2 * q + jpar
            for c in range(6):
                col = base + (q + 2) * 6 + c
                for di in range(5):
                    for dj in range(5):
                        w1big[di * 32 + j + dj, col] += w1t[c, 0, di, dj]
                w1big[160, col] = b1[c]
        w1big[160, base + 127] = 1.0

    # conv2: (5, 128, 256), one slice per row-tap di.  LHS column = s*6 + ci
    # (s = padded width position), output column = j2par*128 + q2*16 + co.
    w2big = np.zeros((5, 128, 256), np.float32)
    for di in range(5):
        for j2par in range(2):
            base = j2par * 128
            for q2 in range(7):
                j2 = 2 * q2 + j2par
                for co in range(16):
                    col = base + q2 * 16 + co
                    for dj in range(5):
                        s = j2 + dj
                        for ci in range(6):
                            w2big[di, s * 6 + ci, col] += w2t[co, ci, di, dj]
    for j2par in range(2):                 # conv2 bias rides the ones marker
        for q2 in range(7):
            for co in range(16):
                w2big[2, 127, j2par * 128 + q2 * 16 + co] = b2[co]

    # fc1: fold PyTorch's (C,H,W) flatten and the kernel's (p2, q2*16+co)
    # feature layout; zero rows absorb the layout padding.
    fc1big = np.zeros((7, 128, 120), np.float32)
    for p2 in range(7):
        for q2 in range(7):
            for co in range(16):
                fc1big[p2, q2 * 16 + co, :] = fc1[co * 49 + p2 * 7 + q2, :]

    return {
        "w1big": jnp.asarray(w1big),
        "w2big": jnp.asarray(w2big),
        "fc1big": jnp.asarray(fc1big),
        "fc1_b": jnp.asarray(params["fc1_b"]),
        "fc2_w": jnp.asarray(params["fc2_w"]),
        "fc2_b": jnp.asarray(params["fc2_b"]),
        "fc3_w": jnp.asarray(params["fc3_w"]),
        "fc3_b": jnp.asarray(params["fc3_b"]),
    }


if __name__ == "__main__":
    key = jax.random.PRNGKey(0)
    pkey, xkey = jax.random.split(key)
    params = preprocess_params(init_params(pkey))
    # batch=2, 1 channel, 28x28 spatial (implied by in_linear=784 = 16*7*7)
    x = jax.random.normal(xkey, (2, 1, 28, 28), dtype=jnp.float32)
    out = jax.jit(lenet_forward)(x, params)
    out = jax.block_until_ready(out)
    assert out.shape == (2, 10) and out.dtype == jnp.float32
    assert bool(jnp.all(jnp.isfinite(out)))
    print("KERNEL_OK")
</pallas_src>

<mosaic_0001>
module attributes {stable_mosaic.version = 11 : i64} {
  func.func @_lenet_kernel(%arg0: i32, %arg1: memref<128x161xf32, #tpu.memory_space<vmem>>, %arg2: memref<128x161xf32, #tpu.memory_space<vmem>>, %arg3: memref<161x256xf32, #tpu.memory_space<vmem>>, %arg4: memref<5x128x256xf32, #tpu.memory_space<vmem>>, %arg5: memref<7x128x120xf32, #tpu.memory_space<vmem>>, %arg6: memref<1x120xf32, #tpu.memory_space<vmem>>, %arg7: memref<120x84xf32, #tpu.memory_space<vmem>>, %arg8: memref<1x84xf32, #tpu.memory_space<vmem>>, %arg9: memref<84x10xf32, #tpu.memory_space<vmem>>, %arg10: memref<1x10xf32, #tpu.memory_space<vmem>>, %arg11: memref<8x10xf32, #tpu.memory_space<vmem>>, %arg12: memref<2x16x8x128xf32, #tpu.memory_space<vmem>>) attributes {dimension_semantics = [#tpu.dimension_semantics<parallel>], iteration_bounds = array<i64: 1>, scalar_prefetch = 0 : i64, scratch_operands = 1 : i64, tpu.core_type = #tpu.core_type<tc>, window_params = [{transform_indices = @transform_0, window_bounds = array<i64: 128, 161>}, {transform_indices = @transform_1, window_bounds = array<i64: 128, 161>}, {pipeline_mode = #tpu.pipeline_mode<synchronous>, transform_indices = @transform_2, window_bounds = array<i64: 161, 256>}, {pipeline_mode = #tpu.pipeline_mode<synchronous>, transform_indices = @transform_3, window_bounds = array<i64: 5, 128, 256>}, {pipeline_mode = #tpu.pipeline_mode<synchronous>, transform_indices = @transform_4, window_bounds = array<i64: 7, 128, 120>}, {pipeline_mode = #tpu.pipeline_mode<synchronous>, transform_indices = @transform_5, window_bounds = array<i64: 1, 120>}, {pipeline_mode = #tpu.pipeline_mode<synchronous>, transform_indices = @transform_6, window_bounds = array<i64: 120, 84>}, {pipeline_mode = #tpu.pipeline_mode<synchronous>, transform_indices = @transform_7, window_bounds = array<i64: 1, 84>}, {pipeline_mode = #tpu.pipeline_mode<synchronous>, transform_indices = @transform_8, window_bounds = array<i64: 84, 10>}, {pipeline_mode = #tpu.pipeline_mode<synchronous>, transform_indices = @transform_9, window_bounds = array<i64: 1, 10>}, {transform_indices = @transform_10, window_bounds = array<i64: 8, 10>}]} {
    %c0 = arith.constant 0 : index
    %c0_0 = arith.constant 0 : index
    %0 = vector.load %arg3[%c0, %c0_0] : memref<161x256xf32, #tpu.memory_space<vmem>>, vector<161x256xf32>
    %c0_1 = arith.constant 0 : index
    %c0_2 = arith.constant 0 : index
    %1 = vector.load %arg1[%c0_1, %c0_2] : memref<128x161xf32, #tpu.memory_space<vmem>>, vector<128x161xf32>
    %cst = arith.constant dense<0.000000e+00> : vector<128x256xf32>
    %2 = tpu.matmul %1, %0, %cst {dimension_numbers = #tpu.dot_dimension_numbers<[1], [0], [0], [1], [0, 0, 1, 1], [], []>} : vector<128x161xf32>, vector<161x256xf32>, vector<128x256xf32> -> vector<128x256xf32>
    %3 = vector.extract_strided_slice %2 {offsets = [0, 0], sizes = [128, 128], strides = [1, 1]} : vector<128x256xf32> to vector<128x128xf32>
    %4 = vector.extract_strided_slice %2 {offsets = [0, 128], sizes = [128, 128], strides = [1, 1]} : vector<128x256xf32> to vector<128x128xf32>
    %5 = arith.maximumf %3, %4 : vector<128x128xf32>
    %c0_3 = arith.constant 0 : index
    %c0_4 = arith.constant 0 : index
    %6 = vector.load %arg2[%c0_3, %c0_4] : memref<128x161xf32, #tpu.memory_space<vmem>>, vector<128x161xf32>
    %cst_5 = arith.constant dense<0.000000e+00> : vector<128x256xf32>
    %7 = tpu.matmul %6, %0, %cst_5 {dimension_numbers = #tpu.dot_dimension_numbers<[1], [0], [0], [1], [0, 0, 1, 1], [], []>} : vector<128x161xf32>, vector<161x256xf32>, vector<128x256xf32> -> vector<128x256xf32>
    %8 = vector.extract_strided_slice %7 {offsets = [0, 0], sizes = [128, 128], strides = [1, 1]} : vector<128x256xf32> to vector<128x128xf32>
    %9 = vector.extract_strided_slice %7 {offsets = [0, 128], sizes = [128, 128], strides = [1, 1]} : vector<128x256xf32> to vector<128x128xf32>
    %10 = arith.maximumf %8, %9 : vector<128x128xf32>
    %11 = arith.maximumf %5, %10 : vector<128x128xf32>
    %cst_6 = arith.constant 0.000000e+00 : f32
    %12 = vector.broadcast %cst_6 : f32 to vector<128x128xf32>
    %13 = arith.maximumf %11, %12 : vector<128x128xf32>
    %14 = vector.shape_cast %13 : vector<128x128xf32> to vector<2x8x8x128xf32>
    %c0_7 = arith.constant 0 : index
    %c0_8 = arith.constant 0 : index
    %c0_9 = arith.constant 0 : index
    %c0_10 = arith.constant 0 : index
    %15 = vector.load %arg12[%c0_7, %c0_8, %c0_9, %c0_10] : memref<2x16x8x128xf32, #tpu.memory_space<vmem>>, vector<2x8x8x128xf32>
    tpu.vector_store %arg12[%c0_7, %c0_8, %c0_9, %c0_10], %14 {strides = array<i32>} : memref<2x16x8x128xf32, #tpu.memory_space<vmem>>, vector<2x8x8x128xf32>,
    %cst_11 = arith.constant 0.000000e+00 : f32
    %16 = vector.broadcast %cst_11 : f32 to vector<2x2x8x128xf32>
    %c0_12 = arith.constant 0 : index
    %c8 = arith.constant 8 : index
    %c0_13 = arith.constant 0 : index
    %c0_14 = arith.constant 0 : index
    %17 = vector.load %arg12[%c0_12, %c8, %c0_13, %c0_14] : memref<2x16x8x128xf32, #tpu.memory_space<vmem>>, vector<2x2x8x128xf32>
    tpu.vector_store %arg12[%c0_12, %c8, %c0_13, %c0_14], %16 {strides = array<i32>} : memref<2x16x8x128xf32, #tpu.memory_space<vmem>>, vector<2x2x8x128xf32>,
    %c0_15 = arith.constant 0 : index
    %c0_16 = arith.constant 0 : index
    %c0_17 = arith.constant 0 : index
    %c0_18 = arith.constant 0 : index
    %18 = vector.load %arg12[%c0_15, %c0_16, %c0_17, %c0_18] : memref<2x16x8x128xf32, #tpu.memory_space<vmem>>, vector<1x8x8x128xf32>
    %19 = vector.shape_cast %18 : vector<1x8x8x128xf32> to vector<8x8x128xf32>
    %20 = vector.shape_cast %19 : vector<8x8x128xf32> to vector<64x128xf32>
    %c0_19 = arith.constant 0 : index
    %c0_20 = arith.constant 0 : index
    %c0_21 = arith.constant 0 : index
    %21 = vector.load %arg4[%c0_19, %c0_20, %c0_21] : memref<5x128x256xf32, #tpu.memory_space<vmem>>, vector<1x128x256xf32>
    %22 = vector.shape_cast %21 : vector<1x128x256xf32> to vector<128x256xf32>
    %cst_22 = arith.constant dense<0.000000e+00> : vector<64x256xf32>
    %23 = tpu.matmul %20, %22, %cst_22 {dimension_numbers = #tpu.dot_dimension_numbers<[1], [0], [0], [1], [0, 0, 1, 1], [], []>} : vector<64x128xf32>, vector<128x256xf32>, vector<64x256xf32> -> vector<64x256xf32>
    %c1 = arith.constant 1 : index
    %c0_23 = arith.constant 0 : index
    %c0_24 = arith.constant 0 : index
    %c0_25 = arith.constant 0 : index
    %24 = vector.load %arg12[%c1, %c0_23, %c0_24, %c0_25] : memref<2x16x8x128xf32, #tpu.memory_space<vmem>>, vector<1x8x8x128xf32>
    %25 = vector.shape_cast %24 : vector<1x8x8x128xf32> to vector<8x8x128xf32>
    %26 = vector.shape_cast %25 : vector<8x8x128xf32> to vector<64x128xf32>
    %c1_26 = arith.constant 1 : index
    %c0_27 = arith.constant 0 : index
    %c0_28 = arith.constant 0 : index
    %27 = vector.load %arg4[%c1_26, %c0_27, %c0_28] : memref<5x128x256xf32, #tpu.memory_space<vmem>>, vector<1x128x256xf32>
    %28 = vector.shape_cast %27 : vector<1x128x256xf32> to vector<128x256xf32>
    %cst_29 = arith.constant dense<0.000000e+00> : vector<64x256xf32>
    %29 = tpu.matmul %26, %28, %cst_29 {dimension_numbers = #tpu.dot_dimension_numbers<[1], [0], [0], [1], [0, 0, 1, 1], [], []>} : vector<64x128xf32>, vector<128x256xf32>, vector<64x256xf32> -> vector<64x256xf32>
    %30 = arith.addf %23, %29 : vector<64x256xf32>
    %c0_30 = arith.constant 0 : index
    %c1_31 = arith.constant 1 : index
    %c0_32 = arith.constant 0 : index
    %c0_33 = arith.constant 0 : index
    %31 = vector.load %arg12[%c0_30, %c1_31, %c0_32, %c0_33] : memref<2x16x8x128xf32, #tpu.memory_space<vmem>>, vector<1x8x8x128xf32>
    %32 = vector.shape_cast %31 : vector<1x8x8x128xf32> to vector<8x8x128xf32>
    %33 = vector.shape_cast %32 : vector<8x8x128xf32> to vector<64x128xf32>
    %c2 = arith.constant 2 : index
    %c0_34 = arith.constant 0 : index
    %c0_35 = arith.constant 0 : index
    %34 = vector.load %arg4[%c2, %c0_34, %c0_35] : memref<5x128x256xf32, #tpu.memory_space<vmem>>, vector<1x128x256xf32>
    %35 = vector.shape_cast %34 : vector<1x128x256xf32> to vector<128x256xf32>
    %cst_36 = arith.constant dense<0.000000e+00> : vector<64x256xf32>
    %36 = tpu.matmul %33, %35, %cst_36 {dimension_numbers = #tpu.dot_dimension_numbers<[1], [0], [0], [1], [0, 0, 1, 1], [], []>} : vector<64x128xf32>, vector<128x256xf32>, vector<64x256xf32> -> vector<64x256xf32>
    %37 = arith.addf %30, %36 : vector<64x256xf32>
    %c1_37 = arith.constant 1 : index
    %c1_38 = arith.constant 1 : index
    %c0_39 = arith.constant 0 : index
    %c0_40 = arith.constant 0 : index
    %38 = vector.load %arg12[%c1_37, %c1_38, %c0_39, %c0_40] : memref<2x16x8x128xf32, #tpu.memory_space<vmem>>, vector<1x8x8x128xf32>
    %39 = vector.shape_cast %38 : vector<1x8x8x128xf32> to vector<8x8x128xf32>
    %40 = vector.shape_cast %39 : vector<8x8x128xf32> to vector<64x128xf32>
    %c3 = arith.constant 3 : index
    %c0_41 = arith.constant 0 : index
    %c0_42 = arith.constant 0 : index
    %41 = vector.load %arg4[%c3, %c0_41, %c0_42] : memref<5x128x256xf32, #tpu.memory_space<vmem>>, vector<1x128x256xf32>
    %42 = vector.shape_cast %41 : vector<1x128x256xf32> to vector<128x256xf32>
    %cst_43 = arith.constant dense<0.000000e+00> : vector<64x256xf32>
    %43 = tpu.matmul %40, %42, %cst_43 {dimension_numbers = #tpu.dot_dimension_numbers<[1], [0], [0], [1], [0, 0, 1, 1], [], []>} : vector<64x128xf32>, vector<128x256xf32>, vector<64x256xf32> -> vector<64x256xf32>
    %44 = arith.addf %37, %43 : vector<64x256xf32>
    %c0_44 = arith.constant 0 : index
    %c2_45 = arith.constant 2 : index
    %c0_46 = arith.constant 0 : index
    %c0_47 = arith.constant 0 : index
    %45 = vector.load %arg12[%c0_44, %c2_45, %c0_46, %c0_47] : memref<2x16x8x128xf32, #tpu.memory_space<vmem>>, vector<1x8x8x128xf32>
    %46 = vector.shape_cast %45 : vector<1x8x8x128xf32> to vector<8x8x128xf32>
    %47 = vector.shape_cast %46 : vector<8x8x128xf32> to vector<64x128xf32>
    %c4 = arith.constant 4 : index
    %c0_48 = arith.constant 0 : index
    %c0_49 = arith.constant 0 : index
    %48 = vector.load %arg4[%c4, %c0_48, %c0_49] : memref<5x128x256xf32, #tpu.memory_space<vmem>>, vector<1x128x256xf32>
    %49 = vector.shape_cast %48 : vector<1x128x256xf32> to vector<128x256xf32>
    %cst_50 = arith.constant dense<0.000000e+00> : vector<64x256xf32>
    %50 = tpu.matmul %47, %49, %cst_50 {dimension_numbers = #tpu.dot_dimension_numbers<[1], [0], [0], [1], [0, 0, 1, 1], [], []>} : vector<64x128xf32>, vector<128x256xf32>, vector<64x256xf32> -> vector<64x256xf32>
    %51 = arith.addf %44, %50 : vector<64x256xf32>
    %52 = vector.extract_strided_slice %51 {offsets = [0, 0], sizes = [64, 128], strides = [1, 1]} : vector<64x256xf32> to vector<64x128xf32>
    %53 = vector.extract_strided_slice %51 {offsets = [0, 128], sizes = [64, 128], strides = [1, 1]} : vector<64x256xf32> to vector<64x128xf32>
    %54 = arith.maximumf %52, %53 : vector<64x128xf32>
    %c1_51 = arith.constant 1 : index
    %c0_52 = arith.constant 0 : index
    %c0_53 = arith.constant 0 : index
    %c0_54 = arith.constant 0 : index
    %55 = vector.load %arg12[%c1_51, %c0_52, %c0_53, %c0_54] : memref<2x16x8x128xf32, #tpu.memory_space<vmem>>, vector<1x8x8x128xf32>
    %56 = vector.shape_cast %55 : vector<1x8x8x128xf32> to vector<8x8x128xf32>
    %57 = vector.shape_cast %56 : vector<8x8x128xf32> to vector<64x128xf32>
    %c0_55 = arith.constant 0 : index
    %c0_56 = arith.constant 0 : index
    %c0_57 = arith.constant 0 : index
    %58 = vector.load %arg4[%c0_55, %c0_56, %c0_57] : memref<5x128x256xf32, #tpu.memory_space<vmem>>, vector<1x128x256xf32>
    %59 = vector.shape_cast %58 : vector<1x128x256xf32> to vector<128x256xf32>
    %cst_58 = arith.constant dense<0.000000e+00> : vector<64x256xf32>
    %60 = tpu.matmul %57, %59, %cst_58 {dimension_numbers = #tpu.dot_dimension_numbers<[1], [0], [0], [1], [0, 0, 1, 1], [], []>} : vector<64x128xf32>, vector<128x256xf32>, vector<64x256xf32> -> vector<64x256xf32>
    %c0_59 = arith.constant 0 : index
    %c1_60 = arith.constant 1 : index
    %c0_61 = arith.constant 0 : index
    %c0_62 = arith.constant 0 : index
    %61 = vector.load %arg12[%c0_59, %c1_60, %c0_61, %c0_62] : memref<2x16x8x128xf32, #tpu.memory_space<vmem>>, vector<1x8x8x128xf32>
    %62 = vector.shape_cast %61 : vector<1x8x8x128xf32> to vector<8x8x128xf32>
    %63 = vector.shape_cast %62 : vector<8x8x128xf32> to vector<64x128xf32>
    %c1_63 = arith.constant 1 : index
    %c0_64 = arith.constant 0 : index
    %c0_65 = arith.constant 0 : index
    %64 = vector.load %arg4[%c1_63, %c0_64, %c0_65] : memref<5x128x256xf32, #tpu.memory_space<vmem>>, vector<1x128x256xf32>
    %65 = vector.shape_cast %64 : vector<1x128x256xf32> to vector<128x256xf32>
    %cst_66 = arith.constant dense<0.000000e+00> : vector<64x256xf32>
    %66 = tpu.matmul %63, %65, %cst_66 {dimension_numbers = #tpu.dot_dimension_numbers<[1], [0], [0], [1], [0, 0, 1, 1], [], []>} : vector<64x128xf32>, vector<128x256xf32>, vector<64x256xf32> -> vector<64x256xf32>
    %67 = arith.addf %60, %66 : vector<64x256xf32>
    %c1_67 = arith.constant 1 : index
    %c1_68 = arith.constant 1 : index
    %c0_69 = arith.constant 0 : index
    %c0_70 = arith.constant 0 : index
    %68 = vector.load %arg12[%c1_67, %c1_68, %c0_69, %c0_70] : memref<2x16x8x128xf32, #tpu.memory_space<vmem>>, vector<1x8x8x128xf32>
    %69 = vector.shape_cast %68 : vector<1x8x8x128xf32> to vector<8x8x128xf32>
    %70 = vector.shape_cast %69 : vector<8x8x128xf32> to vector<64x128xf32>
    %c2_71 = arith.constant 2 : index
    %c0_72 = arith.constant 0 : index
    %c0_73 = arith.constant 0 : index
    %71 = vector.load %arg4[%c2_71, %c0_72, %c0_73] : memref<5x128x256xf32, #tpu.memory_space<vmem>>, vector<1x128x256xf32>
    %72 = vector.shape_cast %71 : vector<1x128x256xf32> to vector<128x256xf32>
    %cst_74 = arith.constant dense<0.000000e+00> : vector<64x256xf32>
    %73 = tpu.matmul %70, %72, %cst_74 {dimension_numbers = #tpu.dot_dimension_numbers<[1], [0], [0], [1], [0, 0, 1, 1], [], []>} : vector<64x128xf32>, vector<128x256xf32>, vector<64x256xf32> -> vector<64x256xf32>
    %74 = arith.addf %67, %73 : vector<64x256xf32>
    %c0_75 = arith.constant 0 : index
    %c2_76 = arith.constant 2 : index
    %c0_77 = arith.constant 0 : index
    %c0_78 = arith.constant 0 : index
    %75 = vector.load %arg12[%c0_75, %c2_76, %c0_77, %c0_78] : memref<2x16x8x128xf32, #tpu.memory_space<vmem>>, vector<1x8x8x128xf32>
    %76 = vector.shape_cast %75 : vector<1x8x8x128xf32> to vector<8x8x128xf32>
    %77 = vector.shape_cast %76 : vector<8x8x128xf32> to vector<64x128xf32>
    %c3_79 = arith.constant 3 : index
    %c0_80 = arith.constant 0 : index
    %c0_81 = arith.constant 0 : index
    %78 = vector.load %arg4[%c3_79, %c0_80, %c0_81] : memref<5x128x256xf32, #tpu.memory_space<vmem>>, vector<1x128x256xf32>
    %79 = vector.shape_cast %78 : vector<1x128x256xf32> to vector<128x256xf32>
    %cst_82 = arith.constant dense<0.000000e+00> : vector<64x256xf32>
    %80 = tpu.matmul %77, %79, %cst_82 {dimension_numbers = #tpu.dot_dimension_numbers<[1], [0], [0], [1], [0, 0, 1, 1], [], []>} : vector<64x128xf32>, vector<128x256xf32>, vector<64x256xf32> -> vector<64x256xf32>
    %81 = arith.addf %74, %80 : vector<64x256xf32>
    %c1_83 = arith.constant 1 : index
    %c2_84 = arith.constant 2 : index
    %c0_85 = arith.constant 0 : index
    %c0_86 = arith.constant 0 : index
    %82 = vector.load %arg12[%c1_83, %c2_84, %c0_85, %c0_86] : memref<2x16x8x128xf32, #tpu.memory_space<vmem>>, vector<1x8x8x128xf32>
    %83 = vector.shape_cast %82 : vector<1x8x8x128xf32> to vector<8x8x128xf32>
    %84 = vector.shape_cast %83 : vector<8x8x128xf32> to vector<64x128xf32>
    %c4_87 = arith.constant 4 : index
    %c0_88 = arith.constant 0 : index
    %c0_89 = arith.constant 0 : index
    %85 = vector.load %arg4[%c4_87, %c0_88, %c0_89] : memref<5x128x256xf32, #tpu.memory_space<vmem>>, vector<1x128x256xf32>
    %86 = vector.shape_cast %85 : vector<1x128x256xf32> to vector<128x256xf32>
    %cst_90 = arith.constant dense<0.000000e+00> : vector<64x256xf32>
    %87 = tpu.matmul %84, %86, %cst_90 {dimension_numbers = #tpu.dot_dimension_numbers<[1], [0], [0], [1], [0, 0, 1, 1], [], []>} : vector<64x128xf32>, vector<128x256xf32>, vector<64x256xf32> -> vector<64x256xf32>
    %88 = arith.addf %81, %87 : vector<64x256xf32>
    %89 = vector.extract_strided_slice %88 {offsets = [0, 0], sizes = [64, 128], strides = [1, 1]} : vector<64x256xf32> to vector<64x128xf32>
    %90 = vector.extract_strided_slice %88 {offsets = [0, 128], sizes = [64, 128], strides = [1, 1]} : vector<64x256xf32> to vector<64x128xf32>
    %91 = arith.maximumf %89, %90 : vector<64x128xf32>
    %92 = arith.maximumf %54, %91 : vector<64x128xf32>
    %cst_91 = arith.constant 0.000000e+00 : f32
    %93 = vector.broadcast %cst_91 : f32 to vector<64x128xf32>
    %94 = arith.maximumf %92, %93 : vector<64x128xf32>
    %95 = vector.extract_strided_slice %94 {offsets = [0, 0], sizes = [8, 128], strides = [1, 1]} : vector<64x128xf32> to vector<8x128xf32>
    %c0_92 = arith.constant 0 : index
    %c0_93 = arith.constant 0 : index
    %c0_94 = arith.constant 0 : index
    %96 = vector.load %arg5[%c0_92, %c0_93, %c0_94] : memref<7x128x120xf32, #tpu.memory_space<vmem>>, vector<1x128x120xf32>
    %97 = vector.shape_cast %96 : vector<1x128x120xf32> to vector<128x120xf32>
    %cst_95 = arith.constant dense<0.000000e+00> : vector<8x120xf32>
    %98 = tpu.matmul %95, %97, %cst_95 {dimension_numbers = #tpu.dot_dimension_numbers<[1], [0], [0], [1], [0, 0, 1, 1], [], []>} : vector<8x128xf32>, vector<128x120xf32>, vector<8x120xf32> -> vector<8x120xf32>
    %99 = vector.extract_strided_slice %94 {offsets = [8, 0], sizes = [8, 128], strides = [1, 1]} : vector<64x128xf32> to vector<8x128xf32>
    %c1_96 = arith.constant 1 : index
    %c0_97 = arith.constant 0 : index
    %c0_98 = arith.constant 0 : index
    %100 = vector.load %arg5[%c1_96, %c0_97, %c0_98] : memref<7x128x120xf32, #tpu.memory_space<vmem>>, vector<1x128x120xf32>
    %101 = vector.shape_cast %100 : vector<1x128x120xf32> to vector<128x120xf32>
    %cst_99 = arith.constant dense<0.000000e+00> : vector<8x120xf32>
    %102 = tpu.matmul %99, %101, %cst_99 {dimension_numbers = #tpu.dot_dimension_numbers<[1], [0], [0], [1], [0, 0, 1, 1], [], []>} : vector<8x128xf32>, vector<128x120xf32>, vector<8x120xf32> -> vector<8x120xf32>
    %103 = arith.addf %98, %102 : vector<8x120xf32>
    %104 = vector.extract_strided_slice %94 {offsets = [16, 0], sizes = [8, 128], strides = [1, 1]} : vector<64x128xf32> to vector<8x128xf32>
    %c2_100 = arith.constant 2 : index
    %c0_101 = arith.constant 0 : index
    %c0_102 = arith.constant 0 : index
    %105 = vector.load %arg5[%c2_100, %c0_101, %c0_102] : memref<7x128x120xf32, #tpu.memory_space<vmem>>, vector<1x128x120xf32>
    %106 = vector.shape_cast %105 : vector<1x128x120xf32> to vector<128x120xf32>
    %cst_103 = arith.constant dense<0.000000e+00> : vector<8x120xf32>
    %107 = tpu.matmul %104, %106, %cst_103 {dimension_numbers = #tpu.dot_dimension_numbers<[1], [0], [0], [1], [0, 0, 1, 1], [], []>} : vector<8x128xf32>, vector<128x120xf32>, vector<8x120xf32> -> vector<8x120xf32>
    %108 = arith.addf %103, %107 : vector<8x120xf32>
    %109 = vector.extract_strided_slice %94 {offsets = [24, 0], sizes = [8, 128], strides = [1, 1]} : vector<64x128xf32> to vector<8x128xf32>
    %c3_104 = arith.constant 3 : index
    %c0_105 = arith.constant 0 : index
    %c0_106 = arith.constant 0 : index
    %110 = vector.load %arg5[%c3_104, %c0_105, %c0_106] : memref<7x128x120xf32, #tpu.memory_space<vmem>>, vector<1x128x120xf32>
    %111 = vector.shape_cast %110 : vector<1x128x120xf32> to vector<128x120xf32>
    %cst_107 = arith.constant dense<0.000000e+00> : vector<8x120xf32>
    %112 = tpu.matmul %109, %111, %cst_107 {dimension_numbers = #tpu.dot_dimension_numbers<[1], [0], [0], [1], [0, 0, 1, 1], [], []>} : vector<8x128xf32>, vector<128x120xf32>, vector<8x120xf32> -> vector<8x120xf32>
    %113 = arith.addf %108, %112 : vector<8x120xf32>
    %114 = vector.extract_strided_slice %94 {offsets = [32, 0], sizes = [8, 128], strides = [1, 1]} : vector<64x128xf32> to vector<8x128xf32>
    %c4_108 = arith.constant 4 : index
    %c0_109 = arith.constant 0 : index
    %c0_110 = arith.constant 0 : index
    %115 = vector.load %arg5[%c4_108, %c0_109, %c0_110] : memref<7x128x120xf32, #tpu.memory_space<vmem>>, vector<1x128x120xf32>
    %116 = vector.shape_cast %115 : vector<1x128x120xf32> to vector<128x120xf32>
    %cst_111 = arith.constant dense<0.000000e+00> : vector<8x120xf32>
    %117 = tpu.matmul %114, %116, %cst_111 {dimension_numbers = #tpu.dot_dimension_numbers<[1], [0], [0], [1], [0, 0, 1, 1], [], []>} : vector<8x128xf32>, vector<128x120xf32>, vector<8x120xf32> -> vector<8x120xf32>
    %118 = arith.addf %113, %117 : vector<8x120xf32>
    %119 = vector.extract_strided_slice %94 {offsets = [40, 0], sizes = [8, 128], strides = [1, 1]} : vector<64x128xf32> to vector<8x128xf32>
    %c5 = arith.constant 5 : index
    %c0_112 = arith.constant 0 : index
    %c0_113 = arith.constant 0 : index
    %120 = vector.load %arg5[%c5, %c0_112, %c0_113] : memref<7x128x120xf32, #tpu.memory_space<vmem>>, vector<1x128x120xf32>
    %121 = vector.shape_cast %120 : vector<1x128x120xf32> to vector<128x120xf32>
    %cst_114 = arith.constant dense<0.000000e+00> : vector<8x120xf32>
    %122 = tpu.matmul %119, %121, %cst_114 {dimension_numbers = #tpu.dot_dimension_numbers<[1], [0], [0], [1], [0, 0, 1, 1], [], []>} : vector<8x128xf32>, vector<128x120xf32>, vector<8x120xf32> -> vector<8x120xf32>
    %123 = arith.addf %118, %122 : vector<8x120xf32>
    %124 = vector.extract_strided_slice %94 {offsets = [48, 0], sizes = [8, 128], strides = [1, 1]} : vector<64x128xf32> to vector<8x128xf32>
    %c6 = arith.constant 6 : index
    %c0_115 = arith.constant 0 : index
    %c0_116 = arith.constant 0 : index
    %125 = vector.load %arg5[%c6, %c0_115, %c0_116] : memref<7x128x120xf32, #tpu.memory_space<vmem>>, vector<1x128x120xf32>
    %126 = vector.shape_cast %125 : vector<1x128x120xf32> to vector<128x120xf32>
    %cst_117 = arith.constant dense<0.000000e+00> : vector<8x120xf32>
    %127 = tpu.matmul %124, %126, %cst_117 {dimension_numbers = #tpu.dot_dimension_numbers<[1], [0], [0], [1], [0, 0, 1, 1], [], []>} : vector<8x128xf32>, vector<128x120xf32>, vector<8x120xf32> -> vector<8x120xf32>
    %128 = arith.addf %123, %127 : vector<8x120xf32>
    %c0_118 = arith.constant 0 : index
    %c0_119 = arith.constant 0 : index
    %129 = vector.load %arg6[%c0_118, %c0_119] : memref<1x120xf32, #tpu.memory_space<vmem>>, vector<1x120xf32>
    %130 = vector.broadcast %129 : vector<1x120xf32> to vector<8x120xf32>
    %131 = arith.addf %128, %130 : vector<8x120xf32>
    %cst_120 = arith.constant 0.000000e+00 : f32
    %132 = vector.broadcast %cst_120 : f32 to vector<8x120xf32>
    %133 = arith.maximumf %131, %132 : vector<8x120xf32>
    %c0_121 = arith.constant 0 : index
    %c0_122 = arith.constant 0 : index
    %134 = vector.load %arg7[%c0_121, %c0_122] : memref<120x84xf32, #tpu.memory_space<vmem>>, vector<120x84xf32>
    %cst_123 = arith.constant dense<0.000000e+00> : vector<8x84xf32>
    %135 = tpu.matmul %133, %134, %cst_123 {dimension_numbers = #tpu.dot_dimension_numbers<[1], [0], [0], [1], [0, 0, 1, 1], [], []>} : vector<8x120xf32>, vector<120x84xf32>, vector<8x84xf32> -> vector<8x84xf32>
    %c0_124 = arith.constant 0 : index
    %c0_125 = arith.constant 0 : index
    %136 = vector.load %arg8[%c0_124, %c0_125] : memref<1x84xf32, #tpu.memory_space<vmem>>, vector<1x84xf32>
    %137 = vector.broadcast %136 : vector<1x84xf32> to vector<8x84xf32>
    %138 = arith.addf %135, %137 : vector<8x84xf32>
    %cst_126 = arith.constant 0.000000e+00 : f32
    %139 = vector.broadcast %cst_126 : f32 to vector<8x84xf32>
    %140 = arith.maximumf %138, %139 : vector<8x84xf32>
    %c0_127 = arith.constant 0 : index
    %c0_128 = arith.constant 0 : index
    %141 = vector.load %arg9[%c0_127, %c0_128] : memref<84x10xf32, #tpu.memory_space<vmem>>, vector<84x10xf32>
    %cst_129 = arith.constant dense<0.000000e+00> : vector<8x10xf32>
    %142 = tpu.matmul %140, %141, %cst_129 {dimension_numbers = #tpu.dot_dimension_numbers<[1], [0], [0], [1], [0, 0, 1, 1], [], []>} : vector<8x84xf32>, vector<84x10xf32>, vector<8x10xf32> -> vector<8x10xf32>
    %c0_130 = arith.constant 0 : index
    %c0_131 = arith.constant 0 : index
    %143 = vector.load %arg10[%c0_130, %c0_131] : memref<1x10xf32, #tpu.memory_space<vmem>>, vector<1x10xf32>
    %144 = vector.broadcast %143 : vector<1x10xf32> to vector<8x10xf32>
    %145 = arith.addf %142, %144 : vector<8x10xf32>
    %c0_132 = arith.constant 0 : index
    %c0_133 = arith.constant 0 : index
    %146 = vector.load %arg11[%c0_132, %c0_133] : memref<8x10xf32, #tpu.memory_space<vmem>>, vector<8x10xf32>
    tpu.vector_store %arg11[%c0_132, %c0_133], %145 {strides = array<i32>} : memref<8x10xf32, #tpu.memory_space<vmem>>, vector<8x10xf32>,
    return
  }
  func.func @transform_0(%arg0: i32) -> (i32, i32) {
    %c0_i32 = arith.constant 0 : i32
    %c0_i32_0 = arith.constant 0 : i32
    return %arg0, %c0_i32 : i32, i32
  }
  func.func @transform_1(%arg0: i32) -> (i32, i32) {
    %c0_i32 = arith.constant 0 : i32
    %c0_i32_0 = arith.constant 0 : i32
    return %arg0, %c0_i32 : i32, i32
  }
  func.func @transform_2(%arg0: i32) -> (i32, i32) {
    %c0_i32 = arith.constant 0 : i32
    %c0_i32_0 = arith.constant 0 : i32
    %c0_i32_1 = arith.constant 0 : i32
    return %c0_i32, %c0_i32_0 : i32, i32
  }
  func.func @transform_3(%arg0: i32) -> (i32, i32, i32) {
    %c0_i32 = arith.constant 0 : i32
    %c0_i32_0 = arith.constant 0 : i32
    %c0_i32_1 = arith.constant 0 : i32
    %c0_i32_2 = arith.constant 0 : i32
    return %c0_i32, %c0_i32_0, %c0_i32_1 : i32, i32, i32
  }
  func.func @transform_4(%arg0: i32) -> (i32, i32, i32) {
    %c0_i32 = arith.constant 0 : i32
    %c0_i32_0 = arith.constant 0 : i32
    %c0_i32_1 = arith.constant 0 : i32
    %c0_i32_2 = arith.constant 0 : i32
    return %c0_i32, %c0_i32_0, %c0_i32_1 : i32, i32, i32
  }
  func.func @transform_5(%arg0: i32) -> (i32, i32) {
    %c0_i32 = arith.constant 0 : i32
    %c0_i32_0 = arith.constant 0 : i32
    %c0_i32_1 = arith.constant 0 : i32
    return %c0_i32, %c0_i32_0 : i32, i32
  }
  func.func @transform_6(%arg0: i32) -> (i32, i32) {
    %c0_i32 = arith.constant 0 : i32
    %c0_i32_0 = arith.constant 0 : i32
    %c0_i32_1 = arith.constant 0 : i32
    return %c0_i32, %c0_i32_0 : i32, i32
  }
  func.func @transform_7(%arg0: i32) -> (i32, i32) {
    %c0_i32 = arith.constant 0 : i32
    %c0_i32_0 = arith.constant 0 : i32
    %c0_i32_1 = arith.constant 0 : i32
    return %c0_i32, %c0_i32_0 : i32, i32
  }
  func.func @transform_8(%arg0: i32) -> (i32, i32) {
    %c0_i32 = arith.constant 0 : i32
    %c0_i32_0 = arith.constant 0 : i32
    %c0_i32_1 = arith.constant 0 : i32
    return %c0_i32, %c0_i32_0 : i32, i32
  }
  func.func @transform_9(%arg0: i32) -> (i32, i32) {
    %c0_i32 = arith.constant 0 : i32
    %c0_i32_0 = arith.constant 0 : i32
    %c0_i32_1 = arith.constant 0 : i32
    return %c0_i32, %c0_i32_0 : i32, i32
  }
  func.func @transform_10(%arg0: i32) -> (i32, i32) {
    %c0_i32 = arith.constant 0 : i32
    %c0_i32_0 = arith.constant 0 : i32
    return %arg0, %c0_i32 : i32, i32
  }
}

</mosaic_0001>

<llo_original>
// kernel: lenet_forward.1
$region0: #{lenet_forward.1}
  #allocation0 [shape = 'u32[]', space=smem, size = 0x4, offset = 0x4, fixed_abs, tag = 'smem constant byte address 0x4 - core index']
  #allocation1 [shape = 'u32[144,128]{1,0:T(1,128)}', space=vmem, size = 0x12000, scoped, tag = 'internal scratch']
  #allocation2 [shape = 'f32[2,16,8,128]{3,2,1,0:T(8,128)}', space=vmem, size = 0x20000, scoped, tag = 'scratch operand']
  %s0 = inlined_call_operand.vmem [shape: f32[128,161], index: 0, kind: input, shape index: {}]
  %s1 = inlined_call_operand.vmem [shape: f32[128,161], index: 1, kind: input, shape index: {}]
  %s2 = inlined_call_operand.vmem [shape: f32[161,256], index: 2, kind: input, shape index: {}]
  %s3 = inlined_call_operand.vmem [shape: f32[5,128,256], index: 3, kind: input, shape index: {}]
  %s4 = inlined_call_operand.vmem [shape: f32[7,128,120], index: 4, kind: input, shape index: {}]
  %s5 = inlined_call_operand.vmem [shape: f32[1,120], index: 5, kind: input, shape index: {}]
  %s6 = inlined_call_operand.vmem [shape: f32[120,84], index: 6, kind: input, shape index: {}]
  %s7 = inlined_call_operand.vmem [shape: f32[1,84], index: 7, kind: input, shape index: {}]
  %s8 = inlined_call_operand.vmem [shape: f32[84,10], index: 8, kind: input, shape index: {}]
  %s9 = inlined_call_operand.vmem [shape: f32[1,10], index: 9, kind: input, shape index: {}]
  %s10 = inlined_call_operand.vmem [shape: f32[8,10], index: 10, kind: output, shape index: {}]
  %s11 = sld [smem:[#allocation0]]
  $region50: #{lenet_forward.1} parent=0
    _
  %s13 = ssub.s32 1, %s11
  %s14 = scalar_select 0, %s13, %s11
  // Predicated region
  $region2: #{lenet_forward.1} parent=0 // pred_check
    _
  $region3: #{lenet_forward.1} parent=0 // pred_check_branch
    %16 = sbr.rel (0) target = $region5
  $region4: #{lenet_forward.1} parent=0 // pred_region
    _
  $region5: #{lenet_forward.1} parent=0 // pred_fallthru
    _
  // Predicated region
  $region6: #{lenet_forward.1} parent=0 // pred_check
    _
  $region7: #{lenet_forward.1} parent=0 // pred_check_branch
    %18 = sbr.rel (0) target = $region9
  $region8: #{lenet_forward.1} parent=0 // pred_region
    _
  $region9: #{lenet_forward.1} parent=0 // pred_fallthru
    _
  // Predicated region
  $region10: #{lenet_forward.1} parent=0 // pred_check
    _
  $region11: #{lenet_forward.1} parent=0 // pred_check_branch
    %20 = sbr.rel (0) target = $region13
  $region12: #{lenet_forward.1} parent=0 // pred_region
    _
  $region13: #{lenet_forward.1} parent=0 // pred_fallthru
    _
  // Predicated region
  $region14: #{lenet_forward.1} parent=0 // pred_check
    _
  $region15: #{lenet_forward.1} parent=0 // pred_check_branch
    %22 = sbr.rel (0) target = $region17
  $region16: #{lenet_forward.1} parent=0 // pred_region
    _
  $region17: #{lenet_forward.1} parent=0 // pred_fallthru
    _
  // Predicated region
  $region18: #{lenet_forward.1} parent=0 // pred_check
    _
  $region19: #{lenet_forward.1} parent=0 // pred_check_branch
    %24 = sbr.rel (0) target = $region21
  $region20: #{lenet_forward.1} parent=0 // pred_region
    _
  $region21: #{lenet_forward.1} parent=0 // pred_fallthru
    _
  // Predicated region
  $region22: #{lenet_forward.1} parent=0 // pred_check
    _
  $region23: #{lenet_forward.1} parent=0 // pred_check_branch
    %26 = sbr.rel (0) target = $region25
  $region24: #{lenet_forward.1} parent=0 // pred_region
    _
  $region25: #{lenet_forward.1} parent=0 // pred_fallthru
    _
  // Predicated region
  $region26: #{lenet_forward.1} parent=0 // pred_check
    _
  $region27: #{lenet_forward.1} parent=0 // pred_check_branch
    %28 = sbr.rel (0) target = $region29
  $region28: #{lenet_forward.1} parent=0 // pred_region
    _
  $region29: #{lenet_forward.1} parent=0 // pred_fallthru
    _
  // Predicated region
  $region30: #{lenet_forward.1} parent=0 // pred_check
    _
  $region31: #{lenet_forward.1} parent=0 // pred_check_branch
    %30 = sbr.rel (0) target = $region33
  $region32: #{lenet_forward.1} parent=0 // pred_region
    _
  $region33: #{lenet_forward.1} parent=0 // pred_fallthru
    _
  // Predicated region
  $region34: #{lenet_forward.1} parent=0 // pred_check
    _
  $region35: #{lenet_forward.1} parent=0 // pred_check_branch
    %32 = sbr.rel (0) target = $region37
  $region36: #{lenet_forward.1} parent=0 // pred_region
    _
  $region37: #{lenet_forward.1} parent=0 // pred_fallthru
    _
  // Predicated region
  $region38: #{lenet_forward.1} parent=0 // pred_check
    _
  $region39: #{lenet_forward.1} parent=0 // pred_check_branch
    %34 = sbr.rel (0) target = $region41
  $region40: #{lenet_forward.1} parent=0 // pred_region
    _
  $region41: #{lenet_forward.1} parent=0 // pred_fallthru
    _
  %v35 = vld [vmem:[%s2] sm:$0xff]
  %v36 = vld [vmem:[%s2 + $0x8] sm:$0xff]
  %v37 = vld [vmem:[%s2 + $0x10] sm:$0xff]
  %v38 = vld [vmem:[%s2 + $0x18] sm:$0xff]
  %v39 = vld [vmem:[%s2 + $0x20] sm:$0xff]
  %v40 = vld [vmem:[%s2 + $0x28] sm:$0xff]
  %v41 = vld [vmem:[%s2 + $0x30] sm:$0xff]
  %v42 = vld [vmem:[%s2 + $0x38] sm:$0xff]
  %v43 = vld [vmem:[%s2 + $0x40] sm:$0xff]
  %v44 = vld [vmem:[%s2 + $0x48] sm:$0xff]
  %v45 = vld [vmem:[%s2 + $0x50] sm:$0xff]
  %v46 = vld [vmem:[%s2 + $0x58] sm:$0xff]
  %v47 = vld [vmem:[%s2 + $0x60] sm:$0xff]
  %v48 = vld [vmem:[%s2 + $0x68] sm:$0xff]
  %v49 = vld [vmem:[%s2 + $0x70] sm:$0xff]
  %v50 = vld [vmem:[%s2 + $0x78] sm:$0xff]
  %v51 = vld [vmem:[%s2 + $0x80] sm:$0xff]
  %v52 = vld [vmem:[%s2 + $0x88] sm:$0xff]
  %v53 = vld [vmem:[%s2 + $0x90] sm:$0xff]
  %v54 = vld [vmem:[%s2 + $0x98] sm:$0xff]
  %v55 = vld [vmem:[%s2 + $0xa0] sm:$0xff]
  %v56 = vld [vmem:[%s2 + $0xa8] sm:$0xff]
  %v57 = vld [vmem:[%s2 + $0xb0] sm:$0xff]
  %v58 = vld [vmem:[%s2 + $0xb8] sm:$0xff]
  %v59 = vld [vmem:[%s2 + $0xc0] sm:$0xff]
  %v60 = vld [vmem:[%s2 + $0xc8] sm:$0xff]
  %v61 = vld [vmem:[%s2 + $0xd0] sm:$0xff]
  %v62 = vld [vmem:[%s2 + $0xd8] sm:$0xff]
  %v63 = vld [vmem:[%s2 + $0xe0] sm:$0xff]
  %v64 = vld [vmem:[%s2 + $0xe8] sm:$0xff]
  %v65 = vld [vmem:[%s2 + $0xf0] sm:$0xff]
  %v66 = vld [vmem:[%s2 + $0xf8] sm:$0xff]
  %v67 = vld [vmem:[%s2 + $0x100] sm:$0xff]
  %v68 = vld [vmem:[%s2 + $0x108] sm:$0xff]
  %v69 = vld [vmem:[%s2 + $0x110] sm:$0xff]
  %v70 = vld [vmem:[%s2 + $0x118] sm:$0xff]
  %v71 = vld [vmem:[%s2 + $0x120] sm:$0xff]
  %v72 = vld [vmem:[%s2 + $0x128] sm:$0xff]
  %v73 = vld [vmem:[%s2 + $0x130] sm:$0xff]
  %v74 = vld [vmem:[%s2 + $0x138] sm:$0xff]
  %v75 = vld [vmem:[%s2 + $0x140] sm:$0x1]
  %v76 = vld [vmem:[%s2 + $0x148] sm:$0x1]
  %v77 = vld [vmem:[%s0] sm:$0xff]
  %v78 = vld [vmem:[%s0 + $0x8] sm:$0xff]
  %v79 = vld [vmem:[%s0 + $0x10] sm:$0xff]
  %v80 = vld [vmem:[%s0 + $0x18] sm:$0xff]
  %v81 = vld [vmem:[%s0 + $0x20] sm:$0xff]
  %v82 = vld [vmem:[%s0 + $0x28] sm:$0xff]
  %v83 = vld [vmem:[%s0 + $0x30] sm:$0xff]
  %v84 = vld [vmem:[%s0 + $0x38] sm:$0xff]
  %v85 = vld [vmem:[%s0 + $0x40] sm:$0xff]
  %v86 = vld [vmem:[%s0 + $0x48] sm:$0xff]
  %v87 = vld [vmem:[%s0 + $0x50] sm:$0xff]
  %v88 = vld [vmem:[%s0 + $0x58] sm:$0xff]
  %v89 = vld [vmem:[%s0 + $0x60] sm:$0xff]
  %v90 = vld [vmem:[%s0 + $0x68] sm:$0xff]
  %v91 = vld [vmem:[%s0 + $0x70] sm:$0xff]
  %v92 = vld [vmem:[%s0 + $0x78] sm:$0xff]
  %v93 = vld [vmem:[%s0 + $0x80] sm:$0xff]
  %v94 = vld [vmem:[%s0 + $0x88] sm:$0xff]
  %v95 = vld [vmem:[%s0 + $0x90] sm:$0xff]
  %v96 = vld [vmem:[%s0 + $0x98] sm:$0xff]
  %v97 = vld [vmem:[%s0 + $0xa0] sm:$0xff]
  %v98 = vld [vmem:[%s0 + $0xa8] sm:$0xff]
  %v99 = vld [vmem:[%s0 + $0xb0] sm:$0xff]
  %v100 = vld [vmem:[%s0 + $0xb8] sm:$0xff]
  %v101 = vld [vmem:[%s0 + $0xc0] sm:$0xff]
  %v102 = vld [vmem:[%s0 + $0xc8] sm:$0xff]
  %v103 = vld [vmem:[%s0 + $0xd0] sm:$0xff]
  %v104 = vld [vmem:[%s0 + $0xd8] sm:$0xff]
  %v105 = vld [vmem:[%s0 + $0xe0] sm:$0xff]
  %v106 = vld [vmem:[%s0 + $0xe8] sm:$0xff]
  %v107 = vld [vmem:[%s0 + $0xf0] sm:$0xff]
  %v108 = vld [vmem:[%s0 + $0xf8] sm:$0xff]
  %vm109 = vcmask 269312
  %v111 = vsel %vm109, %v78, 0
  %v114 = vsel %vm109, %v80, 0
  %v117 = vsel %vm109, %v82, 0
  %v120 = vsel %vm109, %v84, 0
  %v123 = vsel %vm109, %v86, 0
  %v126 = vsel %vm109, %v88, 0
  %v129 = vsel %vm109, %v90, 0
  %v132 = vsel %vm109, %v92, 0
  %v135 = vsel %vm109, %v94, 0
  %v138 = vsel %vm109, %v96, 0
  %v141 = vsel %vm109, %v98, 0
  %v144 = vsel %vm109, %v100, 0
  %v147 = vsel %vm109, %v102, 0
  %v150 = vsel %vm109, %v104, 0
  %v153 = vsel %vm109, %v106, 0
  %v156 = vsel %vm109, %v108, 0
  %vm158 = vcmask 1040384
  %v160 = vsel %vm158, %v75, 0
  %v163 = vsel %vm158, %v76, 0
  %165 = vmatprep.subr.mxu0 %v36
  %166 = vmatpush1.msra.mxu0 %v35
  %167 = vmatprep.subr.mxu0 %v38
  %168 = vmatpush1.msra.mxu0 %v37
  %169 = vmatprep.subr.mxu0 %v40
  %170 = vmatpush1.msra.mxu0 %v39
  %171 = vmatprep.subr.mxu0 %v42
  %172 = vmatpush1.msra.mxu0 %v41
  %173 = vmatprep.subr.mxu0 %v44
  %174 = vmatpush1.msra.mxu0 %v43
  %175 = vmatprep.subr.mxu0 %v46
  %176 = vmatpush1.msra.mxu0 %v45
  %177 = vmatprep.subr.mxu0 %v48
  %178 = vmatpush1.msra.mxu0 %v47
  %179 = vmatprep.subr.mxu0 %v50
  %180 = vmatpush1.msra.mxu0 %v49
  %181 = vmatprep.subr.mxu0 %v52
  %182 = vmatpush1.msra.mxu0 %v51
  %183 = vmatprep.subr.mxu0 %v54
  %184 = vmatpush1.msra.mxu0 %v53
  %185 = vmatprep.subr.mxu0 %v56
  %186 = vmatpush1.msra.mxu0 %v55
  %187 = vmatprep.subr.mxu0 %v58
  %188 = vmatpush1.msra.mxu0 %v57
  %189 = vmatprep.subr.mxu0 %v60
  %190 = vmatpush1.msra.mxu0 %v59
  %191 = vmatprep.subr.mxu0 %v62
  %192 = vmatpush1.msra.mxu0 %v61
  %193 = vmatprep.subr.mxu0 %v64
  %194 = vmatpush1.msra.mxu0 %v63
  %195 = vmatprep.subr.mxu0 %v66
  %196 = vmatpush1.msra.mxu0 %v65
  %197 = vmatprep.subr.mxu0 %v68
  %198 = vmatpush1.msra.mxu0 %v67
  %199 = vmatprep.subr.mxu0 %v70
  %200 = vmatpush1.msra.mxu0 %v69
  %201 = vmatprep.subr.mxu0 %v72
  %202 = vmatpush1.msra.mxu0 %v71
  %203 = vmatprep.subr.mxu0 %v74
  %204 = vmatpush1.msra.mxu0 %v73
  %205 = vmatprep.subr.mxu0 %v163
  %206 = vmatpush1.msra.mxu0 %v160
  %207 = vmatprep.subr.mxu0 0.0
  %208 = vmatpush1.msra.mxu0 0.0
  %209 = vmatprep.subr.mxu0 0.0
  %210 = vmatpush1.msra.mxu0 0.0
  %211 = vmatprep.subr.mxu0 0.0
  %212 = vmatpush1.msra.mxu0 0.0
  %213 = vmatprep.subr.mxu0 0.0
  %214 = vmatpush1.msra.mxu0 0.0
  %215 = vmatprep.subr.mxu0 0.0
  %216 = vmatpush1.msra.mxu0 0.0
  %217 = vmatprep.subr.mxu0 0.0
  %218 = vmatpush1.msra.mxu0 0.0
  %219 = vmatprep.subr.mxu0 0.0
  %220 = vmatpush1.msra.mxu0 0.0
  %221 = vmatprep.subr.mxu0 0.0
  %222 = vmatpush1.msra.mxu0 0.0
  %223 = vmatprep.subr.mxu0 0.0
  %224 = vmatpush1.msra.mxu0 0.0
  %225 = vmatprep.subr.mxu0 0.0
  %226 = vmatpush1.msra.mxu0 0.0
  %227 = vmatprep.subr.mxu0 0.0
  %228 = vmatpush1.msra.mxu0 0.0
  %229 = vmatprep.mubr.f32.mxu0 %v111
  %230 = vmatmul.mubr.f32.gmra.mrb[0].mxu0 %v77
  %v231 = vpop.f32.mrb[0].mxu0
  %v232 = vadd.f32 0.0, %v231
  %v233 = vpop.f32.mrb[0].mxu0
  %v234 = vadd.f32 0.0, %v233
  %235 = vmatprep.mubr.f32.mxu0 %v114
  %236 = vmatmul.mubr.f32.gmra.mrb[0].mxu0 %v79
  %v237 = vpop.f32.mrb[0].mxu0
  %v238 = vadd.f32 0.0, %v237
  %v239 = vpop.f32.mrb[0].mxu0
  %v240 = vadd.f32 0.0, %v239
  %241 = vmatprep.mubr.f32.mxu0 %v117
  %242 = vmatmul.mubr.f32.gmra.mrb[0].mxu0 %v81
  %v243 = vpop.f32.mrb[0].mxu0
  %v244 = vadd.f32 0.0, %v243
  %v245 = vpop.f32.mrb[0].mxu0
  %v246 = vadd.f32 0.0, %v245
  %247 = vmatprep.mubr.f32.mxu0 %v120
  %248 = vmatmul.mubr.f32.gmra.mrb[0].mxu0 %v83
  %v249 = vpop.f32.mrb[0].mxu0
  %v250 = vadd.f32 0.0, %v249
  %v251 = vpop.f32.mrb[0].mxu0
  %v252 = vadd.f32 0.0, %v251
  %253 = vmatprep.mubr.f32.mxu0 %v123
  %254 = vmatmul.mubr.f32.gmra.mrb[0].mxu0 %v85
  %v255 = vpop.f32.mrb[0].mxu0
  %v256 = vadd.f32 0.0, %v255
  %v257 = vpop.f32.mrb[0].mxu0
  %v258 = vadd.f32 0.0, %v257
  %259 = vmatprep.mubr.f32.mxu0 %v126
  %260 = vmatmul.mubr.f32.gmra.mrb[0].mxu0 %v87
  %v261 = vpop.f32.mrb[0].mxu0
  %v262 = vadd.f32 0.0, %v261
  %v263 = vpop.f32.mrb[0].mxu0
  %v264 = vadd.f32 0.0, %v263
  %265 = vmatprep.mubr.f32.mxu0 %v129
  %266 = vmatmul.mubr.f32.gmra.mrb[0].mxu0 %v89
  %v267 = vpop.f32.mrb[0].mxu0
  %v268 = vadd.f32 0.0, %v267
  %v269 = vpop.f32.mrb[0].mxu0
  %v270 = vadd.f32 0.0, %v269
  %271 = vmatprep.mubr.f32.mxu0 %v132
  %272 = vmatmul.mubr.f32.gmra.mrb[0].mxu0 %v91
  %v273 = vpop.f32.mrb[0].mxu0
  %v274 = vadd.f32 0.0, %v273
  %v275 = vpop.f32.mrb[0].mxu0
  %v276 = vadd.f32 0.0, %v275
  %277 = vmatprep.mubr.f32.mxu0 %v135
  %278 = vmatmul.mubr.f32.gmra.mrb[0].mxu0 %v93
  %v279 = vpop.f32.mrb[0].mxu0
  %v280 = vadd.f32 0.0, %v279
  %v281 = vpop.f32.mrb[0].mxu0
  %v282 = vadd.f32 0.0, %v281
  %283 = vmatprep.mubr.f32.mxu0 %v138
  %284 = vmatmul.mubr.f32.gmra.mrb[0].mxu0 %v95
  %v285 = vpop.f32.mrb[0].mxu0
  %v286 = vadd.f32 0.0, %v285
  %v287 = vpop.f32.mrb[0].mxu0
  %v288 = vadd.f32 0.0, %v287
  %289 = vmatprep.mubr.f32.mxu0 %v141
  %290 = vmatmul.mubr.f32.gmra.mrb[0].mxu0 %v97
  %v291 = vpop.f32.mrb[0].mxu0
  %v292 = vadd.f32 0.0, %v291
  %v293 = vpop.f32.mrb[0].mxu0
  %v294 = vadd.f32 0.0, %v293
  %295 = vmatprep.mubr.f32.mxu0 %v144
  %296 = vmatmul.mubr.f32.gmra.mrb[0].mxu0 %v99
  %v297 = vpop.f32.mrb[0].mxu0
  %v298 = vadd.f32 0.0, %v297
  %v299 = vpop.f32.mrb[0].mxu0
  %v300 = vadd.f32 0.0, %v299
  %301 = vmatprep.mubr.f32.mxu0 %v147
  %302 = vmatmul.mubr.f32.gmra.mrb[0].mxu0 %v101
  %v303 = vpop.f32.mrb[0].mxu0
  %v304 = vadd.f32 0.0, %v303
  %v305 = vpop.f32.mrb[0].mxu0
  %v306 = vadd.f32 0.0, %v305
  %307 = vmatprep.mubr.f32.mxu0 %v150
  %308 = vmatmul.mubr.f32.gmra.mrb[0].mxu0 %v103
  %v309 = vpop.f32.mrb[0].mxu0
  %v310 = vadd.f32 0.0, %v309
  %v311 = vpop.f32.mrb[0].mxu0
  %v312 = vadd.f32 0.0, %v311
  %313 = vmatprep.mubr.f32.mxu0 %v153
  %314 = vmatmul.mubr.f32.gmra.mrb[0].mxu0 %v105
  %v315 = vpop.f32.mrb[0].mxu0
  %v316 = vadd.f32 0.0, %v315
  %v317 = vpop.f32.mrb[0].mxu0
  %v318 = vadd.f32 0.0, %v317
  %319 = vmatprep.mubr.f32.mxu0 %v156
  %320 = vmatmul.mubr.f32.gmra.mrb[0].mxu0 %v107
  %v321 = vpop.f32.mrb[0].mxu0
  %v322 = vadd.f32 0.0, %v321
  %v323 = vpop.f32.mrb[0].mxu0
  %v324 = vadd.f32 0.0, %v323
  %325 = vdwg.mxu0
  %v326 = vmax.f32 %v232, %v234
  %v327 = vmax.f32 %v238, %v240
  %v328 = vmax.f32 %v244, %v246
  %v329 = vmax.f32 %v250, %v252
  %v330 = vmax.f32 %v256, %v258
  %v331 = vmax.f32 %v262, %v264
  %v332 = vmax.f32 %v268, %v270
  %v333 = vmax.f32 %v274, %v276
  %v334 = vmax.f32 %v280, %v282
  %v335 = vmax.f32 %v286, %v288
  %v336 = vmax.f32 %v292, %v294
  %v337 = vmax.f32 %v298, %v300
  %v338 = vmax.f32 %v304, %v306
  %v339 = vmax.f32 %v310, %v312
  %v340 = vmax.f32 %v316, %v318
  %v341 = vmax.f32 %v322, %v324
  %v342 = vld [vmem:[%s1] sm:$0xff]
  %v343 = vld [vmem:[%s1 + $0x8] sm:$0xff]
  %v344 = vld [vmem:[%s1 + $0x10] sm:$0xff]
  %v345 = vld [vmem:[%s1 + $0x18] sm:$0xff]
  %v346 = vld [vmem:[%s1 + $0x20] sm:$0xff]
  %v347 = vld [vmem:[%s1 + $0x28] sm:$0xff]
  %v348 = vld [vmem:[%s1 + $0x30] sm:$0xff]
  %v349 = vld [vmem:[%s1 + $0x38] sm:$0xff]
  %v350 = vld [vmem:[%s1 + $0x40] sm:$0xff]
  %v351 = vld [vmem:[%s1 + $0x48] sm:$0xff]
  %v352 = vld [vmem:[%s1 + $0x50] sm:$0xff]
  %v353 = vld [vmem:[%s1 + $0x58] sm:$0xff]
  %v354 = vld [vmem:[%s1 + $0x60] sm:$0xff]
  %v355 = vld [vmem:[%s1 + $0x68] sm:$0xff]
  %v356 = vld [vmem:[%s1 + $0x70] sm:$0xff]
  %v357 = vld [vmem:[%s1 + $0x78] sm:$0xff]
  %v358 = vld [vmem:[%s1 + $0x80] sm:$0xff]
  %v359 = vld [vmem:[%s1 + $0x88] sm:$0xff]
  %v360 = vld [vmem:[%s1 + $0x90] sm:$0xff]
  %v361 = vld [vmem:[%s1 + $0x98] sm:$0xff]
  %v362 = vld [vmem:[%s1 + $0xa0] sm:$0xff]
  %v363 = vld [vmem:[%s1 + $0xa8] sm:$0xff]
  %v364 = vld [vmem:[%s1 + $0xb0] sm:$0xff]
  %v365 = vld [vmem:[%s1 + $0xb8] sm:$0xff]
  %v366 = vld [vmem:[%s1 + $0xc0] sm:$0xff]
  %v367 = vld [vmem:[%s1 + $0xc8] sm:$0xff]
  %v368 = vld [vmem:[%s1 + $0xd0] sm:$0xff]
  %v369 = vld [vmem:[%s1 + $0xd8] sm:$0xff]
  %v370 = vld [vmem:[%s1 + $0xe0] sm:$0xff]
  %v371 = vld [vmem:[%s1 + $0xe8] sm:$0xff]
  %v372 = vld [vmem:[%s1 + $0xf0] sm:$0xff]
  %v373 = vld [vmem:[%s1 + $0xf8] sm:$0xff]
  %v375 = vsel %vm109, %v343, 0
  %v378 = vsel %vm109, %v345, 0
  %v381 = vsel %vm109, %v347, 0
  %v384 = vsel %vm109, %v349, 0
  %v387 = vsel %vm109, %v351, 0
  %v390 = vsel %vm109, %v353, 0
  %v393 = vsel %vm109, %v355, 0
  %v396 = vsel %vm109, %v357, 0
  %v399 = vsel %vm109, %v359, 0
  %v402 = vsel %vm109, %v361, 0
  %v405 = vsel %vm109, %v363, 0
  %v408 = vsel %vm109, %v365, 0
  %v411 = vsel %vm109, %v367, 0
  %v414 = vsel %vm109, %v369, 0
  %v417 = vsel %vm109, %v371, 0
  %v420 = vsel %vm109, %v373, 0
  %422 = vmatprep.subr.mxu0 %v36
  %423 = vmatpush1.msra.mxu0 %v35
  %424 = vmatprep.subr.mxu0 %v38
  %425 = vmatpush1.msra.mxu0 %v37
  %426 = vmatprep.subr.mxu0 %v40
  %427 = vmatpush1.msra.mxu0 %v39
  %428 = vmatprep.subr.mxu0 %v42
  %429 = vmatpush1.msra.mxu0 %v41
  %430 = vmatprep.subr.mxu0 %v44
  %431 = vmatpush1.msra.mxu0 %v43
  %432 = vmatprep.subr.mxu0 %v46
  %433 = vmatpush1.msra.mxu0 %v45
  %434 = vmatprep.subr.mxu0 %v48
  %435 = vmatpush1.msra.mxu0 %v47
  %436 = vmatprep.subr.mxu0 %v50
  %437 = vmatpush1.msra.mxu0 %v49
  %438 = vmatprep.subr.mxu0 %v52
  %439 = vmatpush1.msra.mxu0 %v51
  %440 = vmatprep.subr.mxu0 %v54
  %441 = vmatpush1.msra.mxu0 %v53
  %442 = vmatprep.subr.mxu0 %v56
  %443 = vmatpush1.msra.mxu0 %v55
  %444 = vmatprep.subr.mxu0 %v58
  %445 = vmatpush1.msra.mxu0 %v57
  %446 = vmatprep.subr.mxu0 %v60
  %447 = vmatpush1.msra.mxu0 %v59
  %448 = vmatprep.subr.mxu0 %v62
  %449 = vmatpush1.msra.mxu0 %v61
  %450 = vmatprep.subr.mxu0 %v64
  %451 = vmatpush1.msra.mxu0 %v63
  %452 = vmatprep.subr.mxu0 %v66
  %453 = vmatpush1.msra.mxu0 %v65
  %454 = vmatprep.subr.mxu0 %v68
  %455 = vmatpush1.msra.mxu0 %v67
  %456 = vmatprep.subr.mxu0 %v70
  %457 = vmatpush1.msra.mxu0 %v69
  %458 = vmatprep.subr.mxu0 %v72
  %459 = vmatpush1.msra.mxu0 %v71
  %460 = vmatprep.subr.mxu0 %v74
  %461 = vmatpush1.msra.mxu0 %v73
  %462 = vmatprep.subr.mxu0 %v163
  %463 = vmatpush1.msra.mxu0 %v160
  %464 = vmatprep.subr.mxu0 0.0
  %465 = vmatpush1.msra.mxu0 0.0
  %466 = vmatprep.subr.mxu0 0.0
  %467 = vmatpush1.msra.mxu0 0.0
  %468 = vmatprep.subr.mxu0 0.0
  %469 = vmatpush1.msra.mxu0 0.0
  %470 = vmatprep.subr.mxu0 0.0
  %471 = vmatpush1.msra.mxu0 0.0
  %472 = vmatprep.subr.mxu0 0.0
  %473 = vmatpush1.msra.mxu0 0.0
  %474 = vmatprep.subr.mxu0 0.0
  %475 = vmatpush1.msra.mxu0 0.0
  %476 = vmatprep.subr.mxu0 0.0
  %477 = vmatpush1.msra.mxu0 0.0
  %478 = vmatprep.subr.mxu0 0.0
  %479 = vmatpush1.msra.mxu0 0.0
  %480 = vmatprep.subr.mxu0 0.0
  %481 = vmatpush1.msra.mxu0 0.0
  %482 = vmatprep.subr.mxu0 0.0
  %483 = vmatpush1.msra.mxu0 0.0
  %484 = vmatprep.subr.mxu0 0.0
  %485 = vmatpush1.msra.mxu0 0.0
  %486 = vmatprep.mubr.f32.mxu0 %v375
  %487 = vmatmul.mubr.f32.gmra.mrb[0].mxu0 %v342
  %v488 = vpop.f32.mrb[0].mxu0
  %v489 = vadd.f32 0.0, %v488
  %v490 = vpop.f32.mrb[0].mxu0
  %v491 = vadd.f32 0.0, %v490
  %492 = vmatprep.mubr.f32.mxu0 %v378
  %493 = vmatmul.mubr.f32.gmra.mrb[0].mxu0 %v344
  %v494 = vpop.f32.mrb[0].mxu0
  %v495 = vadd.f32 0.0, %v494
  %v496 = vpop.f32.mrb[0].mxu0
  %v497 = vadd.f32 0.0, %v496
  %498 = vmatprep.mubr.f32.mxu0 %v381
  %499 = vmatmul.mubr.f32.gmra.mrb[0].mxu0 %v346
  %v500 = vpop.f32.mrb[0].mxu0
  %v501 = vadd.f32 0.0, %v500
  %v502 = vpop.f32.mrb[0].mxu0
  %v503 = vadd.f32 0.0, %v502
  %504 = vmatprep.mubr.f32.mxu0 %v384
  %505 = vmatmul.mubr.f32.gmra.mrb[0].mxu0 %v348
  %v506 = vpop.f32.mrb[0].mxu0
  %v507 = vadd.f32 0.0, %v506
  %v508 = vpop.f32.mrb[0].mxu0
  %v509 = vadd.f32 0.0, %v508
  %510 = vmatprep.mubr.f32.mxu0 %v387
  %511 = vmatmul.mubr.f32.gmra.mrb[0].mxu0 %v350
  %v512 = vpop.f32.mrb[0].mxu0
  %v513 = vadd.f32 0.0, %v512
  %v514 = vpop.f32.mrb[0].mxu0
  %v515 = vadd.f32 0.0, %v514
  %516 = vmatprep.mubr.f32.mxu0 %v390
  %517 = vmatmul.mubr.f32.gmra.mrb[0].mxu0 %v352
  %v518 = vpop.f32.mrb[0].mxu0
  %v519 = vadd.f32 0.0, %v518
  %v520 = vpop.f32.mrb[0].mxu0
  %v521 = vadd.f32 0.0, %v520
  %522 = vmatprep.mubr.f32.mxu0 %v393
  %523 = vmatmul.mubr.f32.gmra.mrb[0].mxu0 %v354
  %v524 = vpop.f32.mrb[0].mxu0
  %v525 = vadd.f32 0.0, %v524
  %v526 = vpop.f32.mrb[0].mxu0
  %v527 = vadd.f32 0.0, %v526
  %528 = vmatprep.mubr.f32.mxu0 %v396
  %529 = vmatmul.mubr.f32.gmra.mrb[0].mxu0 %v356
  %v530 = vpop.f32.mrb[0].mxu0
  %v531 = vadd.f32 0.0, %v530
  %v532 = vpop.f32.mrb[0].mxu0
  %v533 = vadd.f32 0.0, %v532
  %534 = vmatprep.mubr.f32.mxu0 %v399
  %535 = vmatmul.mubr.f32.gmra.mrb[0].mxu0 %v358
  %v536 = vpop.f32.mrb[0].mxu0
  %v537 = vadd.f32 0.0, %v536
  %v538 = vpop.f32.mrb[0].mxu0
  %v539 = vadd.f32 0.0, %v538
  %540 = vmatprep.mubr.f32.mxu0 %v402
  %541 = vmatmul.mubr.f32.gmra.mrb[0].mxu0 %v360
  %v542 = vpop.f32.mrb[0].mxu0
  %v543 = vadd.f32 0.0, %v542
  %v544 = vpop.f32.mrb[0].mxu0
  %v545 = vadd.f32 0.0, %v544
  %546 = vmatprep.mubr.f32.mxu0 %v405
  %547 = vmatmul.mubr.f32.gmra.mrb[0].mxu0 %v362
  %v548 = vpop.f32.mrb[0].mxu0
  %v549 = vadd.f32 0.0, %v548
  %v550 = vpop.f32.mrb[0].mxu0
  %v551 = vadd.f32 0.0, %v550
  %552 = vmatprep.mubr.f32.mxu0 %v408
  %553 = vmatmul.mubr.f32.gmra.mrb[0].mxu0 %v364
  %v554 = vpop.f32.mrb[0].mxu0
  %v555 = vadd.f32 0.0, %v554
  %v556 = vpop.f32.mrb[0].mxu0
  %v557 = vadd.f32 0.0, %v556
  %558 = vmatprep.mubr.f32.mxu0 %v411
  %559 = vmatmul.mubr.f32.gmra.mrb[0].mxu0 %v366
  %v560 = vpop.f32.mrb[0].mxu0
  %v561 = vadd.f32 0.0, %v560
  %v562 = vpop.f32.mrb[0].mxu0
  %v563 = vadd.f32 0.0, %v562
  %564 = vmatprep.mubr.f32.mxu0 %v414
  %565 = vmatmul.mubr.f32.gmra.mrb[0].mxu0 %v368
  %v566 = vpop.f32.mrb[0].mxu0
  %v567 = vadd.f32 0.0, %v566
  %v568 = vpop.f32.mrb[0].mxu0
  %v569 = vadd.f32 0.0, %v568
  %570 = vmatprep.mubr.f32.mxu0 %v417
  %571 = vmatmul.mubr.f32.gmra.mrb[0].mxu0 %v370
  %v572 = vpop.f32.mrb[0].mxu0
  %v573 = vadd.f32 0.0, %v572
  %v574 = vpop.f32.mrb[0].mxu0
  %v575 = vadd.f32 0.0, %v574
  %576 = vmatprep.mubr.f32.mxu0 %v420
  %577 = vmatmul.mubr.f32.gmra.mrb[0].mxu0 %v372
  %v578 = vpop.f32.mrb[0].mxu0
  %v579 = vadd.f32 0.0, %v578
  %v580 = vpop.f32.mrb[0].mxu0
  %v581 = vadd.f32 0.0, %v580
  %582 = vdwg.mxu0
  %v583 = vmax.f32 %v489, %v491
  %v584 = vmax.f32 %v495, %v497
  %v585 = vmax.f32 %v501, %v503
  %v586 = vmax.f32 %v507, %v509
  %v587 = vmax.f32 %v513, %v515
  %v588 = vmax.f32 %v519, %v521
  %v589 = vmax.f32 %v525, %v527
  %v590 = vmax.f32 %v531, %v533
  %v591 = vmax.f32 %v537, %v539
  %v592 = vmax.f32 %v543, %v545
  %v593 = vmax.f32 %v549, %v551
  %v594 = vmax.f32 %v555, %v557
  %v595 = vmax.f32 %v561, %v563
  %v596 = vmax.f32 %v567, %v569
  %v597 = vmax.f32 %v573, %v575
  %v598 = vmax.f32 %v579, %v581
  %v599 = vmax.f32 %v326, %v583
  %v600 = vmax.f32 %v327, %v584
  %v601 = vmax.f32 %v328, %v585
  %v602 = vmax.f32 %v329, %v586
  %v603 = vmax.f32 %v330, %v587
  %v604 = vmax.f32 %v331, %v588
  %v605 = vmax.f32 %v332, %v589
  %v606 = vmax.f32 %v333, %v590
  %v607 = vmax.f32 %v334, %v591
  %v608 = vmax.f32 %v335, %v592
  %v609 = vmax.f32 %v336, %v593
  %v610 = vmax.f32 %v337, %v594
  %v611 = vmax.f32 %v338, %v595
  %v612 = vmax.f32 %v339, %v596
  %v613 = vmax.f32 %v340, %v597
  %v614 = vmax.f32 %v341, %v598
  %v615 = vmax.f32 %v599, 0.0
  %v616 = vmax.f32 %v600, 0.0
  %v617 = vmax.f32 %v601, 0.0
  %v618 = vmax.f32 %v602, 0.0
  %v619 = vmax.f32 %v603, 0.0
  %v620 = vmax.f32 %v604, 0.0
  %v621 = vmax.f32 %v605, 0.0
  %v622 = vmax.f32 %v606, 0.0
  %v623 = vmax.f32 %v607, 0.0
  %v624 = vmax.f32 %v608, 0.0
  %v625 = vmax.f32 %v609, 0.0
  %v626 = vmax.f32 %v610, 0.0
  %v627 = vmax.f32 %v611, 0.0
  %v628 = vmax.f32 %v612, 0.0
  %v629 = vmax.f32 %v613, 0.0
  %v630 = vmax.f32 %v614, 0.0
  %631 = vst [vmem:[#allocation2] sm:$0xff] %v615
  %632 = vst [vmem:[#allocation2 + $0x8] sm:$0xff] %v616
  %633 = vst [vmem:[#allocation2 + $0x10] sm:$0xff] %v617
  %634 = vst [vmem:[#allocation2 + $0x18] sm:$0xff] %v618
  %635 = vst [vmem:[#allocation2 + $0x20] sm:$0xff] %v619
  %636 = vst [vmem:[#allocation2 + $0x28] sm:$0xff] %v620
  %637 = vst [vmem:[#allocation2 + $0x30] sm:$0xff] %v621
  %638 = vst [vmem:[#allocation2 + $0x38] sm:$0xff] %v622
  %639 = vst [vmem:[#allocation2 + $0x80] sm:$0xff] %v623
  %640 = vst [vmem:[#allocation2 + $0x88] sm:$0xff] %v624
  %641 = vst [vmem:[#allocation2 + $0x90] sm:$0xff] %v625
  %642 = vst [vmem:[#allocation2 + $0x98] sm:$0xff] %v626
  %643 = vst [vmem:[#allocation2 + $0xa0] sm:$0xff] %v627
  %644 = vst [vmem:[#allocation2 + $0xa8] sm:$0xff] %v628
  %645 = vst [vmem:[#allocation2 + $0xb0] sm:$0xff] %v629
  %646 = vst [vmem:[#allocation2 + $0xb8] sm:$0xff] %v630
  %s647 = scalar_lea.vmem [#allocation2], 64
  %648 = vst [vmem:[%s647] sm:$0xff] 0.0
  %649 = vst [vmem:[%s647 + $0x8] sm:$0xff] 0.0
  %650 = vst [vmem:[%s647 + $0x80] sm:$0xff] 0.0
  %651 = vst [vmem:[%s647 + $0x88] sm:$0xff] 0.0
  %v652 = vld [vmem:[#allocation2] sm:$0xff]
  %v653 = vld [vmem:[#allocation2 + $0x8] sm:$0xff]
  %v654 = vld [vmem:[#allocation2 + $0x10] sm:$0xff]
  %v655 = vld [vmem:[#allocation2 + $0x18] sm:$0xff]
  %v656 = vld [vmem:[#allocation2 + $0x20] sm:$0xff]
  %v657 = vld [vmem:[#allocation2 + $0x28] sm:$0xff]
  %v658 = vld [vmem:[#allocation2 + $0x30] sm:$0xff]
  %v659 = vld [vmem:[#allocation2 + $0x38] sm:$0xff]
  %v660 = vld [vmem:[%s3] sm:$0xff]
  %v661 = vld [vmem:[%s3 + $0x8] sm:$0xff]
  %v662 = vld [vmem:[%s3 + $0x10] sm:$0xff]
  %v663 = vld [vmem:[%s3 + $0x18] sm:$0xff]
  %v664 = vld [vmem:[%s3 + $0x20] sm:$0xff]
  %v665 = vld [vmem:[%s3 + $0x28] sm:$0xff]
  %v666 = vld [vmem:[%s3 + $0x30] sm:$0xff]
  %v667 = vld [vmem:[%s3 + $0x38] sm:$0xff]
  %v668 = vld [vmem:[%s3 + $0x40] sm:$0xff]
  %v669 = vld [vmem:[%s3 + $0x48] sm:$0xff]
  %v670 = vld [vmem:[%s3 + $0x50] sm:$0xff]
  %v671 = vld [vmem:[%s3 + $0x58] sm:$0xff]
  %v672 = vld [vmem:[%s3 + $0x60] sm:$0xff]
  %v673 = vld [vmem:[%s3 + $0x68] sm:$0xff]
  %v674 = vld [vmem:[%s3 + $0x70] sm:$0xff]
  %v675 = vld [vmem:[%s3 + $0x78] sm:$0xff]
  %v676 = vld [vmem:[%s3 + $0x80] sm:$0xff]
  %v677 = vld [vmem:[%s3 + $0x88] sm:$0xff]
  %v678 = vld [vmem:[%s3 + $0x90] sm:$0xff]
  %v679 = vld [vmem:[%s3 + $0x98] sm:$0xff]
  %v680 = vld [vmem:[%s3 + $0xa0] sm:$0xff]
  %v681 = vld [vmem:[%s3 + $0xa8] sm:$0xff]
  %v682 = vld [vmem:[%s3 + $0xb0] sm:$0xff]
  %v683 = vld [vmem:[%s3 + $0xb8] sm:$0xff]
  %v684 = vld [vmem:[%s3 + $0xc0] sm:$0xff]
  %v685 = vld [vmem:[%s3 + $0xc8] sm:$0xff]
  %v686 = vld [vmem:[%s3 + $0xd0] sm:$0xff]
  %v687 = vld [vmem:[%s3 + $0xd8] sm:$0xff]
  %v688 = vld [vmem:[%s3 + $0xe0] sm:$0xff]
  %v689 = vld [vmem:[%s3 + $0xe8] sm:$0xff]
  %v690 = vld [vmem:[%s3 + $0xf0] sm:$0xff]
  %v691 = vld [vmem:[%s3 + $0xf8] sm:$0xff]
  %s692 = scalar_lea.vmem [#allocation2], 128
  %v693 = vld [vmem:[%s692] sm:$0xff]
  %v694 = vld [vmem:[%s692 + $0x8] sm:$0xff]
  %v695 = vld [vmem:[%s692 + $0x10] sm:$0xff]
  %v696 = vld [vmem:[%s692 + $0x18] sm:$0xff]
  %v697 = vld [vmem:[%s692 + $0x20] sm:$0xff]
  %v698 = vld [vmem:[%s692 + $0x28] sm:$0xff]
  %v699 = vld [vmem:[%s692 + $0x30] sm:$0xff]
  %v700 = vld [vmem:[%s692 + $0x38] sm:$0xff]
  %s701 = scalar_lea.vmem %s3, 256
  %v702 = vld [vmem:[%s701] sm:$0xff]
  %v703 = vld [vmem:[%s701 + $0x8] sm:$0xff]
  %v704 = vld [vmem:[%s701 + $0x10] sm:$0xff]
  %v705 = vld [vmem:[%s701 + $0x18] sm:$0xff]
  %v706 = vld [vmem:[%s701 + $0x20] sm:$0xff]
  %v707 = vld [vmem:[%s701 + $0x28] sm:$0xff]
  %v708 = vld [vmem:[%s701 + $0x30] sm:$0xff]
  %v709 = vld [vmem:[%s701 + $0x38] sm:$0xff]
  %v710 = vld [vmem:[%s701 + $0x40] sm:$0xff]
  %v711 = vld [vmem:[%s701 + $0x48] sm:$0xff]
  %v712 = vld [vmem:[%s701 + $0x50] sm:$0xff]
  %v713 = vld [vmem:[%s701 + $0x58] sm:$0xff]
  %v714 = vld [vmem:[%s701 + $0x60] sm:$0xff]
  %v715 = vld [vmem:[%s701 + $0x68] sm:$0xff]
  %v716 = vld [vmem:[%s701 + $0x70] sm:$0xff]
  %v717 = vld [vmem:[%s701 + $0x78] sm:$0xff]
  %v718 = vld [vmem:[%s701 + $0x80] sm:$0xff]
  %v719 = vld [vmem:[%s701 + $0x88] sm:$0xff]
  %v720 = vld [vmem:[%s701 + $0x90] sm:$0xff]
  %v721 = vld [vmem:[%s701 + $0x98] sm:$0xff]
  %v722 = vld [vmem:[%s701 + $0xa0] sm:$0xff]
  %v723 = vld [vmem:[%s701 + $0xa8] sm:$0xff]
  %v724 = vld [vmem:[%s701 + $0xb0] sm:$0xff]
  %v725 = vld [vmem:[%s701 + $0xb8] sm:$0xff]
  %v726 = vld [vmem:[%s701 + $0xc0] sm:$0xff]
  %v727 = vld [vmem:[%s701 + $0xc8] sm:$0xff]
  %v728 = vld [vmem:[%s701 + $0xd0] sm:$0xff]
  %v729 = vld [vmem:[%s701 + $0xd8] sm:$0xff]
  %v730 = vld [vmem:[%s701 + $0xe0] sm:$0xff]
  %v731 = vld [vmem:[%s701 + $0xe8] sm:$0xff]
  %v732 = vld [vmem:[%s701 + $0xf0] sm:$0xff]
  %v733 = vld [vmem:[%s701 + $0xf8] sm:$0xff]
  %734 = vmatprep.subr.mxu0 %v703
  %735 = vmatpush1.msra.mxu0 %v702
  %736 = vmatprep.subr.mxu0 %v705
  %737 = vmatpush1.msra.mxu0 %v704
  %738 = vmatprep.subr.mxu0 %v707
  %739 = vmatpush1.msra.mxu0 %v706
  %740 = vmatprep.subr.mxu0 %v709
  %741 = vmatpush1.msra.mxu0 %v708
  %742 = vmatprep.subr.mxu0 %v711
  %743 = vmatpush1.msra.mxu0 %v710
  %744 = vmatprep.subr.mxu0 %v713
  %745 = vmatpush1.msra.mxu0 %v712
  %746 = vmatprep.subr.mxu0 %v715
  %747 = vmatpush1.msra.mxu0 %v714
  %748 = vmatprep.subr.mxu0 %v717
  %749 = vmatpush1.msra.mxu0 %v716
  %750 = vmatprep.subr.mxu0 %v719
  %751 = vmatpush1.msra.mxu0 %v718
  %752 = vmatprep.subr.mxu0 %v721
  %753 = vmatpush1.msra.mxu0 %v720
  %754 = vmatprep.subr.mxu0 %v723
  %755 = vmatpush1.msra.mxu0 %v722
  %756 = vmatprep.subr.mxu0 %v725
  %757 = vmatpush1.msra.mxu0 %v724
  %758 = vmatprep.subr.mxu0 %v727
  %759 = vmatpush1.msra.mxu0 %v726
  %760 = vmatprep.subr.mxu0 %v729
  %761 = vmatpush1.msra.mxu0 %v728
  %762 = vmatprep.subr.mxu0 %v731
  %763 = vmatpush1.msra.mxu0 %v730
  %764 = vmatprep.subr.mxu0 %v733
  %765 = vmatpush1.msra.mxu0 %v732
  %766 = vmatprep.subr.mxu0 0.0
  %767 = vmatpush1.msra.mxu0 0.0
  %768 = vmatprep.subr.mxu0 0.0
  %769 = vmatpush1.msra.mxu0 0.0
  %770 = vmatprep.subr.mxu0 0.0
  %771 = vmatpush1.msra.mxu0 0.0
  %772 = vmatprep.subr.mxu0 0.0
  %773 = vmatpush1.msra.mxu0 0.0
  %774 = vmatprep.subr.mxu0 0.0
  %775 = vmatpush1.msra.mxu0 0.0
  %776 = vmatprep.subr.mxu0 0.0
  %777 = vmatpush1.msra.mxu0 0.0
  %778 = vmatprep.subr.mxu0 0.0
  %779 = vmatpush1.msra.mxu0 0.0
  %780 = vmatprep.subr.mxu0 0.0
  %781 = vmatpush1.msra.mxu0 0.0
  %782 = vmatprep.subr.mxu0 0.0
  %783 = vmatpush1.msra.mxu0 0.0
  %784 = vmatprep.subr.mxu0 0.0
  %785 = vmatpush1.msra.mxu0 0.0
  %786 = vmatprep.subr.mxu0 0.0
  %787 = vmatpush1.msra.mxu0 0.0
  %788 = vmatprep.subr.mxu0 0.0
  %789 = vmatpush1.msra.mxu0 0.0
  %790 = vmatprep.subr.mxu0 0.0
  %791 = vmatpush1.msra.mxu0 0.0
  %792 = vmatprep.subr.mxu0 0.0
  %793 = vmatpush1.msra.mxu0 0.0
  %794 = vmatprep.subr.mxu0 0.0
  %795 = vmatpush1.msra.mxu0 0.0
  %796 = vmatprep.subr.mxu0 0.0
  %797 = vmatpush1.msra.mxu0 0.0
  %798 = vmatprep.mubr.f32.mxu0 0.0
  %799 = vmatmul.mubr.f32.gmra.mrb[0].mxu0 %v693
  %v800 = vpop.f32.mrb[0].mxu0
  %v801 = vadd.f32 0.0, %v800
  %v802 = vpop.f32.mrb[0].mxu0
  %v803 = vadd.f32 0.0, %v802
  %804 = vmatprep.mubr.f32.mxu0 0.0
  %805 = vmatmul.mubr.f32.gmra.mrb[0].mxu0 %v694
  %v806 = vpop.f32.mrb[0].mxu0
  %v807 = vadd.f32 0.0, %v806
  %v808 = vpop.f32.mrb[0].mxu0
  %v809 = vadd.f32 0.0, %v808
  %810 = vmatprep.mubr.f32.mxu0 0.0
  %811 = vmatmul.mubr.f32.gmra.mrb[0].mxu0 %v695
  %v812 = vpop.f32.mrb[0].mxu0
  %v813 = vadd.f32 0.0, %v812
  %v814 = vpop.f32.mrb[0].mxu0
  %v815 = vadd.f32 0.0, %v814
  %816 = vmatprep.mubr.f32.mxu0 0.0
  %817 = vmatmul.mubr.f32.gmra.mrb[0].mxu0 %v696
  %v818 = vpop.f32.mrb[0].mxu0
  %v819 = vadd.f32 0.0, %v818
  %v820 = vpop.f32.mrb[0].mxu0
  %v821 = vadd.f32 0.0, %v820
  %822 = vmatprep.mubr.f32.mxu0 0.0
  %823 = vmatmul.mubr.f32.gmra.mrb[0].mxu0 %v697
  %v824 = vpop.f32.mrb[0].mxu0
  %v825 = vadd.f32 0.0, %v824
  %v826 = vpop.f32.mrb[0].mxu0
  %v827 = vadd.f32 0.0, %v826
  %828 = vmatprep.mubr.f32.mxu0 0.0
  %829 = vmatmul.mubr.f32.gmra.mrb[0].mxu0 %v698
  %v830 = vpop.f32.mrb[0].mxu0
  %v831 = vadd.f32 0.0, %v830
  %v832 = vpop.f32.mrb[0].mxu0
  %v833 = vadd.f32 0.0, %v832
  %834 = vmatprep.mubr.f32.mxu0 0.0
  %835 = vmatmul.mubr.f32.gmra.mrb[0].mxu0 %v699
  %v836 = vpop.f32.mrb[0].mxu0
  %v837 = vadd.f32 0.0, %v836
  %v838 = vpop.f32.mrb[0].mxu0
  %v839 = vadd.f32 0.0, %v838
  %840 = vmatprep.mubr.f32.mxu0 0.0
  %841 = vmatmul.mubr.f32.gmra.mrb[0].mxu0 %v700
  %v842 = vpop.f32.mrb[0].mxu0
  %v843 = vpop.f32.mrb[0].mxu0
  %844 = vdwg.mxu0
  %845 = vmatprep.subr.mxu0 %v661
  %846 = vmatpush1.msra.mxu0 %v660
  %847 = vmatprep.subr.mxu0 %v663
  %848 = vmatpush1.msra.mxu0 %v662
  %849 = vmatprep.subr.mxu0 %v665
  %850 = vmatpush1.msra.mxu0 %v664
  %851 = vmatprep.subr.mxu0 %v667
  %852 = vmatpush1.msra.mxu0 %v666
  %853 = vmatprep.subr.mxu0 %v669
  %854 = vmatpush1.msra.mxu0 %v668
  %855 = vmatprep.subr.mxu0 %v671
  %856 = vmatpush1.msra.mxu0 %v670
  %857 = vmatprep.subr.mxu0 %v673
  %858 = vmatpush1.msra.mxu0 %v672
  %859 = vmatprep.subr.mxu0 %v675
  %860 = vmatpush1.msra.mxu0 %v674
  %861 = vmatprep.subr.mxu0 %v677
  %862 = vmatpush1.msra.mxu0 %v676
  %863 = vmatprep.subr.mxu0 %v679
  %864 = vmatpush1.msra.mxu0 %v678
  %865 = vmatprep.subr.mxu0 %v681
  %866 = vmatpush1.msra.mxu0 %v680
  %867 = vmatprep.subr.mxu0 %v683
  %868 = vmatpush1.msra.mxu0 %v682
  %869 = vmatprep.subr.mxu0 %v685
  %870 = vmatpush1.msra.mxu0 %v684
  %871 = vmatprep.subr.mxu0 %v687
  %872 = vmatpush1.msra.mxu0 %v686
  %873 = vmatprep.subr.mxu0 %v689
  %874 = vmatpush1.msra.mxu0 %v688
  %875 = vmatprep.subr.mxu0 %v691
  %876 = vmatpush1.msra.mxu0 %v690
  %877 = vmatprep.subr.mxu0 0.0
  %878 = vmatpush1.msra.mxu0 0.0
  %879 = vmatprep.subr.mxu0 0.0
  %880 = vmatpush1.msra.mxu0 0.0
  %881 = vmatprep.subr.mxu0 0.0
  %882 = vmatpush1.msra.mxu0 0.0
  %883 = vmatprep.subr.mxu0 0.0
  %884 = vmatpush1.msra.mxu0 0.0
  %885 = vmatprep.subr.mxu0 0.0
  %886 = vmatpush1.msra.mxu0 0.0
  %887 = vmatprep.subr.mxu0 0.0
  %888 = vmatpush1.msra.mxu0 0.0
  %889 = vmatprep.subr.mxu0 0.0
  %890 = vmatpush1.msra.mxu0 0.0
  %891 = vmatprep.subr.mxu0 0.0
  %892 = vmatpush1.msra.mxu0 0.0
  %893 = vmatprep.subr.mxu0 0.0
  %894 = vmatpush1.msra.mxu0 0.0
  %895 = vmatprep.subr.mxu0 0.0
  %896 = vmatpush1.msra.mxu0 0.0
  %897 = vmatprep.subr.mxu0 0.0
  %898 = vmatpush1.msra.mxu0 0.0
  %899 = vmatprep.subr.mxu0 0.0
  %900 = vmatpush1.msra.mxu0 0.0
  %901 = vmatprep.subr.mxu0 0.0
  %902 = vmatpush1.msra.mxu0 0.0
  %903 = vmatprep.subr.mxu0 0.0
  %904 = vmatpush1.msra.mxu0 0.0
  %905 = vmatprep.subr.mxu0 0.0
  %906 = vmatpush1.msra.mxu0 0.0
  %907 = vmatprep.subr.mxu0 0.0
  %908 = vmatpush1.msra.mxu0 0.0
  %909 = vmatprep.mubr.f32.mxu0 0.0
  %910 = vmatmul.mubr.f32.gmra.mrb[0].mxu0 %v652
  %v911 = vpop.f32.mrb[0].mxu0
  %v912 = vadd.f32 %v801, %v911
  %v913 = vpop.f32.mrb[0].mxu0
  %v914 = vadd.f32 %v803, %v913
  %915 = vmatprep.mubr.f32.mxu0 0.0
  %916 = vmatmul.mubr.f32.gmra.mrb[0].mxu0 %v653
  %v917 = vpop.f32.mrb[0].mxu0
  %v918 = vadd.f32 %v807, %v917
  %v919 = vpop.f32.mrb[0].mxu0
  %v920 = vadd.f32 %v809, %v919
  %921 = vmatprep.mubr.f32.mxu0 0.0
  %922 = vmatmul.mubr.f32.gmra.mrb[0].mxu0 %v654
  %v923 = vpop.f32.mrb[0].mxu0
  %v924 = vadd.f32 %v813, %v923
  %v925 = vpop.f32.mrb[0].mxu0
  %v926 = vadd.f32 %v815, %v925
  %927 = vmatprep.mubr.f32.mxu0 0.0
  %928 = vmatmul.mubr.f32.gmra.mrb[0].mxu0 %v655
  %v929 = vpop.f32.mrb[0].mxu0
  %v930 = vadd.f32 %v819, %v929
  %v931 = vpop.f32.mrb[0].mxu0
  %v932 = vadd.f32 %v821, %v931
  %933 = vmatprep.mubr.f32.mxu0 0.0
  %934 = vmatmul.mubr.f32.gmra.mrb[0].mxu0 %v656
  %v935 = vpop.f32.mrb[0].mxu0
  %v936 = vadd.f32 %v825, %v935
  %v937 = vpop.f32.mrb[0].mxu0
  %v938 = vadd.f32 %v827, %v937
  %939 = vmatprep.mubr.f32.mxu0 0.0
  %940 = vmatmul.mubr.f32.gmra.mrb[0].mxu0 %v657
  %v941 = vpop.f32.mrb[0].mxu0
  %v942 = vadd.f32 %v831, %v941
  %v943 = vpop.f32.mrb[0].mxu0
  %v944 = vadd.f32 %v833, %v943
  %945 = vmatprep.mubr.f32.mxu0 0.0
  %946 = vmatmul.mubr.f32.gmra.mrb[0].mxu0 %v658
  %v947 = vpop.f32.mrb[0].mxu0
  %v948 = vadd.f32 %v837, %v947
  %v949 = vpop.f32.mrb[0].mxu0
  %v950 = vadd.f32 %v839, %v949
  %951 = vmatprep.mubr.f32.mxu0 0.0
  %952 = vmatmul.mubr.f32.gmra.mrb[0].mxu0 %v659
  %v953 = vpop.f32.mrb[0].mxu0
  %v954 = vpop.f32.mrb[0].mxu0
  %955 = vdwg.mxu0
  %s956 = scalar_lea.vmem [#allocation2], 8
  %v957 = vld [vmem:[%s956] sm:$0xff]
  %v958 = vld [vmem:[%s956 + $0x8] sm:$0xff]
  %v959 = vld [vmem:[%s956 + $0x10] sm:$0xff]
  %v960 = vld [vmem:[%s956 + $0x18] sm:$0xff]
  %v961 = vld [vmem:[%s956 + $0x20] sm:$0xff]
  %v962 = vld [vmem:[%s956 + $0x28] sm:$0xff]
  %v963 = vld [vmem:[%s956 + $0x30] sm:$0xff]
  %v964 = vld [vmem:[%s956 + $0x38] sm:$0xff]
  %s965 = scalar_lea.vmem %s3, 512
  %v966 = vld [vmem:[%s965] sm:$0xff]
  %v967 = vld [vmem:[%s965 + $0x8] sm:$0xff]
  %v968 = vld [vmem:[%s965 + $0x10] sm:$0xff]
  %v969 = vld [vmem:[%s965 + $0x18] sm:$0xff]
  %v970 = vld [vmem:[%s965 + $0x20] sm:$0xff]
  %v971 = vld [vmem:[%s965 + $0x28] sm:$0xff]
  %v972 = vld [vmem:[%s965 + $0x30] sm:$0xff]
  %v973 = vld [vmem:[%s965 + $0x38] sm:$0xff]
  %v974 = vld [vmem:[%s965 + $0x40] sm:$0xff]
  %v975 = vld [vmem:[%s965 + $0x48] sm:$0xff]
  %v976 = vld [vmem:[%s965 + $0x50] sm:$0xff]
  %v977 = vld [vmem:[%s965 + $0x58] sm:$0xff]
  %v978 = vld [vmem:[%s965 + $0x60] sm:$0xff]
  %v979 = vld [vmem:[%s965 + $0x68] sm:$0xff]
  %v980 = vld [vmem:[%s965 + $0x70] sm:$0xff]
  %v981 = vld [vmem:[%s965 + $0x78] sm:$0xff]
  %v982 = vld [vmem:[%s965 + $0x80] sm:$0xff]
  %v983 = vld [vmem:[%s965 + $0x88] sm:$0xff]
  %v984 = vld [vmem:[%s965 + $0x90] sm:$0xff]
  %v985 = vld [vmem:[%s965 + $0x98] sm:$0xff]
  %v986 = vld [vmem:[%s965 + $0xa0] sm:$0xff]
  %v987 = vld [vmem:[%s965 + $0xa8] sm:$0xff]
  %v988 = vld [vmem:[%s965 + $0xb0] sm:$0xff]
  %v989 = vld [vmem:[%s965 + $0xb8] sm:$0xff]
  %v990 = vld [vmem:[%s965 + $0xc0] sm:$0xff]
  %v991 = vld [vmem:[%s965 + $0xc8] sm:$0xff]
  %v992 = vld [vmem:[%s965 + $0xd0] sm:$0xff]
  %v993 = vld [vmem:[%s965 + $0xd8] sm:$0xff]
  %v994 = vld [vmem:[%s965 + $0xe0] sm:$0xff]
  %v995 = vld [vmem:[%s965 + $0xe8] sm:$0xff]
  %v996 = vld [vmem:[%s965 + $0xf0] sm:$0xff]
  %v997 = vld [vmem:[%s965 + $0xf8] sm:$0xff]
  %998 = vmatprep.subr.mxu0 %v967
  %999 = vmatpush1.msra.mxu0 %v966
  %1000 = vmatprep.subr.mxu0 %v969
  %1001 = vmatpush1.msra.mxu0 %v968
  %1002 = vmatprep.subr.mxu0 %v971
  %1003 = vmatpush1.msra.mxu0 %v970
  %1004 = vmatprep.subr.mxu0 %v973
  %1005 = vmatpush1.msra.mxu0 %v972
  %1006 = vmatprep.subr.mxu0 %v975
  %1007 = vmatpush1.msra.mxu0 %v974
  %1008 = vmatprep.subr.mxu0 %v977
  %1009 = vmatpush1.msra.mxu0 %v976
  %1010 = vmatprep.subr.mxu0 %v979
  %1011 = vmatpush1.msra.mxu0 %v978
  %1012 = vmatprep.subr.mxu0 %v981
  %1013 = vmatpush1.msra.mxu0 %v980
  %1014 = vmatprep.subr.mxu0 %v983
  %1015 = vmatpush1.msra.mxu0 %v982
  %1016 = vmatprep.subr.mxu0 %v985
  %1017 = vmatpush1.msra.mxu0 %v984
  %1018 = vmatprep.subr.mxu0 %v987
  %1019 = vmatpush1.msra.mxu0 %v986
  %1020 = vmatprep.subr.mxu0 %v989
  %1021 = vmatpush1.msra.mxu0 %v988
  %1022 = vmatprep.subr.mxu0 %v991
  %1023 = vmatpush1.msra.mxu0 %v990
  %1024 = vmatprep.subr.mxu0 %v993
  %1025 = vmatpush1.msra.mxu0 %v992
  %1026 = vmatprep.subr.mxu0 %v995
  %1027 = vmatpush1.msra.mxu0 %v994
  %1028 = vmatprep.subr.mxu0 %v997
  %1029 = vmatpush1.msra.mxu0 %v996
  %1030 = vmatprep.subr.mxu0 0.0
  %1031 = vmatpush1.msra.mxu0 0.0
  %1032 = vmatprep.subr.mxu0 0.0
  %1033 = vmatpush1.msra.mxu0 0.0
  %1034 = vmatprep.subr.mxu0 0.0
  %1035 = vmatpush1.msra.mxu0 0.0
  %1036 = vmatprep.subr.mxu0 0.0
  %1037 = vmatpush1.msra.mxu0 0.0
  %1038 = vmatprep.subr.mxu0 0.0
  %1039 = vmatpush1.msra.mxu0 0.0
  %1040 = vmatprep.subr.mxu0 0.0
  %1041 = vmatpush1.msra.mxu0 0.0
  %1042 = vmatprep.subr.mxu0 0.0
  %1043 = vmatpush1.msra.mxu0 0.0
  %1044 = vmatprep.subr.mxu0 0.0
  %1045 = vmatpush1.msra.mxu0 0.0
  %1046 = vmatprep.subr.mxu0 0.0
  %1047 = vmatpush1.msra.mxu0 0.0
  %1048 = vmatprep.subr.mxu0 0.0
  %1049 = vmatpush1.msra.mxu0 0.0
  %1050 = vmatprep.subr.mxu0 0.0
  %1051 = vmatpush1.msra.mxu0 0.0
  %1052 = vmatprep.subr.mxu0 0.0
  %1053 = vmatpush1.msra.mxu0 0.0
  %1054 = vmatprep.subr.mxu0 0.0
  %1055 = vmatpush1.msra.mxu0 0.0
  %1056 = vmatprep.subr.mxu0 0.0
  %1057 = vmatpush1.msra.mxu0 0.0
  %1058 = vmatprep.subr.mxu0 0.0
  %1059 = vmatpush1.msra.mxu0 0.0
  %1060 = vmatprep.subr.mxu0 0.0
  %1061 = vmatpush1.msra.mxu0 0.0
  %1062 = vmatprep.mubr.f32.mxu0 0.0
  %1063 = vmatmul.mubr.f32.gmra.mrb[0].mxu0 %v957
  %v1064 = vpop.f32.mrb[0].mxu0
  %v1065 = vadd.f32 0.0, %v1064
  %v1066 = vpop.f32.mrb[0].mxu0
  %v1067 = vadd.f32 0.0, %v1066
  %1068 = vmatprep.mubr.f32.mxu0 0.0
  %1069 = vmatmul.mubr.f32.gmra.mrb[0].mxu0 %v958
  %v1070 = vpop.f32.mrb[0].mxu0
  %v1071 = vadd.f32 0.0, %v1070
  %v1072 = vpop.f32.mrb[0].mxu0
  %v1073 = vadd.f32 0.0, %v1072
  %1074 = vmatprep.mubr.f32.mxu0 0.0
  %1075 = vmatmul.mubr.f32.gmra.mrb[0].mxu0 %v959
  %v1076 = vpop.f32.mrb[0].mxu0
  %v1077 = vadd.f32 0.0, %v1076
  %v1078 = vpop.f32.mrb[0].mxu0
  %v1079 = vadd.f32 0.0, %v1078
  %1080 = vmatprep.mubr.f32.mxu0 0.0
  %1081 = vmatmul.mubr.f32.gmra.mrb[0].mxu0 %v960
  %v1082 = vpop.f32.mrb[0].mxu0
  %v1083 = vadd.f32 0.0, %v1082
  %v1084 = vpop.f32.mrb[0].mxu0
  %v1085 = vadd.f32 0.0, %v1084
  %1086 = vmatprep.mubr.f32.mxu0 0.0
  %1087 = vmatmul.mubr.f32.gmra.mrb[0].mxu0 %v961
  %v1088 = vpop.f32.mrb[0].mxu0
  %v1089 = vadd.f32 0.0, %v1088
  %v1090 = vpop.f32.mrb[0].mxu0
  %v1091 = vadd.f32 0.0, %v1090
  %1092 = vmatprep.mubr.f32.mxu0 0.0
  %1093 = vmatmul.mubr.f32.gmra.mrb[0].mxu0 %v962
  %v1094 = vpop.f32.mrb[0].mxu0
  %v1095 = vadd.f32 0.0, %v1094
  %v1096 = vpop.f32.mrb[0].mxu0
  %v1097 = vadd.f32 0.0, %v1096
  %1098 = vmatprep.mubr.f32.mxu0 0.0
  %1099 = vmatmul.mubr.f32.gmra.mrb[0].mxu0 %v963
  %v1100 = vpop.f32.mrb[0].mxu0
  %v1101 = vadd.f32 0.0, %v1100
  %v1102 = vpop.f32.mrb[0].mxu0
  %v1103 = vadd.f32 0.0, %v1102
  %1104 = vmatprep.mubr.f32.mxu0 0.0
  %1105 = vmatmul.mubr.f32.gmra.mrb[0].mxu0 %v964
  %v1106 = vpop.f32.mrb[0].mxu0
  %v1107 = vpop.f32.mrb[0].mxu0
  %1108 = vdwg.mxu0
  %v1109 = vadd.f32 %v912, %v1065
  %v1110 = vadd.f32 %v914, %v1067
  %v1111 = vadd.f32 %v918, %v1071
  %v1112 = vadd.f32 %v920, %v1073
  %v1113 = vadd.f32 %v924, %v1077
  %v1114 = vadd.f32 %v926, %v1079
  %v1115 = vadd.f32 %v930, %v1083
  %v1116 = vadd.f32 %v932, %v1085
  %v1117 = vadd.f32 %v936, %v1089
  %v1118 = vadd.f32 %v938, %v1091
  %v1119 = vadd.f32 %v942, %v1095
  %v1120 = vadd.f32 %v944, %v1097
  %v1121 = vadd.f32 %v948, %v1101
  %v1122 = vadd.f32 %v950, %v1103
  %s1123 = scalar_lea.vmem [#allocation2], 136
  %v1124 = vld [vmem:[%s1123] sm:$0xff]
  %v1125 = vld [vmem:[%s1123 + $0x8] sm:$0xff]
  %v1126 = vld [vmem:[%s1123 + $0x10] sm:$0xff]
  %v1127 = vld [vmem:[%s1123 + $0x18] sm:$0xff]
  %v1128 = vld [vmem:[%s1123 + $0x20] sm:$0xff]
  %v1129 = vld [vmem:[%s1123 + $0x28] sm:$0xff]
  %v1130 = vld [vmem:[%s1123 + $0x30] sm:$0xff]
  %v1131 = vld [vmem:[%s1123 + $0x38] sm:$0xff]
  %s1132 = scalar_lea.vmem %s3, 768
  %v1133 = vld [vmem:[%s1132] sm:$0xff]
  %v1134 = vld [vmem:[%s1132 + $0x8] sm:$0xff]
  %v1135 = vld [vmem:[%s1132 + $0x10] sm:$0xff]
  %v1136 = vld [vmem:[%s1132 + $0x18] sm:$0xff]
  %v1137 = vld [vmem:[%s1132 + $0x20] sm:$0xff]
  %v1138 = vld [vmem:[%s1132 + $0x28] sm:$0xff]
  %v1139 = vld [vmem:[%s1132 + $0x30] sm:$0xff]
  %v1140 = vld [vmem:[%s1132 + $0x38] sm:$0xff]
  %v1141 = vld [vmem:[%s1132 + $0x40] sm:$0xff]
  %v1142 = vld [vmem:[%s1132 + $0x48] sm:$0xff]
  %v1143 = vld [vmem:[%s1132 + $0x50] sm:$0xff]
  %v1144 = vld [vmem:[%s1132 + $0x58] sm:$0xff]
  %v1145 = vld [vmem:[%s1132 + $0x60] sm:$0xff]
  %v1146 = vld [vmem:[%s1132 + $0x68] sm:$0xff]
  %v1147 = vld [vmem:[%s1132 + $0x70] sm:$0xff]
  %v1148 = vld [vmem:[%s1132 + $0x78] sm:$0xff]
  %v1149 = vld [vmem:[%s1132 + $0x80] sm:$0xff]
  %v1150 = vld [vmem:[%s1132 + $0x88] sm:$0xff]
  %v1151 = vld [vmem:[%s1132 + $0x90] sm:$0xff]
  %v1152 = vld [vmem:[%s1132 + $0x98] sm:$0xff]
  %v1153 = vld [vmem:[%s1132 + $0xa0] sm:$0xff]
  %v1154 = vld [vmem:[%s1132 + $0xa8] sm:$0xff]
  %v1155 = vld [vmem:[%s1132 + $0xb0] sm:$0xff]
  %v1156 = vld [vmem:[%s1132 + $0xb8] sm:$0xff]
  %v1157 = vld [vmem:[%s1132 + $0xc0] sm:$0xff]
  %v1158 = vld [vmem:[%s1132 + $0xc8] sm:$0xff]
  %v1159 = vld [vmem:[%s1132 + $0xd0] sm:$0xff]
  %v1160 = vld [vmem:[%s1132 + $0xd8] sm:$0xff]
  %v1161 = vld [vmem:[%s1132 + $0xe0] sm:$0xff]
  %v1162 = vld [vmem:[%s1132 + $0xe8] sm:$0xff]
  %v1163 = vld [vmem:[%s1132 + $0xf0] sm:$0xff]
  %v1164 = vld [vmem:[%s1132 + $0xf8] sm:$0xff]
  %1165 = vmatprep.subr.mxu0 %v1134
  %1166 = vmatpush1.msra.mxu0 %v1133
  %1167 = vmatprep.subr.mxu0 %v1136
  %1168 = vmatpush1.msra.mxu0 %v1135
  %1169 = vmatprep.subr.mxu0 %v1138
  %1170 = vmatpush1.msra.mxu0 %v1137
  %1171 = vmatprep.subr.mxu0 %v1140
  %1172 = vmatpush1.msra.mxu0 %v1139
  %1173 = vmatprep.subr.mxu0 %v1142
  %1174 = vmatpush1.msra.mxu0 %v1141
  %1175 = vmatprep.subr.mxu0 %v1144
  %1176 = vmatpush1.msra.mxu0 %v1143
  %1177 = vmatprep.subr.mxu0 %v1146
  %1178 = vmatpush1.msra.mxu0 %v1145
  %1179 = vmatprep.subr.mxu0 %v1148
  %1180 = vmatpush1.msra.mxu0 %v1147
  %1181 = vmatprep.subr.mxu0 %v1150
  %1182 = vmatpush1.msra.mxu0 %v1149
  %1183 = vmatprep.subr.mxu0 %v1152
  %1184 = vmatpush1.msra.mxu0 %v1151
  %1185 = vmatprep.subr.mxu0 %v1154
  %1186 = vmatpush1.msra.mxu0 %v1153
  %1187 = vmatprep.subr.mxu0 %v1156
  %1188 = vmatpush1.msra.mxu0 %v1155
  %1189 = vmatprep.subr.mxu0 %v1158
  %1190 = vmatpush1.msra.mxu0 %v1157
  %1191 = vmatprep.subr.mxu0 %v1160
  %1192 = vmatpush1.msra.mxu0 %v1159
  %1193 = vmatprep.subr.mxu0 %v1162
  %1194 = vmatpush1.msra.mxu0 %v1161
  %1195 = vmatprep.subr.mxu0 %v1164
  %1196 = vmatpush1.msra.mxu0 %v1163
  %1197 = vmatprep.subr.mxu0 0.0
  %1198 = vmatpush1.msra.mxu0 0.0
  %1199 = vmatprep.subr.mxu0 0.0
  %1200 = vmatpush1.msra.mxu0 0.0
  %1201 = vmatprep.subr.mxu0 0.0
  %1202 = vmatpush1.msra.mxu0 0.0
  %1203 = vmatprep.subr.mxu0 0.0
  %1204 = vmatpush1.msra.mxu0 0.0
  %1205 = vmatprep.subr.mxu0 0.0
  %1206 = vmatpush1.msra.mxu0 0.0
  %1207 = vmatprep.subr.mxu0 0.0
  %1208 = vmatpush1.msra.mxu0 0.0
  %1209 = vmatprep.subr.mxu0 0.0
  %1210 = vmatpush1.msra.mxu0 0.0
  %1211 = vmatprep.subr.mxu0 0.0
  %1212 = vmatpush1.msra.mxu0 0.0
  %1213 = vmatprep.subr.mxu0 0.0
  %1214 = vmatpush1.msra.mxu0 0.0
  %1215 = vmatprep.subr.mxu0 0.0
  %1216 = vmatpush1.msra.mxu0 0.0
  %1217 = vmatprep.subr.mxu0 0.0
  %1218 = vmatpush1.msra.mxu0 0.0
  %1219 = vmatprep.subr.mxu0 0.0
  %1220 = vmatpush1.msra.mxu0 0.0
  %1221 = vmatprep.subr.mxu0 0.0
  %1222 = vmatpush1.msra.mxu0 0.0
  %1223 = vmatprep.subr.mxu0 0.0
  %1224 = vmatpush1.msra.mxu0 0.0
  %1225 = vmatprep.subr.mxu0 0.0
  %1226 = vmatpush1.msra.mxu0 0.0
  %1227 = vmatprep.subr.mxu0 0.0
  %1228 = vmatpush1.msra.mxu0 0.0
  %1229 = vmatprep.mubr.f32.mxu0 0.0
  %1230 = vmatmul.mubr.f32.gmra.mrb[0].mxu0 %v1124
  %v1231 = vpop.f32.mrb[0].mxu0
  %v1232 = vadd.f32 0.0, %v1231
  %v1233 = vpop.f32.mrb[0].mxu0
  %v1234 = vadd.f32 0.0, %v1233
  %1235 = vmatprep.mubr.f32.mxu0 0.0
  %1236 = vmatmul.mubr.f32.gmra.mrb[0].mxu0 %v1125
  %v1237 = vpop.f32.mrb[0].mxu0
  %v1238 = vadd.f32 0.0, %v1237
  %v1239 = vpop.f32.mrb[0].mxu0
  %v1240 = vadd.f32 0.0, %v1239
  %1241 = vmatprep.mubr.f32.mxu0 0.0
  %1242 = vmatmul.mubr.f32.gmra.mrb[0].mxu0 %v1126
  %v1243 = vpop.f32.mrb[0].mxu0
  %v1244 = vadd.f32 0.0, %v1243
  %v1245 = vpop.f32.mrb[0].mxu0
  %v1246 = vadd.f32 0.0, %v1245
  %1247 = vmatprep.mubr.f32.mxu0 0.0
  %1248 = vmatmul.mubr.f32.gmra.mrb[0].mxu0 %v1127
  %v1249 = vpop.f32.mrb[0].mxu0
  %v1250 = vadd.f32 0.0, %v1249
  %v1251 = vpop.f32.mrb[0].mxu0
  %v1252 = vadd.f32 0.0, %v1251
  %1253 = vmatprep.mubr.f32.mxu0 0.0
  %1254 = vmatmul.mubr.f32.gmra.mrb[0].mxu0 %v1128
  %v1255 = vpop.f32.mrb[0].mxu0
  %v1256 = vadd.f32 0.0, %v1255
  %v1257 = vpop.f32.mrb[0].mxu0
  %v1258 = vadd.f32 0.0, %v1257
  %1259 = vmatprep.mubr.f32.mxu0 0.0
  %1260 = vmatmul.mubr.f32.gmra.mrb[0].mxu0 %v1129
  %v1261 = vpop.f32.mrb[0].mxu0
  %v1262 = vadd.f32 0.0, %v1261
  %v1263 = vpop.f32.mrb[0].mxu0
  %v1264 = vadd.f32 0.0, %v1263
  %1265 = vmatprep.mubr.f32.mxu0 0.0
  %1266 = vmatmul.mubr.f32.gmra.mrb[0].mxu0 %v1130
  %v1267 = vpop.f32.mrb[0].mxu0
  %v1268 = vadd.f32 0.0, %v1267
  %v1269 = vpop.f32.mrb[0].mxu0
  %v1270 = vadd.f32 0.0, %v1269
  %1271 = vmatprep.mubr.f32.mxu0 0.0
  %1272 = vmatmul.mubr.f32.gmra.mrb[0].mxu0 %v1131
  %v1273 = vpop.f32.mrb[0].mxu0
  %v1274 = vpop.f32.mrb[0].mxu0
  %1275 = vdwg.mxu0
  %v1276 = vadd.f32 %v1109, %v1232
  %v1277 = vadd.f32 %v1110, %v1234
  %v1278 = vadd.f32 %v1111, %v1238
  %v1279 = vadd.f32 %v1112, %v1240
  %v1280 = vadd.f32 %v1113, %v1244
  %v1281 = vadd.f32 %v1114, %v1246
  %v1282 = vadd.f32 %v1115, %v1250
  %v1283 = vadd.f32 %v1116, %v1252
  %v1284 = vadd.f32 %v1117, %v1256
  %v1285 = vadd.f32 %v1118, %v1258
  %v1286 = vadd.f32 %v1119, %v1262
  %v1287 = vadd.f32 %v1120, %v1264
  %v1288 = vadd.f32 %v1121, %v1268
  %v1289 = vadd.f32 %v1122, %v1270
  %s1290 = scalar_lea.vmem [#allocation2], 16
  %v1291 = vld [vmem:[%s1290] sm:$0xff]
  %v1292 = vld [vmem:[%s1290 + $0x8] sm:$0xff]
  %v1293 = vld [vmem:[%s1290 + $0x10] sm:$0xff]
  %v1294 = vld [vmem:[%s1290 + $0x18] sm:$0xff]
  %v1295 = vld [vmem:[%s1290 + $0x20] sm:$0xff]
  %v1296 = vld [vmem:[%s1290 + $0x28] sm:$0xff]
  %v1297 = vld [vmem:[%s1290 + $0x30] sm:$0xff]
  %v1298 = vld [vmem:[%s1290 + $0x38] sm:$0xff]
  %s1299 = scalar_lea.vmem %s3, 1024
  %v1300 = vld [vmem:[%s1299] sm:$0xff]
  %v1301 = vld [vmem:[%s1299 + $0x8] sm:$0xff]
  %v1302 = vld [vmem:[%s1299 + $0x10] sm:$0xff]
  %v1303 = vld [vmem:[%s1299 + $0x18] sm:$0xff]
  %v1304 = vld [vmem:[%s1299 + $0x20] sm:$0xff]
  %v1305 = vld [vmem:[%s1299 + $0x28] sm:$0xff]
  %v1306 = vld [vmem:[%s1299 + $0x30] sm:$0xff]
  %v1307 = vld [vmem:[%s1299 + $0x38] sm:$0xff]
  %v1308 = vld [vmem:[%s1299 + $0x40] sm:$0xff]
  %v1309 = vld [vmem:[%s1299 + $0x48] sm:$0xff]
  %v1310 = vld [vmem:[%s1299 + $0x50] sm:$0xff]
  %v1311 = vld [vmem:[%s1299 + $0x58] sm:$0xff]
  %v1312 = vld [vmem:[%s1299 + $0x60] sm:$0xff]
  %v1313 = vld [vmem:[%s1299 + $0x68] sm:$0xff]
  %v1314 = vld [vmem:[%s1299 + $0x70] sm:$0xff]
  %v1315 = vld [vmem:[%s1299 + $0x78] sm:$0xff]
  %v1316 = vld [vmem:[%s1299 + $0x80] sm:$0xff]
  %v1317 = vld [vmem:[%s1299 + $0x88] sm:$0xff]
  %v1318 = vld [vmem:[%s1299 + $0x90] sm:$0xff]
  %v1319 = vld [vmem:[%s1299 + $0x98] sm:$0xff]
  %v1320 = vld [vmem:[%s1299 + $0xa0] sm:$0xff]
  %v1321 = vld [vmem:[%s1299 + $0xa8] sm:$0xff]
  %v1322 = vld [vmem:[%s1299 + $0xb0] sm:$0xff]
  %v1323 = vld [vmem:[%s1299 + $0xb8] sm:$0xff]
  %v1324 = vld [vmem:[%s1299 + $0xc0] sm:$0xff]
  %v1325 = vld [vmem:[%s1299 + $0xc8] sm:$0xff]
  %v1326 = vld [vmem:[%s1299 + $0xd0] sm:$0xff]
  %v1327 = vld [vmem:[%s1299 + $0xd8] sm:$0xff]
  %v1328 = vld [vmem:[%s1299 + $0xe0] sm:$0xff]
  %v1329 = vld [vmem:[%s1299 + $0xe8] sm:$0xff]
  %v1330 = vld [vmem:[%s1299 + $0xf0] sm:$0xff]
  %v1331 = vld [vmem:[%s1299 + $0xf8] sm:$0xff]
  %1332 = vmatprep.subr.mxu0 %v1301
  %1333 = vmatpush1.msra.mxu0 %v1300
  %1334 = vmatprep.subr.mxu0 %v1303
  %1335 = vmatpush1.msra.mxu0 %v1302
  %1336 = vmatprep.subr.mxu0 %v1305
  %1337 = vmatpush1.msra.mxu0 %v1304
  %1338 = vmatprep.subr.mxu0 %v1307
  %1339 = vmatpush1.msra.mxu0 %v1306
  %1340 = vmatprep.subr.mxu0 %v1309
  %1341 = vmatpush1.msra.mxu0 %v1308
  %1342 = vmatprep.subr.mxu0 %v1311
  %1343 = vmatpush1.msra.mxu0 %v1310
  %1344 = vmatprep.subr.mxu0 %v1313
  %1345 = vmatpush1.msra.mxu0 %v1312
  %1346 = vmatprep.subr.mxu0 %v1315
  %1347 = vmatpush1.msra.mxu0 %v1314
  %1348 = vmatprep.subr.mxu0 %v1317
  %1349 = vmatpush1.msra.mxu0 %v1316
  %1350 = vmatprep.subr.mxu0 %v1319
  %1351 = vmatpush1.msra.mxu0 %v1318
  %1352 = vmatprep.subr.mxu0 %v1321
  %1353 = vmatpush1.msra.mxu0 %v1320
  %1354 = vmatprep.subr.mxu0 %v1323
  %1355 = vmatpush1.msra.mxu0 %v1322
  %1356 = vmatprep.subr.mxu0 %v1325
  %1357 = vmatpush1.msra.mxu0 %v1324
  %1358 = vmatprep.subr.mxu0 %v1327
  %1359 = vmatpush1.msra.mxu0 %v1326
  %1360 = vmatprep.subr.mxu0 %v1329
  %1361 = vmatpush1.msra.mxu0 %v1328
  %1362 = vmatprep.subr.mxu0 %v1331
  %1363 = vmatpush1.msra.mxu0 %v1330
  %1364 = vmatprep.subr.mxu0 0.0
  %1365 = vmatpush1.msra.mxu0 0.0
  %1366 = vmatprep.subr.mxu0 0.0
  %1367 = vmatpush1.msra.mxu0 0.0
  %1368 = vmatprep.subr.mxu0 0.0
  %1369 = vmatpush1.msra.mxu0 0.0
  %1370 = vmatprep.subr.mxu0 0.0
  %1371 = vmatpush1.msra.mxu0 0.0
  %1372 = vmatprep.subr.mxu0 0.0
  %1373 = vmatpush1.msra.mxu0 0.0
  %1374 = vmatprep.subr.mxu0 0.0
  %1375 = vmatpush1.msra.mxu0 0.0
  %1376 = vmatprep.subr.mxu0 0.0
  %1377 = vmatpush1.msra.mxu0 0.0
  %1378 = vmatprep.subr.mxu0 0.0
  %1379 = vmatpush1.msra.mxu0 0.0
  %1380 = vmatprep.subr.mxu0 0.0
  %1381 = vmatpush1.msra.mxu0 0.0
  %1382 = vmatprep.subr.mxu0 0.0
  %1383 = vmatpush1.msra.mxu0 0.0
  %1384 = vmatprep.subr.mxu0 0.0
  %1385 = vmatpush1.msra.mxu0 0.0
  %1386 = vmatprep.subr.mxu0 0.0
  %1387 = vmatpush1.msra.mxu0 0.0
  %1388 = vmatprep.subr.mxu0 0.0
  %1389 = vmatpush1.msra.mxu0 0.0
  %1390 = vmatprep.subr.mxu0 0.0
  %1391 = vmatpush1.msra.mxu0 0.0
  %1392 = vmatprep.subr.mxu0 0.0
  %1393 = vmatpush1.msra.mxu0 0.0
  %1394 = vmatprep.subr.mxu0 0.0
  %1395 = vmatpush1.msra.mxu0 0.0
  %1396 = vmatprep.mubr.f32.mxu0 0.0
  %1397 = vmatmul.mubr.f32.gmra.mrb[0].mxu0 %v1291
  %v1398 = vpop.f32.mrb[0].mxu0
  %v1399 = vadd.f32 0.0, %v1398
  %v1400 = vpop.f32.mrb[0].mxu0
  %v1401 = vadd.f32 0.0, %v1400
  %1402 = vmatprep.mubr.f32.mxu0 0.0
  %1403 = vmatmul.mubr.f32.gmra.mrb[0].mxu0 %v1292
  %v1404 = vpop.f32.mrb[0].mxu0
  %v1405 = vadd.f32 0.0, %v1404
  %v1406 = vpop.f32.mrb[0].mxu0
  %v1407 = vadd.f32 0.0, %v1406
  %1408 = vmatprep.mubr.f32.mxu0 0.0
  %1409 = vmatmul.mubr.f32.gmra.mrb[0].mxu0 %v1293
  %v1410 = vpop.f32.mrb[0].mxu0
  %v1411 = vadd.f32 0.0, %v1410
  %v1412 = vpop.f32.mrb[0].mxu0
  %v1413 = vadd.f32 0.0, %v1412
  %1414 = vmatprep.mubr.f32.mxu0 0.0
  %1415 = vmatmul.mubr.f32.gmra.mrb[0].mxu0 %v1294
  %v1416 = vpop.f32.mrb[0].mxu0
  %v1417 = vadd.f32 0.0, %v1416
  %v1418 = vpop.f32.mrb[0].mxu0
  %v1419 = vadd.f32 0.0, %v1418
  %1420 = vmatprep.mubr.f32.mxu0 0.0
  %1421 = vmatmul.mubr.f32.gmra.mrb[0].mxu0 %v1295
  %v1422 = vpop.f32.mrb[0].mxu0
  %v1423 = vadd.f32 0.0, %v1422
  %v1424 = vpop.f32.mrb[0].mxu0
  %v1425 = vadd.f32 0.0, %v1424
  %1426 = vmatprep.mubr.f32.mxu0 0.0
  %1427 = vmatmul.mubr.f32.gmra.mrb[0].mxu0 %v1296
  %v1428 = vpop.f32.mrb[0].mxu0
  %v1429 = vadd.f32 0.0, %v1428
  %v1430 = vpop.f32.mrb[0].mxu0
  %v1431 = vadd.f32 0.0, %v1430
  %1432 = vmatprep.mubr.f32.mxu0 0.0
  %1433 = vmatmul.mubr.f32.gmra.mrb[0].mxu0 %v1297
  %v1434 = vpop.f32.mrb[0].mxu0
  %v1435 = vadd.f32 0.0, %v1434
  %v1436 = vpop.f32.mrb[0].mxu0
  %v1437 = vadd.f32 0.0, %v1436
  %1438 = vmatprep.mubr.f32.mxu0 0.0
  %1439 = vmatmul.mubr.f32.gmra.mrb[0].mxu0 %v1298
  %v1440 = vpop.f32.mrb[0].mxu0
  %v1441 = vpop.f32.mrb[0].mxu0
  %1442 = vdwg.mxu0
  %v1443 = vadd.f32 %v1276, %v1399
  %v1444 = vadd.f32 %v1277, %v1401
  %v1445 = vadd.f32 %v1278, %v1405
  %v1446 = vadd.f32 %v1279, %v1407
  %v1447 = vadd.f32 %v1280, %v1411
  %v1448 = vadd.f32 %v1281, %v1413
  %v1449 = vadd.f32 %v1282, %v1417
  %v1450 = vadd.f32 %v1283, %v1419
  %v1451 = vadd.f32 %v1284, %v1423
  %v1452 = vadd.f32 %v1285, %v1425
  %v1453 = vadd.f32 %v1286, %v1429
  %v1454 = vadd.f32 %v1287, %v1431
  %v1455 = vadd.f32 %v1288, %v1435
  %v1456 = vadd.f32 %v1289, %v1437
  %v1457 = vmax.f32 %v1443, %v1444
  %v1458 = vmax.f32 %v1445, %v1446
  %v1459 = vmax.f32 %v1447, %v1448
  %v1460 = vmax.f32 %v1449, %v1450
  %v1461 = vmax.f32 %v1451, %v1452
  %v1462 = vmax.f32 %v1453, %v1454
  %v1463 = vmax.f32 %v1455, %v1456
  %1464 = vmatprep.subr.mxu0 %v703
  %1465 = vmatpush1.msra.mxu0 %v702
  %1466 = vmatprep.subr.mxu0 %v705
  %1467 = vmatpush1.msra.mxu0 %v704
  %1468 = vmatprep.subr.mxu0 %v707
  %1469 = vmatpush1.msra.mxu0 %v706
  %1470 = vmatprep.subr.mxu0 %v709
  %1471 = vmatpush1.msra.mxu0 %v708
  %1472 = vmatprep.subr.mxu0 %v711
  %1473 = vmatpush1.msra.mxu0 %v710
  %1474 = vmatprep.subr.mxu0 %v713
  %1475 = vmatpush1.msra.mxu0 %v712
  %1476 = vmatprep.subr.mxu0 %v715
  %1477 = vmatpush1.msra.mxu0 %v714
  %1478 = vmatprep.subr.mxu0 %v717
  %1479 = vmatpush1.msra.mxu0 %v716
  %1480 = vmatprep.subr.mxu0 %v719
  %1481 = vmatpush1.msra.mxu0 %v718
  %1482 = vmatprep.subr.mxu0 %v721
  %1483 = vmatpush1.msra.mxu0 %v720
  %1484 = vmatprep.subr.mxu0 %v723
  %1485 = vmatpush1.msra.mxu0 %v722
  %1486 = vmatprep.subr.mxu0 %v725
  %1487 = vmatpush1.msra.mxu0 %v724
  %1488 = vmatprep.subr.mxu0 %v727
  %1489 = vmatpush1.msra.mxu0 %v726
  %1490 = vmatprep.subr.mxu0 %v729
  %1491 = vmatpush1.msra.mxu0 %v728
  %1492 = vmatprep.subr.mxu0 %v731
  %1493 = vmatpush1.msra.mxu0 %v730
  %1494 = vmatprep.subr.mxu0 %v733
  %1495 = vmatpush1.msra.mxu0 %v732
  %1496 = vmatprep.subr.mxu0 0.0
  %1497 = vmatpush1.msra.mxu0 0.0
  %1498 = vmatprep.subr.mxu0 0.0
  %1499 = vmatpush1.msra.mxu0 0.0
  %1500 = vmatprep.subr.mxu0 0.0
  %1501 = vmatpush1.msra.mxu0 0.0
  %1502 = vmatprep.subr.mxu0 0.0
  %1503 = vmatpush1.msra.mxu0 0.0
  %1504 = vmatprep.subr.mxu0 0.0
  %1505 = vmatpush1.msra.mxu0 0.0
  %1506 = vmatprep.subr.mxu0 0.0
  %1507 = vmatpush1.msra.mxu0 0.0
  %1508 = vmatprep.subr.mxu0 0.0
  %1509 = vmatpush1.msra.mxu0 0.0
  %1510 = vmatprep.subr.mxu0 0.0
  %1511 = vmatpush1.msra.mxu0 0.0
  %1512 = vmatprep.subr.mxu0 0.0
  %1513 = vmatpush1.msra.mxu0 0.0
  %1514 = vmatprep.subr.mxu0 0.0
  %1515 = vmatpush1.msra.mxu0 0.0
  %1516 = vmatprep.subr.mxu0 0.0
  %1517 = vmatpush1.msra.mxu0 0.0
  %1518 = vmatprep.subr.mxu0 0.0
  %1519 = vmatpush1.msra.mxu0 0.0
  %1520 = vmatprep.subr.mxu0 0.0
  %1521 = vmatpush1.msra.mxu0 0.0
  %1522 = vmatprep.subr.mxu0 0.0
  %1523 = vmatpush1.msra.mxu0 0.0
  %1524 = vmatprep.subr.mxu0 0.0
  %1525 = vmatpush1.msra.mxu0 0.0
  %1526 = vmatprep.subr.mxu0 0.0
  %1527 = vmatpush1.msra.mxu0 0.0
  %1528 = vmatprep.mubr.f32.mxu0 0.0
  %1529 = vmatmul.mubr.f32.gmra.mrb[0].mxu0 %v957
  %v1530 = vpop.f32.mrb[0].mxu0
  %v1531 = vadd.f32 0.0, %v1530
  %v1532 = vpop.f32.mrb[0].mxu0
  %v1533 = vadd.f32 0.0, %v1532
  %1534 = vmatprep.mubr.f32.mxu0 0.0
  %1535 = vmatmul.mubr.f32.gmra.mrb[0].mxu0 %v958
  %v1536 = vpop.f32.mrb[0].mxu0
  %v1537 = vadd.f32 0.0, %v1536
  %v1538 = vpop.f32.mrb[0].mxu0
  %v1539 = vadd.f32 0.0, %v1538
  %1540 = vmatprep.mubr.f32.mxu0 0.0
  %1541 = vmatmul.mubr.f32.gmra.mrb[0].mxu0 %v959
  %v1542 = vpop.f32.mrb[0].mxu0
  %v1543 = vadd.f32 0.0, %v1542
  %v1544 = vpop.f32.mrb[0].mxu0
  %v1545 = vadd.f32 0.0, %v1544
  %1546 = vmatprep.mubr.f32.mxu0 0.0
  %1547 = vmatmul.mubr.f32.gmra.mrb[0].mxu0 %v960
  %v1548 = vpop.f32.mrb[0].mxu0
  %v1549 = vadd.f32 0.0, %v1548
  %v1550 = vpop.f32.mrb[0].mxu0
  %v1551 = vadd.f32 0.0, %v1550
  %1552 = vmatprep.mubr.f32.mxu0 0.0
  %1553 = vmatmul.mubr.f32.gmra.mrb[0].mxu0 %v961
  %v1554 = vpop.f32.mrb[0].mxu0
  %v1555 = vadd.f32 0.0, %v1554
  %v1556 = vpop.f32.mrb[0].mxu0
  %v1557 = vadd.f32 0.0, %v1556
  %1558 = vmatprep.mubr.f32.mxu0 0.0
  %1559 = vmatmul.mubr.f32.gmra.mrb[0].mxu0 %v962
  %v1560 = vpop.f32.mrb[0].mxu0
  %v1561 = vadd.f32 0.0, %v1560
  %v1562 = vpop.f32.mrb[0].mxu0
  %v1563 = vadd.f32 0.0, %v1562
  %1564 = vmatprep.mubr.f32.mxu0 0.0
  %1565 = vmatmul.mubr.f32.gmra.mrb[0].mxu0 %v963
  %v1566 = vpop.f32.mrb[0].mxu0
  %v1567 = vadd.f32 0.0, %v1566
  %v1568 = vpop.f32.mrb[0].mxu0
  %v1569 = vadd.f32 0.0, %v1568
  %1570 = vmatprep.mubr.f32.mxu0 0.0
  %1571 = vmatmul.mubr.f32.gmra.mrb[0].mxu0 %v964
  %v1572 = vpop.f32.mrb[0].mxu0
  %v1573 = vpop.f32.mrb[0].mxu0
  %1574 = vdwg.mxu0
  %1575 = vmatprep.subr.mxu0 %v661
  %1576 = vmatpush1.msra.mxu0 %v660
  %1577 = vmatprep.subr.mxu0 %v663
  %1578 = vmatpush1.msra.mxu0 %v662
  %1579 = vmatprep.subr.mxu0 %v665
  %1580 = vmatpush1.msra.mxu0 %v664
  %1581 = vmatprep.subr.mxu0 %v667
  %1582 = vmatpush1.msra.mxu0 %v666
  %1583 = vmatprep.subr.mxu0 %v669
  %1584 = vmatpush1.msra.mxu0 %v668
  %1585 = vmatprep.subr.mxu0 %v671
  %1586 = vmatpush1.msra.mxu0 %v670
  %1587 = vmatprep.subr.mxu0 %v673
  %1588 = vmatpush1.msra.mxu0 %v672
  %1589 = vmatprep.subr.mxu0 %v675
  %1590 = vmatpush1.msra.mxu0 %v674
  %1591 = vmatprep.subr.mxu0 %v677
  %1592 = vmatpush1.msra.mxu0 %v676
  %1593 = vmatprep.subr.mxu0 %v679
  %1594 = vmatpush1.msra.mxu0 %v678
  %1595 = vmatprep.subr.mxu0 %v681
  %1596 = vmatpush1.msra.mxu0 %v680
  %1597 = vmatprep.subr.mxu0 %v683
  %1598 = vmatpush1.msra.mxu0 %v682
  %1599 = vmatprep.subr.mxu0 %v685
  %1600 = vmatpush1.msra.mxu0 %v684
  %1601 = vmatprep.subr.mxu0 %v687
  %1602 = vmatpush1.msra.mxu0 %v686
  %1603 = vmatprep.subr.mxu0 %v689
  %1604 = vmatpush1.msra.mxu0 %v688
  %1605 = vmatprep.subr.mxu0 %v691
  %1606 = vmatpush1.msra.mxu0 %v690
  %1607 = vmatprep.subr.mxu0 0.0
  %1608 = vmatpush1.msra.mxu0 0.0
  %1609 = vmatprep.subr.mxu0 0.0
  %1610 = vmatpush1.msra.mxu0 0.0
  %1611 = vmatprep.subr.mxu0 0.0
  %1612 = vmatpush1.msra.mxu0 0.0
  %1613 = vmatprep.subr.mxu0 0.0
  %1614 = vmatpush1.msra.mxu0 0.0
  %1615 = vmatprep.subr.mxu0 0.0
  %1616 = vmatpush1.msra.mxu0 0.0
  %1617 = vmatprep.subr.mxu0 0.0
  %1618 = vmatpush1.msra.mxu0 0.0
  %1619 = vmatprep.subr.mxu0 0.0
  %1620 = vmatpush1.msra.mxu0 0.0
  %1621 = vmatprep.subr.mxu0 0.0
  %1622 = vmatpush1.msra.mxu0 0.0
  %1623 = vmatprep.subr.mxu0 0.0
  %1624 = vmatpush1.msra.mxu0 0.0
  %1625 = vmatprep.subr.mxu0 0.0
  %1626 = vmatpush1.msra.mxu0 0.0
  %1627 = vmatprep.subr.mxu0 0.0
  %1628 = vmatpush1.msra.mxu0 0.0
  %1629 = vmatprep.subr.mxu0 0.0
  %1630 = vmatpush1.msra.mxu0 0.0
  %1631 = vmatprep.subr.mxu0 0.0
  %1632 = vmatpush1.msra.mxu0 0.0
  %1633 = vmatprep.subr.mxu0 0.0
  %1634 = vmatpush1.msra.mxu0 0.0
  %1635 = vmatprep.subr.mxu0 0.0
  %1636 = vmatpush1.msra.mxu0 0.0
  %1637 = vmatprep.subr.mxu0 0.0
  %1638 = vmatpush1.msra.mxu0 0.0
  %1639 = vmatprep.mubr.f32.mxu0 0.0
  %1640 = vmatmul.mubr.f32.gmra.mrb[0].mxu0 %v693
  %v1641 = vpop.f32.mrb[0].mxu0
  %v1642 = vadd.f32 %v1531, %v1641
  %v1643 = vpop.f32.mrb[0].mxu0
  %v1644 = vadd.f32 %v1533, %v1643
  %1645 = vmatprep.mubr.f32.mxu0 0.0
  %1646 = vmatmul.mubr.f32.gmra.mrb[0].mxu0 %v694
  %v1647 = vpop.f32.mrb[0].mxu0
  %v1648 = vadd.f32 %v1537, %v1647
  %v1649 = vpop.f32.mrb[0].mxu0
  %v1650 = vadd.f32 %v1539, %v1649
  %1651 = vmatprep.mubr.f32.mxu0 0.0
  %1652 = vmatmul.mubr.f32.gmra.mrb[0].mxu0 %v695
  %v1653 = vpop.f32.mrb[0].mxu0
  %v1654 = vadd.f32 %v1543, %v1653
  %v1655 = vpop.f32.mrb[0].mxu0
  %v1656 = vadd.f32 %v1545, %v1655
  %1657 = vmatprep.mubr.f32.mxu0 0.0
  %1658 = vmatmul.mubr.f32.gmra.mrb[0].mxu0 %v696
  %v1659 = vpop.f32.mrb[0].mxu0
  %v1660 = vadd.f32 %v1549, %v1659
  %v1661 = vpop.f32.mrb[0].mxu0
  %v1662 = vadd.f32 %v1551, %v1661
  %1663 = vmatprep.mubr.f32.mxu0 0.0
  %1664 = vmatmul.mubr.f32.gmra.mrb[0].mxu0 %v697
  %v1665 = vpop.f32.mrb[0].mxu0
  %v1666 = vadd.f32 %v1555, %v1665
  %v1667 = vpop.f32.mrb[0].mxu0
  %v1668 = vadd.f32 %v1557, %v1667
  %1669 = vmatprep.mubr.f32.mxu0 0.0
  %1670 = vmatmul.mubr.f32.gmra.mrb[0].mxu0 %v698
  %v1671 = vpop.f32.mrb[0].mxu0
  %v1672 = vadd.f32 %v1561, %v1671
  %v1673 = vpop.f32.mrb[0].mxu0
  %v1674 = vadd.f32 %v1563, %v1673
  %1675 = vmatprep.mubr.f32.mxu0 0.0
  %1676 = vmatmul.mubr.f32.gmra.mrb[0].mxu0 %v699
  %v1677 = vpop.f32.mrb[0].mxu0
  %v1678 = vadd.f32 %v1567, %v1677
  %v1679 = vpop.f32.mrb[0].mxu0
  %v1680 = vadd.f32 %v1569, %v1679
  %1681 = vmatprep.mubr.f32.mxu0 0.0
  %1682 = vmatmul.mubr.f32.gmra.mrb[0].mxu0 %v700
  %v1683 = vpop.f32.mrb[0].mxu0
  %v1684 = vpop.f32.mrb[0].mxu0
  %1685 = vdwg.mxu0
  %1686 = vmatprep.subr.mxu0 %v967
  %1687 = vmatpush1.msra.mxu0 %v966
  %1688 = vmatprep.subr.mxu0 %v969
  %1689 = vmatpush1.msra.mxu0 %v968
  %1690 = vmatprep.subr.mxu0 %v971
  %1691 = vmatpush1.msra.mxu0 %v970
  %1692 = vmatprep.subr.mxu0 %v973
  %1693 = vmatpush1.msra.mxu0 %v972
  %1694 = vmatprep.subr.mxu0 %v975
  %1695 = vmatpush1.msra.mxu0 %v974
  %1696 = vmatprep.subr.mxu0 %v977
  %1697 = vmatpush1.msra.mxu0 %v976
  %1698 = vmatprep.subr.mxu0 %v979
  %1699 = vmatpush1.msra.mxu0 %v978
  %1700 = vmatprep.subr.mxu0 %v981
  %1701 = vmatpush1.msra.mxu0 %v980
  %1702 = vmatprep.subr.mxu0 %v983
  %1703 = vmatpush1.msra.mxu0 %v982
  %1704 = vmatprep.subr.mxu0 %v985
  %1705 = vmatpush1.msra.mxu0 %v984
  %1706 = vmatprep.subr.mxu0 %v987
  %1707 = vmatpush1.msra.mxu0 %v986
  %1708 = vmatprep.subr.mxu0 %v989
  %1709 = vmatpush1.msra.mxu0 %v988
  %1710 = vmatprep.subr.mxu0 %v991
  %1711 = vmatpush1.msra.mxu0 %v990
  %1712 = vmatprep.subr.mxu0 %v993
  %1713 = vmatpush1.msra.mxu0 %v992
  %1714 = vmatprep.subr.mxu0 %v995
  %1715 = vmatpush1.msra.mxu0 %v994
  %1716 = vmatprep.subr.mxu0 %v997
  %1717 = vmatpush1.msra.mxu0 %v996
  %1718 = vmatprep.subr.mxu0 0.0
  %1719 = vmatpush1.msra.mxu0 0.0
  %1720 = vmatprep.subr.mxu0 0.0
  %1721 = vmatpush1.msra.mxu0 0.0
  %1722 = vmatprep.subr.mxu0 0.0
  %1723 = vmatpush1.msra.mxu0 0.0
  %1724 = vmatprep.subr.mxu0 0.0
  %1725 = vmatpush1.msra.mxu0 0.0
  %1726 = vmatprep.subr.mxu0 0.0
  %1727 = vmatpush1.msra.mxu0 0.0
  %1728 = vmatprep.subr.mxu0 0.0
  %1729 = vmatpush1.msra.mxu0 0.0
  %1730 = vmatprep.subr.mxu0 0.0
  %1731 = vmatpush1.msra.mxu0 0.0
  %1732 = vmatprep.subr.mxu0 0.0
  %1733 = vmatpush1.msra.mxu0 0.0
  %1734 = vmatprep.subr.mxu0 0.0
  %1735 = vmatpush1.msra.mxu0 0.0
  %1736 = vmatprep.subr.mxu0 0.0
  %1737 = vmatpush1.msra.mxu0 0.0
  %1738 = vmatprep.subr.mxu0 0.0
  %1739 = vmatpush1.msra.mxu0 0.0
  %1740 = vmatprep.subr.mxu0 0.0
  %1741 = vmatpush1.msra.mxu0 0.0
  %1742 = vmatprep.subr.mxu0 0.0
  %1743 = vmatpush1.msra.mxu0 0.0
  %1744 = vmatprep.subr.mxu0 0.0
  %1745 = vmatpush1.msra.mxu0 0.0
  %1746 = vmatprep.subr.mxu0 0.0
  %1747 = vmatpush1.msra.mxu0 0.0
  %1748 = vmatprep.subr.mxu0 0.0
  %1749 = vmatpush1.msra.mxu0 0.0
  %1750 = vmatprep.mubr.f32.mxu0 0.0
  %1751 = vmatmul.mubr.f32.gmra.mrb[0].mxu0 %v1124
  %v1752 = vpop.f32.mrb[0].mxu0
  %v1753 = vadd.f32 0.0, %v1752
  %v1754 = vpop.f32.mrb[0].mxu0
  %v1755 = vadd.f32 0.0, %v1754
  %1756 = vmatprep.mubr.f32.mxu0 0.0
  %1757 = vmatmul.mubr.f32.gmra.mrb[0].mxu0 %v1125
  %v1758 = vpop.f32.mrb[0].mxu0
  %v1759 = vadd.f32 0.0, %v1758
  %v1760 = vpop.f32.mrb[0].mxu0
  %v1761 = vadd.f32 0.0, %v1760
  %1762 = vmatprep.mubr.f32.mxu0 0.0
  %1763 = vmatmul.mubr.f32.gmra.mrb[0].mxu0 %v1126
  %v1764 = vpop.f32.mrb[0].mxu0
  %v1765 = vadd.f32 0.0, %v1764
  %v1766 = vpop.f32.mrb[0].mxu0
  %v1767 = vadd.f32 0.0, %v1766
  %1768 = vmatprep.mubr.f32.mxu0 0.0
  %1769 = vmatmul.mubr.f32.gmra.mrb[0].mxu0 %v1127
  %v1770 = vpop.f32.mrb[0].mxu0
  %v1771 = vadd.f32 0.0, %v1770
  %v1772 = vpop.f32.mrb[0].mxu0
  %v1773 = vadd.f32 0.0, %v1772
  %1774 = vmatprep.mubr.f32.mxu0 0.0
  %1775 = vmatmul.mubr.f32.gmra.mrb[0].mxu0 %v1128
  %v1776 = vpop.f32.mrb[0].mxu0
  %v1777 = vadd.f32 0.0, %v1776
  %v1778 = vpop.f32.mrb[0].mxu0
  %v1779 = vadd.f32 0.0, %v1778
  %1780 = vmatprep.mubr.f32.mxu0 0.0
  %1781 = vmatmul.mubr.f32.gmra.mrb[0].mxu0 %v1129
  %v1782 = vpop.f32.mrb[0].mxu0
  %v1783 = vadd.f32 0.0, %v1782
  %v1784 = vpop.f32.mrb[0].mxu0
  %v1785 = vadd.f32 0.0, %v1784
  %1786 = vmatprep.mubr.f32.mxu0 0.0
  %1787 = vmatmul.mubr.f32.gmra.mrb[0].mxu0 %v1130
  %v1788 = vpop.f32.mrb[0].mxu0
  %v1789 = vadd.f32 0.0, %v1788
  %v1790 = vpop.f32.mrb[0].mxu0
  %v1791 = vadd.f32 0.0, %v1790
  %1792 = vmatprep.mubr.f32.mxu0 0.0
  %1793 = vmatmul.mubr.f32.gmra.mrb[0].mxu0 %v1131
  %v1794 = vpop.f32.mrb[0].mxu0
  %v1795 = vpop.f32.mrb[0].mxu0
  %1796 = vdwg.mxu0
  %v1797 = vadd.f32 %v1642, %v1753
  %v1798 = vadd.f32 %v1644, %v1755
  %v1799 = vadd.f32 %v1648, %v1759
  %v1800 = vadd.f32 %v1650, %v1761
  %v1801 = vadd.f32 %v1654, %v1765
  %v1802 = vadd.f32 %v1656, %v1767
  %v1803 = vadd.f32 %v1660, %v1771
  %v1804 = vadd.f32 %v1662, %v1773
  %v1805 = vadd.f32 %v1666, %v1777
  %v1806 = vadd.f32 %v1668, %v1779
  %v1807 = vadd.f32 %v1672, %v1783
  %v1808 = vadd.f32 %v1674, %v1785
  %v1809 = vadd.f32 %v1678, %v1789
  %v1810 = vadd.f32 %v1680, %v1791
  %1811 = vmatprep.subr.mxu0 %v1134
  %1812 = vmatpush1.msra.mxu0 %v1133
  %1813 = vmatprep.subr.mxu0 %v1136
  %1814 = vmatpush1.msra.mxu0 %v1135
  %1815 = vmatprep.subr.mxu0 %v1138
  %1816 = vmatpush1.msra.mxu0 %v1137
  %1817 = vmatprep.subr.mxu0 %v1140
  %1818 = vmatpush1.msra.mxu0 %v1139
  %1819 = vmatprep.subr.mxu0 %v1142
  %1820 = vmatpush1.msra.mxu0 %v1141
  %1821 = vmatprep.subr.mxu0 %v1144
  %1822 = vmatpush1.msra.mxu0 %v1143
  %1823 = vmatprep.subr.mxu0 %v1146
  %1824 = vmatpush1.msra.mxu0 %v1145
  %1825 = vmatprep.subr.mxu0 %v1148
  %1826 = vmatpush1.msra.mxu0 %v1147
  %1827 = vmatprep.subr.mxu0 %v1150
  %1828 = vmatpush1.msra.mxu0 %v1149
  %1829 = vmatprep.subr.mxu0 %v1152
  %1830 = vmatpush1.msra.mxu0 %v1151
  %1831 = vmatprep.subr.mxu0 %v1154
  %1832 = vmatpush1.msra.mxu0 %v1153
  %1833 = vmatprep.subr.mxu0 %v1156
  %1834 = vmatpush1.msra.mxu0 %v1155
  %1835 = vmatprep.subr.mxu0 %v1158
  %1836 = vmatpush1.msra.mxu0 %v1157
  %1837 = vmatprep.subr.mxu0 %v1160
  %1838 = vmatpush1.msra.mxu0 %v1159
  %1839 = vmatprep.subr.mxu0 %v1162
  %1840 = vmatpush1.msra.mxu0 %v1161
  %1841 = vmatprep.subr.mxu0 %v1164
  %1842 = vmatpush1.msra.mxu0 %v1163
  %1843 = vmatprep.subr.mxu0 0.0
  %1844 = vmatpush1.msra.mxu0 0.0
  %1845 = vmatprep.subr.mxu0 0.0
  %1846 = vmatpush1.msra.mxu0 0.0
  %1847 = vmatprep.subr.mxu0 0.0
  %1848 = vmatpush1.msra.mxu0 0.0
  %1849 = vmatprep.subr.mxu0 0.0
  %1850 = vmatpush1.msra.mxu0 0.0
  %1851 = vmatprep.subr.mxu0 0.0
  %1852 = vmatpush1.msra.mxu0 0.0
  %1853 = vmatprep.subr.mxu0 0.0
  %1854 = vmatpush1.msra.mxu0 0.0
  %1855 = vmatprep.subr.mxu0 0.0
  %1856 = vmatpush1.msra.mxu0 0.0
  %1857 = vmatprep.subr.mxu0 0.0
  %1858 = vmatpush1.msra.mxu0 0.0
  %1859 = vmatprep.subr.mxu0 0.0
  %1860 = vmatpush1.msra.mxu0 0.0
  %1861 = vmatprep.subr.mxu0 0.0
  %1862 = vmatpush1.msra.mxu0 0.0
  %1863 = vmatprep.subr.mxu0 0.0
  %1864 = vmatpush1.msra.mxu0 0.0
  %1865 = vmatprep.subr.mxu0 0.0
  %1866 = vmatpush1.msra.mxu0 0.0
  %1867 = vmatprep.subr.mxu0 0.0
  %1868 = vmatpush1.msra.mxu0 0.0
  %1869 = vmatprep.subr.mxu0 0.0
  %1870 = vmatpush1.msra.mxu0 0.0
  %1871 = vmatprep.subr.mxu0 0.0
  %1872 = vmatpush1.msra.mxu0 0.0
  %1873 = vmatprep.subr.mxu0 0.0
  %1874 = vmatpush1.msra.mxu0 0.0
  %1875 = vmatprep.mubr.f32.mxu0 0.0
  %1876 = vmatmul.mubr.f32.gmra.mrb[0].mxu0 %v1291
  %v1877 = vpop.f32.mrb[0].mxu0
  %v1878 = vadd.f32 0.0, %v1877
  %v1879 = vpop.f32.mrb[0].mxu0
  %v1880 = vadd.f32 0.0, %v1879
  %1881 = vmatprep.mubr.f32.mxu0 0.0
  %1882 = vmatmul.mubr.f32.gmra.mrb[0].mxu0 %v1292
  %v1883 = vpop.f32.mrb[0].mxu0
  %v1884 = vadd.f32 0.0, %v1883
  %v1885 = vpop.f32.mrb[0].mxu0
  %v1886 = vadd.f32 0.0, %v1885
  %1887 = vmatprep.mubr.f32.mxu0 0.0
  %1888 = vmatmul.mubr.f32.gmra.mrb[0].mxu0 %v1293
  %v1889 = vpop.f32.mrb[0].mxu0
  %v1890 = vadd.f32 0.0, %v1889
  %v1891 = vpop.f32.mrb[0].mxu0
  %v1892 = vadd.f32 0.0, %v1891
  %1893 = vmatprep.mubr.f32.mxu0 0.0
  %1894 = vmatmul.mubr.f32.gmra.mrb[0].mxu0 %v1294
  %v1895 = vpop.f32.mrb[0].mxu0
  %v1896 = vadd.f32 0.0, %v1895
  %v1897 = vpop.f32.mrb[0].mxu0
  %v1898 = vadd.f32 0.0, %v1897
  %1899 = vmatprep.mubr.f32.mxu0 0.0
  %1900 = vmatmul.mubr.f32.gmra.mrb[0].mxu0 %v1295
  %v1901 = vpop.f32.mrb[0].mxu0
  %v1902 = vadd.f32 0.0, %v1901
  %v1903 = vpop.f32.mrb[0].mxu0
  %v1904 = vadd.f32 0.0, %v1903
  %1905 = vmatprep.mubr.f32.mxu0 0.0
  %1906 = vmatmul.mubr.f32.gmra.mrb[0].mxu0 %v1296
  %v1907 = vpop.f32.mrb[0].mxu0
  %v1908 = vadd.f32 0.0, %v1907
  %v1909 = vpop.f32.mrb[0].mxu0
  %v1910 = vadd.f32 0.0, %v1909
  %1911 = vmatprep.mubr.f32.mxu0 0.0
  %1912 = vmatmul.mubr.f32.gmra.mrb[0].mxu0 %v1297
  %v1913 = vpop.f32.mrb[0].mxu0
  %v1914 = vadd.f32 0.0, %v1913
  %v1915 = vpop.f32.mrb[0].mxu0
  %v1916 = vadd.f32 0.0, %v1915
  %1917 = vmatprep.mubr.f32.mxu0 0.0
  %1918 = vmatmul.mubr.f32.gmra.mrb[0].mxu0 %v1298
  %v1919 = vpop.f32.mrb[0].mxu0
  %v1920 = vpop.f32.mrb[0].mxu0
  %1921 = vdwg.mxu0
  %v1922 = vadd.f32 %v1797, %v1878
  %v1923 = vadd.f32 %v1798, %v1880
  %v1924 = vadd.f32 %v1799, %v1884
  %v1925 = vadd.f32 %v1800, %v1886
  %v1926 = vadd.f32 %v1801, %v1890
  %v1927 = vadd.f32 %v1802, %v1892
  %v1928 = vadd.f32 %v1803, %v1896
  %v1929 = vadd.f32 %v1804, %v1898
  %v1930 = vadd.f32 %v1805, %v1902
  %v1931 = vadd.f32 %v1806, %v1904
  %v1932 = vadd.f32 %v1807, %v1908
  %v1933 = vadd.f32 %v1808, %v1910
  %v1934 = vadd.f32 %v1809, %v1914
  %v1935 = vadd.f32 %v1810, %v1916
  %s1936 = scalar_lea.vmem [#allocation2], 144
  %v1937 = vld [vmem:[%s1936] sm:$0xff]
  %v1938 = vld [vmem:[%s1936 + $0x8] sm:$0xff]
  %v1939 = vld [vmem:[%s1936 + $0x10] sm:$0xff]
  %v1940 = vld [vmem:[%s1936 + $0x18] sm:$0xff]
  %v1941 = vld [vmem:[%s1936 + $0x20] sm:$0xff]
  %v1942 = vld [vmem:[%s1936 + $0x28] sm:$0xff]
  %v1943 = vld [vmem:[%s1936 + $0x30] sm:$0xff]
  %v1944 = vld [vmem:[%s1936 + $0x38] sm:$0xff]
  %1945 = vmatprep.subr.mxu0 %v1301
  %1946 = vmatpush1.msra.mxu0 %v1300
  %1947 = vmatprep.subr.mxu0 %v1303
  %1948 = vmatpush1.msra.mxu0 %v1302
  %1949 = vmatprep.subr.mxu0 %v1305
  %1950 = vmatpush1.msra.mxu0 %v1304
  %1951 = vmatprep.subr.mxu0 %v1307
  %1952 = vmatpush1.msra.mxu0 %v1306
  %1953 = vmatprep.subr.mxu0 %v1309
  %1954 = vmatpush1.msra.mxu0 %v1308
  %1955 = vmatprep.subr.mxu0 %v1311
  %1956 = vmatpush1.msra.mxu0 %v1310
  %1957 = vmatprep.subr.mxu0 %v1313
  %1958 = vmatpush1.msra.mxu0 %v1312
  %1959 = vmatprep.subr.mxu0 %v1315
  %1960 = vmatpush1.msra.mxu0 %v1314
  %1961 = vmatprep.subr.mxu0 %v1317
  %1962 = vmatpush1.msra.mxu0 %v1316
  %1963 = vmatprep.subr.mxu0 %v1319
  %1964 = vmatpush1.msra.mxu0 %v1318
  %1965 = vmatprep.subr.mxu0 %v1321
  %1966 = vmatpush1.msra.mxu0 %v1320
  %1967 = vmatprep.subr.mxu0 %v1323
  %1968 = vmatpush1.msra.mxu0 %v1322
  %1969 = vmatprep.subr.mxu0 %v1325
  %1970 = vmatpush1.msra.mxu0 %v1324
  %1971 = vmatprep.subr.mxu0 %v1327
  %1972 = vmatpush1.msra.mxu0 %v1326
  %1973 = vmatprep.subr.mxu0 %v1329
  %1974 = vmatpush1.msra.mxu0 %v1328
  %1975 = vmatprep.subr.mxu0 %v1331
  %1976 = vmatpush1.msra.mxu0 %v1330
  %1977 = vmatprep.subr.mxu0 0.0
  %1978 = vmatpush1.msra.mxu0 0.0
  %1979 = vmatprep.subr.mxu0 0.0
  %1980 = vmatpush1.msra.mxu0 0.0
  %1981 = vmatprep.subr.mxu0 0.0
  %1982 = vmatpush1.msra.mxu0 0.0
  %1983 = vmatprep.subr.mxu0 0.0
  %1984 = vmatpush1.msra.mxu0 0.0
  %1985 = vmatprep.subr.mxu0 0.0
  %1986 = vmatpush1.msra.mxu0 0.0
  %1987 = vmatprep.subr.mxu0 0.0
  %1988 = vmatpush1.msra.mxu0 0.0
  %1989 = vmatprep.subr.mxu0 0.0
  %1990 = vmatpush1.msra.mxu0 0.0
  %1991 = vmatprep.subr.mxu0 0.0
  %1992 = vmatpush1.msra.mxu0 0.0
  %1993 = vmatprep.subr.mxu0 0.0
  %1994 = vmatpush1.msra.mxu0 0.0
  %1995 = vmatprep.subr.mxu0 0.0
  %1996 = vmatpush1.msra.mxu0 0.0
  %1997 = vmatprep.subr.mxu0 0.0
  %1998 = vmatpush1.msra.mxu0 0.0
  %1999 = vmatprep.subr.mxu0 0.0
  %2000 = vmatpush1.msra.mxu0 0.0
  %2001 = vmatprep.subr.mxu0 0.0
  %2002 = vmatpush1.msra.mxu0 0.0
  %2003 = vmatprep.subr.mxu0 0.0
  %2004 = vmatpush1.msra.mxu0 0.0
  %2005 = vmatprep.subr.mxu0 0.0
  %2006 = vmatpush1.msra.mxu0 0.0
  %2007 = vmatprep.subr.mxu0 0.0
  %2008 = vmatpush1.msra.mxu0 0.0
  %2009 = vmatprep.mubr.f32.mxu0 0.0
  %2010 = vmatmul.mubr.f32.gmra.mrb[0].mxu0 %v1937
  %v2011 = vpop.f32.mrb[0].mxu0
  %v2012 = vadd.f32 0.0, %v2011
  %v2013 = vpop.f32.mrb[0].mxu0
  %v2014 = vadd.f32 0.0, %v2013
  %2015 = vmatprep.mubr.f32.mxu0 0.0
  %2016 = vmatmul.mubr.f32.gmra.mrb[0].mxu0 %v1938
  %v2017 = vpop.f32.mrb[0].mxu0
  %v2018 = vadd.f32 0.0, %v2017
  %v2019 = vpop.f32.mrb[0].mxu0
  %v2020 = vadd.f32 0.0, %v2019
  %2021 = vmatprep.mubr.f32.mxu0 0.0
  %2022 = vmatmul.mubr.f32.gmra.mrb[0].mxu0 %v1939
  %v2023 = vpop.f32.mrb[0].mxu0
  %v2024 = vadd.f32 0.0, %v2023
  %v2025 = vpop.f32.mrb[0].mxu0
  %v2026 = vadd.f32 0.0, %v2025
  %2027 = vmatprep.mubr.f32.mxu0 0.0
  %2028 = vmatmul.mubr.f32.gmra.mrb[0].mxu0 %v1940
  %v2029 = vpop.f32.mrb[0].mxu0
  %v2030 = vadd.f32 0.0, %v2029
  %v2031 = vpop.f32.mrb[0].mxu0
  %v2032 = vadd.f32 0.0, %v2031
  %2033 = vmatprep.mubr.f32.mxu0 0.0
  %2034 = vmatmul.mubr.f32.gmra.mrb[0].mxu0 %v1941
  %v2035 = vpop.f32.mrb[0].mxu0
  %v2036 = vadd.f32 0.0, %v2035
  %v2037 = vpop.f32.mrb[0].mxu0
  %v2038 = vadd.f32 0.0, %v2037
  %2039 = vmatprep.mubr.f32.mxu0 0.0
  %2040 = vmatmul.mubr.f32.gmra.mrb[0].mxu0 %v1942
  %v2041 = vpop.f32.mrb[0].mxu0
  %v2042 = vadd.f32 0.0, %v2041
  %v2043 = vpop.f32.mrb[0].mxu0
  %v2044 = vadd.f32 0.0, %v2043
  %2045 = vmatprep.mubr.f32.mxu0 0.0
  %2046 = vmatmul.mubr.f32.gmra.mrb[0].mxu0 %v1943
  %v2047 = vpop.f32.mrb[0].mxu0
  %v2048 = vadd.f32 0.0, %v2047
  %v2049 = vpop.f32.mrb[0].mxu0
  %v2050 = vadd.f32 0.0, %v2049
  %2051 = vmatprep.mubr.f32.mxu0 0.0
  %2052 = vmatmul.mubr.f32.gmra.mrb[0].mxu0 %v1944
  %v2053 = vpop.f32.mrb[0].mxu0
  %v2054 = vpop.f32.mrb[0].mxu0
  %2055 = vdwg.mxu0
  %v2056 = vadd.f32 %v1922, %v2012
  %v2057 = vadd.f32 %v1923, %v2014
  %v2058 = vadd.f32 %v1924, %v2018
  %v2059 = vadd.f32 %v1925, %v2020
  %v2060 = vadd.f32 %v1926, %v2024
  %v2061 = vadd.f32 %v1927, %v2026
  %v2062 = vadd.f32 %v1928, %v2030
  %v2063 = vadd.f32 %v1929, %v2032
  %v2064 = vadd.f32 %v1930, %v2036
  %v2065 = vadd.f32 %v1931, %v2038
  %v2066 = vadd.f32 %v1932, %v2042
  %v2067 = vadd.f32 %v1933, %v2044
  %v2068 = vadd.f32 %v1934, %v2048
  %v2069 = vadd.f32 %v1935, %v2050
  %v2070 = vmax.f32 %v2056, %v2057
  %v2071 = vmax.f32 %v2058, %v2059
  %v2072 = vmax.f32 %v2060, %v2061
  %v2073 = vmax.f32 %v2062, %v2063
  %v2074 = vmax.f32 %v2064, %v2065
  %v2075 = vmax.f32 %v2066, %v2067
  %v2076 = vmax.f32 %v2068, %v2069
  %v2077 = vmax.f32 %v1457, %v2070
  %v2078 = vmax.f32 %v1458, %v2071
  %v2079 = vmax.f32 %v1459, %v2072
  %v2080 = vmax.f32 %v1460, %v2073
  %v2081 = vmax.f32 %v1461, %v2074
  %v2082 = vmax.f32 %v1462, %v2075
  %v2083 = vmax.f32 %v1463, %v2076
  %v2084 = vmax.f32 %v2077, 0.0
  %v2085 = vmax.f32 %v2078, 0.0
  %v2086 = vmax.f32 %v2079, 0.0
  %v2087 = vmax.f32 %v2080, 0.0
  %v2088 = vmax.f32 %v2081, 0.0
  %v2089 = vmax.f32 %v2082, 0.0
  %v2090 = vmax.f32 %v2083, 0.0
  %v2091 = vld [vmem:[%s4] sm:$0xff]
  %v2092 = vld [vmem:[%s4 + $0x8] sm:$0xff]
  %v2093 = vld [vmem:[%s4 + $0x10] sm:$0xff]
  %v2094 = vld [vmem:[%s4 + $0x18] sm:$0xff]
  %v2095 = vld [vmem:[%s4 + $0x20] sm:$0xff]
  %v2096 = vld [vmem:[%s4 + $0x28] sm:$0xff]
  %v2097 = vld [vmem:[%s4 + $0x30] sm:$0xff]
  %v2098 = vld [vmem:[%s4 + $0x38] sm:$0xff]
  %v2099 = vld [vmem:[%s4 + $0x40] sm:$0xff]
  %v2100 = vld [vmem:[%s4 + $0x48] sm:$0xff]
  %v2101 = vld [vmem:[%s4 + $0x50] sm:$0xff]
  %v2102 = vld [vmem:[%s4 + $0x58] sm:$0xff]
  %v2103 = vld [vmem:[%s4 + $0x60] sm:$0xff]
  %v2104 = vld [vmem:[%s4 + $0x68] sm:$0xff]
  %v2105 = vld [vmem:[%s4 + $0x70] sm:$0xff]
  %v2106 = vld [vmem:[%s4 + $0x78] sm:$0xff]
  %s2107 = scalar_lea.vmem %s4, 128
  %v2108 = vld [vmem:[%s2107] sm:$0xff]
  %v2109 = vld [vmem:[%s2107 + $0x8] sm:$0xff]
  %v2110 = vld [vmem:[%s2107 + $0x10] sm:$0xff]
  %v2111 = vld [vmem:[%s2107 + $0x18] sm:$0xff]
  %v2112 = vld [vmem:[%s2107 + $0x20] sm:$0xff]
  %v2113 = vld [vmem:[%s2107 + $0x28] sm:$0xff]
  %v2114 = vld [vmem:[%s2107 + $0x30] sm:$0xff]
  %v2115 = vld [vmem:[%s2107 + $0x38] sm:$0xff]
  %v2116 = vld [vmem:[%s2107 + $0x40] sm:$0xff]
  %v2117 = vld [vmem:[%s2107 + $0x48] sm:$0xff]
  %v2118 = vld [vmem:[%s2107 + $0x50] sm:$0xff]
  %v2119 = vld [vmem:[%s2107 + $0x58] sm:$0xff]
  %v2120 = vld [vmem:[%s2107 + $0x60] sm:$0xff]
  %v2121 = vld [vmem:[%s2107 + $0x68] sm:$0xff]
  %v2122 = vld [vmem:[%s2107 + $0x70] sm:$0xff]
  %v2123 = vld [vmem:[%s2107 + $0x78] sm:$0xff]
  %2124 = vmatprep.subr.mxu0 0.0
  %2125 = vmatpush1.msra.mxu0 %v2108
  %2126 = vmatprep.subr.mxu0 0.0
  %2127 = vmatpush1.msra.mxu0 %v2109
  %2128 = vmatprep.subr.mxu0 0.0
  %2129 = vmatpush1.msra.mxu0 %v2110
  %2130 = vmatprep.subr.mxu0 0.0
  %2131 = vmatpush1.msra.mxu0 %v2111
  %2132 = vmatprep.subr.mxu0 0.0
  %2133 = vmatpush1.msra.mxu0 %v2112
  %2134 = vmatprep.subr.mxu0 0.0
  %2135 = vmatpush1.msra.mxu0 %v2113
  %2136 = vmatprep.subr.mxu0 0.0
  %2137 = vmatpush1.msra.mxu0 %v2114
  %2138 = vmatprep.subr.mxu0 0.0
  %2139 = vmatpush1.msra.mxu0 %v2115
  %2140 = vmatprep.subr.mxu0 0.0
  %2141 = vmatpush1.msra.mxu0 %v2116
  %2142 = vmatprep.subr.mxu0 0.0
  %2143 = vmatpush1.msra.mxu0 %v2117
  %2144 = vmatprep.subr.mxu0 0.0
  %2145 = vmatpush1.msra.mxu0 %v2118
  %2146 = vmatprep.subr.mxu0 0.0
  %2147 = vmatpush1.msra.mxu0 %v2119
  %2148 = vmatprep.subr.mxu0 0.0
  %2149 = vmatpush1.msra.mxu0 %v2120
  %2150 = vmatprep.subr.mxu0 0.0
  %2151 = vmatpush1.msra.mxu0 %v2121
  %2152 = vmatprep.subr.mxu0 0.0
  %2153 = vmatpush1.msra.mxu0 %v2122
  %2154 = vmatprep.subr.mxu0 0.0
  %2155 = vmatpush1.msra.mxu0 %v2123
  %2156 = vmatprep.subr.mxu0 0.0
  %2157 = vmatpush1.msra.mxu0 0.0
  %2158 = vmatprep.subr.mxu0 0.0
  %2159 = vmatpush1.msra.mxu0 0.0
  %2160 = vmatprep.subr.mxu0 0.0
  %2161 = vmatpush1.msra.mxu0 0.0
  %2162 = vmatprep.subr.mxu0 0.0
  %2163 = vmatpush1.msra.mxu0 0.0
  %2164 = vmatprep.subr.mxu0 0.0
  %2165 = vmatpush1.msra.mxu0 0.0
  %2166 = vmatprep.subr.mxu0 0.0
  %2167 = vmatpush1.msra.mxu0 0.0
  %2168 = vmatprep.subr.mxu0 0.0
  %2169 = vmatpush1.msra.mxu0 0.0
  %2170 = vmatprep.subr.mxu0 0.0
  %2171 = vmatpush1.msra.mxu0 0.0
  %2172 = vmatprep.subr.mxu0 0.0
  %2173 = vmatpush1.msra.mxu0 0.0
  %2174 = vmatprep.subr.mxu0 0.0
  %2175 = vmatpush1.msra.mxu0 0.0
  %2176 = vmatprep.subr.mxu0 0.0
  %2177 = vmatpush1.msra.mxu0 0.0
  %2178 = vmatprep.subr.mxu0 0.0
  %2179 = vmatpush1.msra.mxu0 0.0
  %2180 = vmatprep.subr.mxu0 0.0
  %2181 = vmatpush1.msra.mxu0 0.0
  %2182 = vmatprep.subr.mxu0 0.0
  %2183 = vmatpush1.msra.mxu0 0.0
  %2184 = vmatprep.subr.mxu0 0.0
  %2185 = vmatpush1.msra.mxu0 0.0
  %2186 = vmatprep.subr.mxu0 0.0
  %2187 = vmatpush1.msra.mxu0 0.0
  %2188 = vmatprep.mubr.f32.mxu0 0.0
  %2189 = vmatmul.mubr.f32.gmra.mrb[0].mxu0 %v2085
  %v2190 = vpop.f32.mrb[0].mxu0
  %v2191 = vadd.f32 0.0, %v2190
  %v2192 = vpop.f32.mrb[0].mxu0
  %2193 = vdwg.mxu0
  %2194 = vmatprep.subr.mxu0 0.0
  %2195 = vmatpush1.msra.mxu0 %v2091
  %2196 = vmatprep.subr.mxu0 0.0
  %2197 = vmatpush1.msra.mxu0 %v2092
  %2198 = vmatprep.subr.mxu0 0.0
  %2199 = vmatpush1.msra.mxu0 %v2093
  %2200 = vmatprep.subr.mxu0 0.0
  %2201 = vmatpush1.msra.mxu0 %v2094
  %2202 = vmatprep.subr.mxu0 0.0
  %2203 = vmatpush1.msra.mxu0 %v2095
  %2204 = vmatprep.subr.mxu0 0.0
  %2205 = vmatpush1.msra.mxu0 %v2096
  %2206 = vmatprep.subr.mxu0 0.0
  %2207 = vmatpush1.msra.mxu0 %v2097
  %2208 = vmatprep.subr.mxu0 0.0
  %2209 = vmatpush1.msra.mxu0 %v2098
  %2210 = vmatprep.subr.mxu0 0.0
  %2211 = vmatpush1.msra.mxu0 %v2099
  %2212 = vmatprep.subr.mxu0 0.0
  %2213 = vmatpush1.msra.mxu0 %v2100
  %2214 = vmatprep.subr.mxu0 0.0
  %2215 = vmatpush1.msra.mxu0 %v2101
  %2216 = vmatprep.subr.mxu0 0.0
  %2217 = vmatpush1.msra.mxu0 %v2102
  %2218 = vmatprep.subr.mxu0 0.0
  %2219 = vmatpush1.msra.mxu0 %v2103
  %2220 = vmatprep.subr.mxu0 0.0
  %2221 = vmatpush1.msra.mxu0 %v2104
  %2222 = vmatprep.subr.mxu0 0.0
  %2223 = vmatpush1.msra.mxu0 %v2105
  %2224 = vmatprep.subr.mxu0 0.0
  %2225 = vmatpush1.msra.mxu0 %v2106
  %2226 = vmatprep.subr.mxu0 0.0
  %2227 = vmatpush1.msra.mxu0 0.0
  %2228 = vmatprep.subr.mxu0 0.0
  %2229 = vmatpush1.msra.mxu0 0.0
  %2230 = vmatprep.subr.mxu0 0.0
  %2231 = vmatpush1.msra.mxu0 0.0
  %2232 = vmatprep.subr.mxu0 0.0
  %2233 = vmatpush1.msra.mxu0 0.0
  %2234 = vmatprep.subr.mxu0 0.0
  %2235 = vmatpush1.msra.mxu0 0.0
  %2236 = vmatprep.subr.mxu0 0.0
  %2237 = vmatpush1.msra.mxu0 0.0
  %2238 = vmatprep.subr.mxu0 0.0
  %2239 = vmatpush1.msra.mxu0 0.0
  %2240 = vmatprep.subr.mxu0 0.0
  %2241 = vmatpush1.msra.mxu0 0.0
  %2242 = vmatprep.subr.mxu0 0.0
  %2243 = vmatpush1.msra.mxu0 0.0
  %2244 = vmatprep.subr.mxu0 0.0
  %2245 = vmatpush1.msra.mxu0 0.0
  %2246 = vmatprep.subr.mxu0 0.0
  %2247 = vmatpush1.msra.mxu0 0.0
  %2248 = vmatprep.subr.mxu0 0.0
  %2249 = vmatpush1.msra.mxu0 0.0
  %2250 = vmatprep.subr.mxu0 0.0
  %2251 = vmatpush1.msra.mxu0 0.0
  %2252 = vmatprep.subr.mxu0 0.0
  %2253 = vmatpush1.msra.mxu0 0.0
  %2254 = vmatprep.subr.mxu0 0.0
  %2255 = vmatpush1.msra.mxu0 0.0
  %2256 = vmatprep.subr.mxu0 0.0
  %2257 = vmatpush1.msra.mxu0 0.0
  %2258 = vmatprep.mubr.f32.mxu0 0.0
  %2259 = vmatmul.mubr.f32.gmra.mrb[0].mxu0 %v2084
  %v2260 = vpop.f32.mrb[0].mxu0
  %v2261 = vadd.f32 %v2191, %v2260
  %v2262 = vpop.f32.mrb[0].mxu0
  %2263 = vdwg.mxu0
  %s2264 = scalar_lea.vmem %s4, 256
  %v2265 = vld [vmem:[%s2264] sm:$0xff]
  %v2266 = vld [vmem:[%s2264 + $0x8] sm:$0xff]
  %v2267 = vld [vmem:[%s2264 + $0x10] sm:$0xff]
  %v2268 = vld [vmem:[%s2264 + $0x18] sm:$0xff]
  %v2269 = vld [vmem:[%s2264 + $0x20] sm:$0xff]
  %v2270 = vld [vmem:[%s2264 + $0x28] sm:$0xff]
  %v2271 = vld [vmem:[%s2264 + $0x30] sm:$0xff]
  %v2272 = vld [vmem:[%s2264 + $0x38] sm:$0xff]
  %v2273 = vld [vmem:[%s2264 + $0x40] sm:$0xff]
  %v2274 = vld [vmem:[%s2264 + $0x48] sm:$0xff]
  %v2275 = vld [vmem:[%s2264 + $0x50] sm:$0xff]
  %v2276 = vld [vmem:[%s2264 + $0x58] sm:$0xff]
  %v2277 = vld [vmem:[%s2264 + $0x60] sm:$0xff]
  %v2278 = vld [vmem:[%s2264 + $0x68] sm:$0xff]
  %v2279 = vld [vmem:[%s2264 + $0x70] sm:$0xff]
  %v2280 = vld [vmem:[%s2264 + $0x78] sm:$0xff]
  %2281 = vmatprep.subr.mxu0 0.0
  %2282 = vmatpush1.msra.mxu0 %v2265
  %2283 = vmatprep.subr.mxu0 0.0
  %2284 = vmatpush1.msra.mxu0 %v2266
  %2285 = vmatprep.subr.mxu0 0.0
  %2286 = vmatpush1.msra.mxu0 %v2267
  %2287 = vmatprep.subr.mxu0 0.0
  %2288 = vmatpush1.msra.mxu0 %v2268
  %2289 = vmatprep.subr.mxu0 0.0
  %2290 = vmatpush1.msra.mxu0 %v2269
  %2291 = vmatprep.subr.mxu0 0.0
  %2292 = vmatpush1.msra.mxu0 %v2270
  %2293 = vmatprep.subr.mxu0 0.0
  %2294 = vmatpush1.msra.mxu0 %v2271
  %2295 = vmatprep.subr.mxu0 0.0
  %2296 = vmatpush1.msra.mxu0 %v2272
  %2297 = vmatprep.subr.mxu0 0.0
  %2298 = vmatpush1.msra.mxu0 %v2273
  %2299 = vmatprep.subr.mxu0 0.0
  %2300 = vmatpush1.msra.mxu0 %v2274
  %2301 = vmatprep.subr.mxu0 0.0
  %2302 = vmatpush1.msra.mxu0 %v2275
  %2303 = vmatprep.subr.mxu0 0.0
  %2304 = vmatpush1.msra.mxu0 %v2276
  %2305 = vmatprep.subr.mxu0 0.0
  %2306 = vmatpush1.msra.mxu0 %v2277
  %2307 = vmatprep.subr.mxu0 0.0
  %2308 = vmatpush1.msra.mxu0 %v2278
  %2309 = vmatprep.subr.mxu0 0.0
  %2310 = vmatpush1.msra.mxu0 %v2279
  %2311 = vmatprep.subr.mxu0 0.0
  %2312 = vmatpush1.msra.mxu0 %v2280
  %2313 = vmatprep.subr.mxu0 0.0
  %2314 = vmatpush1.msra.mxu0 0.0
  %2315 = vmatprep.subr.mxu0 0.0
  %2316 = vmatpush1.msra.mxu0 0.0
  %2317 = vmatprep.subr.mxu0 0.0
  %2318 = vmatpush1.msra.mxu0 0.0
  %2319 = vmatprep.subr.mxu0 0.0
  %2320 = vmatpush1.msra.mxu0 0.0
  %2321 = vmatprep.subr.mxu0 0.0
  %2322 = vmatpush1.msra.mxu0 0.0
  %2323 = vmatprep.subr.mxu0 0.0
  %2324 = vmatpush1.msra.mxu0 0.0
  %2325 = vmatprep.subr.mxu0 0.0
  %2326 = vmatpush1.msra.mxu0 0.0
  %2327 = vmatprep.subr.mxu0 0.0
  %2328 = vmatpush1.msra.mxu0 0.0
  %2329 = vmatprep.subr.mxu0 0.0
  %2330 = vmatpush1.msra.mxu0 0.0
  %2331 = vmatprep.subr.mxu0 0.0
  %2332 = vmatpush1.msra.mxu0 0.0
  %2333 = vmatprep.subr.mxu0 0.0
  %2334 = vmatpush1.msra.mxu0 0.0
  %2335 = vmatprep.subr.mxu0 0.0
  %2336 = vmatpush1.msra.mxu0 0.0
  %2337 = vmatprep.subr.mxu0 0.0
  %2338 = vmatpush1.msra.mxu0 0.0
  %2339 = vmatprep.subr.mxu0 0.0
  %2340 = vmatpush1.msra.mxu0 0.0
  %2341 = vmatprep.subr.mxu0 0.0
  %2342 = vmatpush1.msra.mxu0 0.0
  %2343 = vmatprep.subr.mxu0 0.0
  %2344 = vmatpush1.msra.mxu0 0.0
  %2345 = vmatprep.mubr.f32.mxu0 0.0
  %2346 = vmatmul.mubr.f32.gmra.mrb[0].mxu0 %v2086
  %v2347 = vpop.f32.mrb[0].mxu0
  %v2348 = vadd.f32 0.0, %v2347
  %v2349 = vpop.f32.mrb[0].mxu0
  %2350 = vdwg.mxu0
  %v2351 = vadd.f32 %v2261, %v2348
  %s2352 = scalar_lea.vmem %s4, 384
  %v2353 = vld [vmem:[%s2352] sm:$0xff]
  %v2354 = vld [vmem:[%s2352 + $0x8] sm:$0xff]
  %v2355 = vld [vmem:[%s2352 + $0x10] sm:$0xff]
  %v2356 = vld [vmem:[%s2352 + $0x18] sm:$0xff]
  %v2357 = vld [vmem:[%s2352 + $0x20] sm:$0xff]
  %v2358 = vld [vmem:[%s2352 + $0x28] sm:$0xff]
  %v2359 = vld [vmem:[%s2352 + $0x30] sm:$0xff]
  %v2360 = vld [vmem:[%s2352 + $0x38] sm:$0xff]
  %v2361 = vld [vmem:[%s2352 + $0x40] sm:$0xff]
  %v2362 = vld [vmem:[%s2352 + $0x48] sm:$0xff]
  %v2363 = vld [vmem:[%s2352 + $0x50] sm:$0xff]
  %v2364 = vld [vmem:[%s2352 + $0x58] sm:$0xff]
  %v2365 = vld [vmem:[%s2352 + $0x60] sm:$0xff]
  %v2366 = vld [vmem:[%s2352 + $0x68] sm:$0xff]
  %v2367 = vld [vmem:[%s2352 + $0x70] sm:$0xff]
  %v2368 = vld [vmem:[%s2352 + $0x78] sm:$0xff]
  %2369 = vmatprep.subr.mxu0 0.0
  %2370 = vmatpush1.msra.mxu0 %v2353
  %2371 = vmatprep.subr.mxu0 0.0
  %2372 = vmatpush1.msra.mxu0 %v2354
  %2373 = vmatprep.subr.mxu0 0.0
  %2374 = vmatpush1.msra.mxu0 %v2355
  %2375 = vmatprep.subr.mxu0 0.0
  %2376 = vmatpush1.msra.mxu0 %v2356
  %2377 = vmatprep.subr.mxu0 0.0
  %2378 = vmatpush1.msra.mxu0 %v2357
  %2379 = vmatprep.subr.mxu0 0.0
  %2380 = vmatpush1.msra.mxu0 %v2358
  %2381 = vmatprep.subr.mxu0 0.0
  %2382 = vmatpush1.msra.mxu0 %v2359
  %2383 = vmatprep.subr.mxu0 0.0
  %2384 = vmatpush1.msra.mxu0 %v2360
  %2385 = vmatprep.subr.mxu0 0.0
  %2386 = vmatpush1.msra.mxu0 %v2361
  %2387 = vmatprep.subr.mxu0 0.0
  %2388 = vmatpush1.msra.mxu0 %v2362
  %2389 = vmatprep.subr.mxu0 0.0
  %2390 = vmatpush1.msra.mxu0 %v2363
  %2391 = vmatprep.subr.mxu0 0.0
  %2392 = vmatpush1.msra.mxu0 %v2364
  %2393 = vmatprep.subr.mxu0 0.0
  %2394 = vmatpush1.msra.mxu0 %v2365
  %2395 = vmatprep.subr.mxu0 0.0
  %2396 = vmatpush1.msra.mxu0 %v2366
  %2397 = vmatprep.subr.mxu0 0.0
  %2398 = vmatpush1.msra.mxu0 %v2367
  %2399 = vmatprep.subr.mxu0 0.0
  %2400 = vmatpush1.msra.mxu0 %v2368
  %2401 = vmatprep.subr.mxu0 0.0
  %2402 = vmatpush1.msra.mxu0 0.0
  %2403 = vmatprep.subr.mxu0 0.0
  %2404 = vmatpush1.msra.mxu0 0.0
  %2405 = vmatprep.subr.mxu0 0.0
  %2406 = vmatpush1.msra.mxu0 0.0
  %2407 = vmatprep.subr.mxu0 0.0
  %2408 = vmatpush1.msra.mxu0 0.0
  %2409 = vmatprep.subr.mxu0 0.0
  %2410 = vmatpush1.msra.mxu0 0.0
  %2411 = vmatprep.subr.mxu0 0.0
  %2412 = vmatpush1.msra.mxu0 0.0
  %2413 = vmatprep.subr.mxu0 0.0
  %2414 = vmatpush1.msra.mxu0 0.0
  %2415 = vmatprep.subr.mxu0 0.0
  %2416 = vmatpush1.msra.mxu0 0.0
  %2417 = vmatprep.subr.mxu0 0.0
  %2418 = vmatpush1.msra.mxu0 0.0
  %2419 = vmatprep.subr.mxu0 0.0
  %2420 = vmatpush1.msra.mxu0 0.0
  %2421 = vmatprep.subr.mxu0 0.0
  %2422 = vmatpush1.msra.mxu0 0.0
  %2423 = vmatprep.subr.mxu0 0.0
  %2424 = vmatpush1.msra.mxu0 0.0
  %2425 = vmatprep.subr.mxu0 0.0
  %2426 = vmatpush1.msra.mxu0 0.0
  %2427 = vmatprep.subr.mxu0 0.0
  %2428 = vmatpush1.msra.mxu0 0.0
  %2429 = vmatprep.subr.mxu0 0.0
  %2430 = vmatpush1.msra.mxu0 0.0
  %2431 = vmatprep.subr.mxu0 0.0
  %2432 = vmatpush1.msra.mxu0 0.0
  %2433 = vmatprep.mubr.f32.mxu0 0.0
  %2434 = vmatmul.mubr.f32.gmra.mrb[0].mxu0 %v2087
  %v2435 = vpop.f32.mrb[0].mxu0
  %v2436 = vadd.f32 0.0, %v2435
  %v2437 = vpop.f32.mrb[0].mxu0
  %2438 = vdwg.mxu0
  %v2439 = vadd.f32 %v2351, %v2436
  %s2440 = scalar_lea.vmem %s4, 512
  %v2441 = vld [vmem:[%s2440] sm:$0xff]
  %v2442 = vld [vmem:[%s2440 + $0x8] sm:$0xff]
  %v2443 = vld [vmem:[%s2440 + $0x10] sm:$0xff]
  %v2444 = vld [vmem:[%s2440 + $0x18] sm:$0xff]
  %v2445 = vld [vmem:[%s2440 + $0x20] sm:$0xff]
  %v2446 = vld [vmem:[%s2440 + $0x28] sm:$0xff]
  %v2447 = vld [vmem:[%s2440 + $0x30] sm:$0xff]
  %v2448 = vld [vmem:[%s2440 + $0x38] sm:$0xff]
  %v2449 = vld [vmem:[%s2440 + $0x40] sm:$0xff]
  %v2450 = vld [vmem:[%s2440 + $0x48] sm:$0xff]
  %v2451 = vld [vmem:[%s2440 + $0x50] sm:$0xff]
  %v2452 = vld [vmem:[%s2440 + $0x58] sm:$0xff]
  %v2453 = vld [vmem:[%s2440 + $0x60] sm:$0xff]
  %v2454 = vld [vmem:[%s2440 + $0x68] sm:$0xff]
  %v2455 = vld [vmem:[%s2440 + $0x70] sm:$0xff]
  %v2456 = vld [vmem:[%s2440 + $0x78] sm:$0xff]
  %2457 = vmatprep.subr.mxu0 0.0
  %2458 = vmatpush1.msra.mxu0 %v2441
  %2459 = vmatprep.subr.mxu0 0.0
  %2460 = vmatpush1.msra.mxu0 %v2442
  %2461 = vmatprep.subr.mxu0 0.0
  %2462 = vmatpush1.msra.mxu0 %v2443
  %2463 = vmatprep.subr.mxu0 0.0
  %2464 = vmatpush1.msra.mxu0 %v2444
  %2465 = vmatprep.subr.mxu0 0.0
  %2466 = vmatpush1.msra.mxu0 %v2445
  %2467 = vmatprep.subr.mxu0 0.0
  %2468 = vmatpush1.msra.mxu0 %v2446
  %2469 = vmatprep.subr.mxu0 0.0
  %2470 = vmatpush1.msra.mxu0 %v2447
  %2471 = vmatprep.subr.mxu0 0.0
  %2472 = vmatpush1.msra.mxu0 %v2448
  %2473 = vmatprep.subr.mxu0 0.0
  %2474 = vmatpush1.msra.mxu0 %v2449
  %2475 = vmatprep.subr.mxu0 0.0
  %2476 = vmatpush1.msra.mxu0 %v2450
  %2477 = vmatprep.subr.mxu0 0.0
  %2478 = vmatpush1.msra.mxu0 %v2451
  %2479 = vmatprep.subr.mxu0 0.0
  %2480 = vmatpush1.msra.mxu0 %v2452
  %2481 = vmatprep.subr.mxu0 0.0
  %2482 = vmatpush1.msra.mxu0 %v2453
  %2483 = vmatprep.subr.mxu0 0.0
  %2484 = vmatpush1.msra.mxu0 %v2454
  %2485 = vmatprep.subr.mxu0 0.0
  %2486 = vmatpush1.msra.mxu0 %v2455
  %2487 = vmatprep.subr.mxu0 0.0
  %2488 = vmatpush1.msra.mxu0 %v2456
  %2489 = vmatprep.subr.mxu0 0.0
  %2490 = vmatpush1.msra.mxu0 0.0
  %2491 = vmatprep.subr.mxu0 0.0
  %2492 = vmatpush1.msra.mxu0 0.0
  %2493 = vmatprep.subr.mxu0 0.0
  %2494 = vmatpush1.msra.mxu0 0.0
  %2495 = vmatprep.subr.mxu0 0.0
  %2496 = vmatpush1.msra.mxu0 0.0
  %2497 = vmatprep.subr.mxu0 0.0
  %2498 = vmatpush1.msra.mxu0 0.0
  %2499 = vmatprep.subr.mxu0 0.0
  %2500 = vmatpush1.msra.mxu0 0.0
  %2501 = vmatprep.subr.mxu0 0.0
  %2502 = vmatpush1.msra.mxu0 0.0
  %2503 = vmatprep.subr.mxu0 0.0
  %2504 = vmatpush1.msra.mxu0 0.0
  %2505 = vmatprep.subr.mxu0 0.0
  %2506 = vmatpush1.msra.mxu0 0.0
  %2507 = vmatprep.subr.mxu0 0.0
  %2508 = vmatpush1.msra.mxu0 0.0
  %2509 = vmatprep.subr.mxu0 0.0
  %2510 = vmatpush1.msra.mxu0 0.0
  %2511 = vmatprep.subr.mxu0 0.0
  %2512 = vmatpush1.msra.mxu0 0.0
  %2513 = vmatprep.subr.mxu0 0.0
  %2514 = vmatpush1.msra.mxu0 0.0
  %2515 = vmatprep.subr.mxu0 0.0
  %2516 = vmatpush1.msra.mxu0 0.0
  %2517 = vmatprep.subr.mxu0 0.0
  %2518 = vmatpush1.msra.mxu0 0.0
  %2519 = vmatprep.subr.mxu0 0.0
  %2520 = vmatpush1.msra.mxu0 0.0
  %2521 = vmatprep.mubr.f32.mxu0 0.0
  %2522 = vmatmul.mubr.f32.gmra.mrb[0].mxu0 %v2088
  %v2523 = vpop.f32.mrb[0].mxu0
  %v2524 = vadd.f32 0.0, %v2523
  %v2525 = vpop.f32.mrb[0].mxu0
  %2526 = vdwg.mxu0
  %v2527 = vadd.f32 %v2439, %v2524
  %s2528 = scalar_lea.vmem %s4, 640
  %v2529 = vld [vmem:[%s2528] sm:$0xff]
  %v2530 = vld [vmem:[%s2528 + $0x8] sm:$0xff]
  %v2531 = vld [vmem:[%s2528 + $0x10] sm:$0xff]
  %v2532 = vld [vmem:[%s2528 + $0x18] sm:$0xff]
  %v2533 = vld [vmem:[%s2528 + $0x20] sm:$0xff]
  %v2534 = vld [vmem:[%s2528 + $0x28] sm:$0xff]
  %v2535 = vld [vmem:[%s2528 + $0x30] sm:$0xff]
  %v2536 = vld [vmem:[%s2528 + $0x38] sm:$0xff]
  %v2537 = vld [vmem:[%s2528 + $0x40] sm:$0xff]
  %v2538 = vld [vmem:[%s2528 + $0x48] sm:$0xff]
  %v2539 = vld [vmem:[%s2528 + $0x50] sm:$0xff]
  %v2540 = vld [vmem:[%s2528 + $0x58] sm:$0xff]
  %v2541 = vld [vmem:[%s2528 + $0x60] sm:$0xff]
  %v2542 = vld [vmem:[%s2528 + $0x68] sm:$0xff]
  %v2543 = vld [vmem:[%s2528 + $0x70] sm:$0xff]
  %v2544 = vld [vmem:[%s2528 + $0x78] sm:$0xff]
  %2545 = vmatprep.subr.mxu0 0.0
  %2546 = vmatpush1.msra.mxu0 %v2529
  %2547 = vmatprep.subr.mxu0 0.0
  %2548 = vmatpush1.msra.mxu0 %v2530
  %2549 = vmatprep.subr.mxu0 0.0
  %2550 = vmatpush1.msra.mxu0 %v2531
  %2551 = vmatprep.subr.mxu0 0.0
  %2552 = vmatpush1.msra.mxu0 %v2532
  %2553 = vmatprep.subr.mxu0 0.0
  %2554 = vmatpush1.msra.mxu0 %v2533
  %2555 = vmatprep.subr.mxu0 0.0
  %2556 = vmatpush1.msra.mxu0 %v2534
  %2557 = vmatprep.subr.mxu0 0.0
  %2558 = vmatpush1.msra.mxu0 %v2535
  %2559 = vmatprep.subr.mxu0 0.0
  %2560 = vmatpush1.msra.mxu0 %v2536
  %2561 = vmatprep.subr.mxu0 0.0
  %2562 = vmatpush1.msra.mxu0 %v2537
  %2563 = vmatprep.subr.mxu0 0.0
  %2564 = vmatpush1.msra.mxu0 %v2538
  %2565 = vmatprep.subr.mxu0 0.0
  %2566 = vmatpush1.msra.mxu0 %v2539
  %2567 = vmatprep.subr.mxu0 0.0
  %2568 = vmatpush1.msra.mxu0 %v2540
  %2569 = vmatprep.subr.mxu0 0.0
  %2570 = vmatpush1.msra.mxu0 %v2541
  %2571 = vmatprep.subr.mxu0 0.0
  %2572 = vmatpush1.msra.mxu0 %v2542
  %2573 = vmatprep.subr.mxu0 0.0
  %2574 = vmatpush1.msra.mxu0 %v2543
  %2575 = vmatprep.subr.mxu0 0.0
  %2576 = vmatpush1.msra.mxu0 %v2544
  %2577 = vmatprep.subr.mxu0 0.0
  %2578 = vmatpush1.msra.mxu0 0.0
  %2579 = vmatprep.subr.mxu0 0.0
  %2580 = vmatpush1.msra.mxu0 0.0
  %2581 = vmatprep.subr.mxu0 0.0
  %2582 = vmatpush1.msra.mxu0 0.0
  %2583 = vmatprep.subr.mxu0 0.0
  %2584 = vmatpush1.msra.mxu0 0.0
  %2585 = vmatprep.subr.mxu0 0.0
  %2586 = vmatpush1.msra.mxu0 0.0
  %2587 = vmatprep.subr.mxu0 0.0
  %2588 = vmatpush1.msra.mxu0 0.0
  %2589 = vmatprep.subr.mxu0 0.0
  %2590 = vmatpush1.msra.mxu0 0.0
  %2591 = vmatprep.subr.mxu0 0.0
  %2592 = vmatpush1.msra.mxu0 0.0
  %2593 = vmatprep.subr.mxu0 0.0
  %2594 = vmatpush1.msra.mxu0 0.0
  %2595 = vmatprep.subr.mxu0 0.0
  %2596 = vmatpush1.msra.mxu0 0.0
  %2597 = vmatprep.subr.mxu0 0.0
  %2598 = vmatpush1.msra.mxu0 0.0
  %2599 = vmatprep.subr.mxu0 0.0
  %2600 = vmatpush1.msra.mxu0 0.0
  %2601 = vmatprep.subr.mxu0 0.0
  %2602 = vmatpush1.msra.mxu0 0.0
  %2603 = vmatprep.subr.mxu0 0.0
  %2604 = vmatpush1.msra.mxu0 0.0
  %2605 = vmatprep.subr.mxu0 0.0
  %2606 = vmatpush1.msra.mxu0 0.0
  %2607 = vmatprep.subr.mxu0 0.0
  %2608 = vmatpush1.msra.mxu0 0.0
  %2609 = vmatprep.mubr.f32.mxu0 0.0
  %2610 = vmatmul.mubr.f32.gmra.mrb[0].mxu0 %v2089
  %v2611 = vpop.f32.mrb[0].mxu0
  %v2612 = vadd.f32 0.0, %v2611
  %v2613 = vpop.f32.mrb[0].mxu0
  %2614 = vdwg.mxu0
  %v2615 = vadd.f32 %v2527, %v2612
  %s2616 = scalar_lea.vmem %s4, 768
  %v2617 = vld [vmem:[%s2616] sm:$0xff]
  %v2618 = vld [vmem:[%s2616 + $0x8] sm:$0xff]
  %v2619 = vld [vmem:[%s2616 + $0x10] sm:$0xff]
  %v2620 = vld [vmem:[%s2616 + $0x18] sm:$0xff]
  %v2621 = vld [vmem:[%s2616 + $0x20] sm:$0xff]
  %v2622 = vld [vmem:[%s2616 + $0x28] sm:$0xff]
  %v2623 = vld [vmem:[%s2616 + $0x30] sm:$0xff]
  %v2624 = vld [vmem:[%s2616 + $0x38] sm:$0xff]
  %v2625 = vld [vmem:[%s2616 + $0x40] sm:$0xff]
  %v2626 = vld [vmem:[%s2616 + $0x48] sm:$0xff]
  %v2627 = vld [vmem:[%s2616 + $0x50] sm:$0xff]
  %v2628 = vld [vmem:[%s2616 + $0x58] sm:$0xff]
  %v2629 = vld [vmem:[%s2616 + $0x60] sm:$0xff]
  %v2630 = vld [vmem:[%s2616 + $0x68] sm:$0xff]
  %v2631 = vld [vmem:[%s2616 + $0x70] sm:$0xff]
  %v2632 = vld [vmem:[%s2616 + $0x78] sm:$0xff]
  %2633 = vmatprep.subr.mxu0 0.0
  %2634 = vmatpush1.msra.mxu0 %v2617
  %2635 = vmatprep.subr.mxu0 0.0
  %2636 = vmatpush1.msra.mxu0 %v2618
  %2637 = vmatprep.subr.mxu0 0.0
  %2638 = vmatpush1.msra.mxu0 %v2619
  %2639 = vmatprep.subr.mxu0 0.0
  %2640 = vmatpush1.msra.mxu0 %v2620
  %2641 = vmatprep.subr.mxu0 0.0
  %2642 = vmatpush1.msra.mxu0 %v2621
  %2643 = vmatprep.subr.mxu0 0.0
  %2644 = vmatpush1.msra.mxu0 %v2622
  %2645 = vmatprep.subr.mxu0 0.0
  %2646 = vmatpush1.msra.mxu0 %v2623
  %2647 = vmatprep.subr.mxu0 0.0
  %2648 = vmatpush1.msra.mxu0 %v2624
  %2649 = vmatprep.subr.mxu0 0.0
  %2650 = vmatpush1.msra.mxu0 %v2625
  %2651 = vmatprep.subr.mxu0 0.0
  %2652 = vmatpush1.msra.mxu0 %v2626
  %2653 = vmatprep.subr.mxu0 0.0
  %2654 = vmatpush1.msra.mxu0 %v2627
  %2655 = vmatprep.subr.mxu0 0.0
  %2656 = vmatpush1.msra.mxu0 %v2628
  %2657 = vmatprep.subr.mxu0 0.0
  %2658 = vmatpush1.msra.mxu0 %v2629
  %2659 = vmatprep.subr.mxu0 0.0
  %2660 = vmatpush1.msra.mxu0 %v2630
  %2661 = vmatprep.subr.mxu0 0.0
  %2662 = vmatpush1.msra.mxu0 %v2631
  %2663 = vmatprep.subr.mxu0 0.0
  %2664 = vmatpush1.msra.mxu0 %v2632
  %2665 = vmatprep.subr.mxu0 0.0
  %2666 = vmatpush1.msra.mxu0 0.0
  %2667 = vmatprep.subr.mxu0 0.0
  %2668 = vmatpush1.msra.mxu0 0.0
  %2669 = vmatprep.subr.mxu0 0.0
  %2670 = vmatpush1.msra.mxu0 0.0
  %2671 = vmatprep.subr.mxu0 0.0
  %2672 = vmatpush1.msra.mxu0 0.0
  %2673 = vmatprep.subr.mxu0 0.0
  %2674 = vmatpush1.msra.mxu0 0.0
  %2675 = vmatprep.subr.mxu0 0.0
  %2676 = vmatpush1.msra.mxu0 0.0
  %2677 = vmatprep.subr.mxu0 0.0
  %2678 = vmatpush1.msra.mxu0 0.0
  %2679 = vmatprep.subr.mxu0 0.0
  %2680 = vmatpush1.msra.mxu0 0.0
  %2681 = vmatprep.subr.mxu0 0.0
  %2682 = vmatpush1.msra.mxu0 0.0
  %2683 = vmatprep.subr.mxu0 0.0
  %2684 = vmatpush1.msra.mxu0 0.0
  %2685 = vmatprep.subr.mxu0 0.0
  %2686 = vmatpush1.msra.mxu0 0.0
  %2687 = vmatprep.subr.mxu0 0.0
  %2688 = vmatpush1.msra.mxu0 0.0
  %2689 = vmatprep.subr.mxu0 0.0
  %2690 = vmatpush1.msra.mxu0 0.0
  %2691 = vmatprep.subr.mxu0 0.0
  %2692 = vmatpush1.msra.mxu0 0.0
  %2693 = vmatprep.subr.mxu0 0.0
  %2694 = vmatpush1.msra.mxu0 0.0
  %2695 = vmatprep.subr.mxu0 0.0
  %2696 = vmatpush1.msra.mxu0 0.0
  %2697 = vmatprep.mubr.f32.mxu0 0.0
  %2698 = vmatmul.mubr.f32.gmra.mrb[0].mxu0 %v2090
  %v2699 = vpop.f32.mrb[0].mxu0
  %v2700 = vadd.f32 0.0, %v2699
  %v2701 = vpop.f32.mrb[0].mxu0
  %2702 = vdwg.mxu0
  %v2703 = vadd.f32 %v2615, %v2700
  %v2704 = vld [vmem:[%s5] sm:$0x1]
  %v2706 = vlaneseq
  %v2707 = vshrl.u32 %v2706, 7
  %v2708 = vsub.s32 0, %v2707
  %v2709 = vrot.slane %v2704, %v2708
  %v2711 = vadd.f32 %v2703, %v2709
  %v2712 = vmax.f32 %v2711, 0.0
  %v2713 = vld [vmem:[%s6] sm:$0xff]
  %v2714 = vld [vmem:[%s6 + $0x8] sm:$0xff]
  %v2715 = vld [vmem:[%s6 + $0x10] sm:$0xff]
  %v2716 = vld [vmem:[%s6 + $0x18] sm:$0xff]
  %v2717 = vld [vmem:[%s6 + $0x20] sm:$0xff]
  %v2718 = vld [vmem:[%s6 + $0x28] sm:$0xff]
  %v2719 = vld [vmem:[%s6 + $0x30] sm:$0xff]
  %v2720 = vld [vmem:[%s6 + $0x38] sm:$0xff]
  %v2721 = vld [vmem:[%s6 + $0x40] sm:$0xff]
  %v2722 = vld [vmem:[%s6 + $0x48] sm:$0xff]
  %v2723 = vld [vmem:[%s6 + $0x50] sm:$0xff]
  %v2724 = vld [vmem:[%s6 + $0x58] sm:$0xff]
  %v2725 = vld [vmem:[%s6 + $0x60] sm:$0xff]
  %v2726 = vld [vmem:[%s6 + $0x68] sm:$0xff]
  %v2727 = vld [vmem:[%s6 + $0x70] sm:$0xff]
  %v2728 = vld [vmem:[%s7] sm:$0x1]
  %v2730 = vlaneseq
  %v2731 = vshrl.u32 %v2730, 7
  %v2732 = vsub.s32 0, %v2731
  %v2733 = vrot.slane %v2728, %v2732
  %vm2735 = vcmask 982016
  %v2737 = vsel %vm2735, %v2712, 0
  %2739 = vmatprep.subr.mxu0 0.0
  %2740 = vmatpush1.msra.mxu0 %v2713
  %2741 = vmatprep.subr.mxu0 0.0
  %2742 = vmatpush1.msra.mxu0 %v2714
  %2743 = vmatprep.subr.mxu0 0.0
  %2744 = vmatpush1.msra.mxu0 %v2715
  %2745 = vmatprep.subr.mxu0 0.0
  %2746 = vmatpush1.msra.mxu0 %v2716
  %2747 = vmatprep.subr.mxu0 0.0
  %2748 = vmatpush1.msra.mxu0 %v2717
  %2749 = vmatprep.subr.mxu0 0.0
  %2750 = vmatpush1.msra.mxu0 %v2718
  %2751 = vmatprep.subr.mxu0 0.0
  %2752 = vmatpush1.msra.mxu0 %v2719
  %2753 = vmatprep.subr.mxu0 0.0
  %2754 = vmatpush1.msra.mxu0 %v2720
  %2755 = vmatprep.subr.mxu0 0.0
  %2756 = vmatpush1.msra.mxu0 %v2721
  %2757 = vmatprep.subr.mxu0 0.0
  %2758 = vmatpush1.msra.mxu0 %v2722
  %2759 = vmatprep.subr.mxu0 0.0
  %2760 = vmatpush1.msra.mxu0 %v2723
  %2761 = vmatprep.subr.mxu0 0.0
  %2762 = vmatpush1.msra.mxu0 %v2724
  %2763 = vmatprep.subr.mxu0 0.0
  %2764 = vmatpush1.msra.mxu0 %v2725
  %2765 = vmatprep.subr.mxu0 0.0
  %2766 = vmatpush1.msra.mxu0 %v2726
  %2767 = vmatprep.subr.mxu0 0.0
  %2768 = vmatpush1.msra.mxu0 %v2727
  %2769 = vmatprep.subr.mxu0 0.0
  %2770 = vmatpush1.msra.mxu0 0.0
  %2771 = vmatprep.subr.mxu0 0.0
  %2772 = vmatpush1.msra.mxu0 0.0
  %2773 = vmatprep.subr.mxu0 0.0
  %2774 = vmatpush1.msra.mxu0 0.0
  %2775 = vmatprep.subr.mxu0 0.0
  %2776 = vmatpush1.msra.mxu0 0.0
  %2777 = vmatprep.subr.mxu0 0.0
  %2778 = vmatpush1.msra.mxu0 0.0
  %2779 = vmatprep.subr.mxu0 0.0
  %2780 = vmatpush1.msra.mxu0 0.0
  %2781 = vmatprep.subr.mxu0 0.0
  %2782 = vmatpush1.msra.mxu0 0.0
  %2783 = vmatprep.subr.mxu0 0.0
  %2784 = vmatpush1.msra.mxu0 0.0
  %2785 = vmatprep.subr.mxu0 0.0
  %2786 = vmatpush1.msra.mxu0 0.0
  %2787 = vmatprep.subr.mxu0 0.0
  %2788 = vmatpush1.msra.mxu0 0.0
  %2789 = vmatprep.subr.mxu0 0.0
  %2790 = vmatpush1.msra.mxu0 0.0
  %2791 = vmatprep.subr.mxu0 0.0
  %2792 = vmatpush1.msra.mxu0 0.0
  %2793 = vmatprep.subr.mxu0 0.0
  %2794 = vmatpush1.msra.mxu0 0.0
  %2795 = vmatprep.subr.mxu0 0.0
  %2796 = vmatpush1.msra.mxu0 0.0
  %2797 = vmatprep.subr.mxu0 0.0
  %2798 = vmatpush1.msra.mxu0 0.0
  %2799 = vmatprep.subr.mxu0 0.0
  %2800 = vmatpush1.msra.mxu0 0.0
  %2801 = vmatprep.subr.mxu0 0.0
  %2802 = vmatpush1.msra.mxu0 0.0
  %2803 = vmatprep.mubr.f32.mxu0 0.0
  %2804 = vmatmul.mubr.f32.gmra.mrb[0].mxu0 %v2737
  %v2805 = vpop.f32.mrb[0].mxu0
  %v2806 = vadd.f32 %v2733, %v2805
  %v2807 = vpop.f32.mrb[0].mxu0
  %2808 = vdwg.mxu0
  %v2809 = vmax.f32 %v2806, 0.0
  %v2810 = vld [vmem:[%s8] sm:$0xff]
  %v2811 = vld [vmem:[%s8 + $0x8] sm:$0xff]
  %v2812 = vld [vmem:[%s8 + $0x10] sm:$0xff]
  %v2813 = vld [vmem:[%s8 + $0x18] sm:$0xff]
  %v2814 = vld [vmem:[%s8 + $0x20] sm:$0xff]
  %v2815 = vld [vmem:[%s8 + $0x28] sm:$0xff]
  %v2816 = vld [vmem:[%s8 + $0x30] sm:$0xff]
  %v2817 = vld [vmem:[%s8 + $0x38] sm:$0xff]
  %v2818 = vld [vmem:[%s8 + $0x40] sm:$0xff]
  %v2819 = vld [vmem:[%s8 + $0x48] sm:$0xff]
  %v2820 = vld [vmem:[%s8 + $0x50] sm:$0xf]
  %v2821 = vld [vmem:[%s9] sm:$0x1]
  %v2823 = vlaneseq
  %v2824 = vshrl.u32 %v2823, 7
  %v2825 = vsub.s32 0, %v2824
  %v2826 = vrot.slane %v2821, %v2825
  %vm2828 = vcmask 687104
  %v2830 = vsel %vm2828, %v2809, 0
  %vm2832 = vcmask 1043456
  %v2834 = vsel %vm2832, %v2820, 0
  %2836 = vmatprep.subr.mxu0 0.0
  %2837 = vmatpush1.msra.mxu0 %v2810
  %2838 = vmatprep.subr.mxu0 0.0
  %2839 = vmatpush1.msra.mxu0 %v2811
  %2840 = vmatprep.subr.mxu0 0.0
  %2841 = vmatpush1.msra.mxu0 %v2812
  %2842 = vmatprep.subr.mxu0 0.0
  %2843 = vmatpush1.msra.mxu0 %v2813
  %2844 = vmatprep.subr.mxu0 0.0
  %2845 = vmatpush1.msra.mxu0 %v2814
  %2846 = vmatprep.subr.mxu0 0.0
  %2847 = vmatpush1.msra.mxu0 %v2815
  %2848 = vmatprep.subr.mxu0 0.0
  %2849 = vmatpush1.msra.mxu0 %v2816
  %2850 = vmatprep.subr.mxu0 0.0
  %2851 = vmatpush1.msra.mxu0 %v2817
  %2852 = vmatprep.subr.mxu0 0.0
  %2853 = vmatpush1.msra.mxu0 %v2818
  %2854 = vmatprep.subr.mxu0 0.0
  %2855 = vmatpush1.msra.mxu0 %v2819
  %2856 = vmatprep.subr.mxu0 0.0
  %2857 = vmatpush1.msra.mxu0 %v2834
  %2858 = vmatprep.subr.mxu0 0.0
  %2859 = vmatpush1.msra.mxu0 0.0
  %2860 = vmatprep.subr.mxu0 0.0
  %2861 = vmatpush1.msra.mxu0 0.0
  %2862 = vmatprep.subr.mxu0 0.0
  %2863 = vmatpush1.msra.mxu0 0.0
  %2864 = vmatprep.subr.mxu0 0.0
  %2865 = vmatpush1.msra.mxu0 0.0
  %2866 = vmatprep.subr.mxu0 0.0
  %2867 = vmatpush1.msra.mxu0 0.0
  %2868 = vmatprep.subr.mxu0 0.0
  %2869 = vmatpush1.msra.mxu0 0.0
  %2870 = vmatprep.subr.mxu0 0.0
  %2871 = vmatpush1.msra.mxu0 0.0
  %2872 = vmatprep.subr.mxu0 0.0
  %2873 = vmatpush1.msra.mxu0 0.0
  %2874 = vmatprep.subr.mxu0 0.0
  %2875 = vmatpush1.msra.mxu0 0.0
  %2876 = vmatprep.subr.mxu0 0.0
  %2877 = vmatpush1.msra.mxu0 0.0
  %2878 = vmatprep.subr.mxu0 0.0
  %2879 = vmatpush1.msra.mxu0 0.0
  %2880 = vmatprep.subr.mxu0 0.0
  %2881 = vmatpush1.msra.mxu0 0.0
  %2882 = vmatprep.subr.mxu0 0.0
  %2883 = vmatpush1.msra.mxu0 0.0
  %2884 = vmatprep.subr.mxu0 0.0
  %2885 = vmatpush1.msra.mxu0 0.0
  %2886 = vmatprep.subr.mxu0 0.0
  %2887 = vmatpush1.msra.mxu0 0.0
  %2888 = vmatprep.subr.mxu0 0.0
  %2889 = vmatpush1.msra.mxu0 0.0
  %2890 = vmatprep.subr.mxu0 0.0
  %2891 = vmatpush1.msra.mxu0 0.0
  %2892 = vmatprep.subr.mxu0 0.0
  %2893 = vmatpush1.msra.mxu0 0.0
  %2894 = vmatprep.subr.mxu0 0.0
  %2895 = vmatpush1.msra.mxu0 0.0
  %2896 = vmatprep.subr.mxu0 0.0
  %2897 = vmatpush1.msra.mxu0 0.0
  %2898 = vmatprep.subr.mxu0 0.0
  %2899 = vmatpush1.msra.mxu0 0.0
  %2900 = vmatprep.mubr.f32.mxu0 0.0
  %2901 = vmatmul.mubr.f32.gmra.mrb[0].mxu0 %v2830
  %v2902 = vpop.f32.mrb[0].mxu0
  %v2903 = vadd.f32 %v2826, %v2902
  %v2904 = vpop.f32.mrb[0].mxu0
  %2905 = vdwg.mxu0
  %vm2906 = vcmask 80896
  %2907 = vst.msk [vmem:[%s10] sm:$0xff] %vm2906, %v2903
  // Predicated region
  $region42: #{lenet_forward.1} parent=0 // pred_check
    _
  $region43: #{lenet_forward.1} parent=0 // pred_check_branch
    %2909 = sbr.rel (0) target = $region45
  $region44: #{lenet_forward.1} parent=0 // pred_region
    _
  $region45: #{lenet_forward.1} parent=0 // pred_fallthru
    _
  // Predicated region
  $region46: #{lenet_forward.1} parent=0 // pred_check
    _
  $region47: #{lenet_forward.1} parent=0 // pred_check_branch
    %2911 = sbr.rel (0) target = $region49
  $region48: #{lenet_forward.1} parent=0 // pred_region
    _
  $region49: #{lenet_forward.1} parent=0 // pred_fallthru
    _

</llo_original>
